<compile_context>
chip_gen: v7x
topology: tpu7x:2x2x1
jax: 0.10.0
libtpu: 0.0.40
codegen_flags: <defaults>
</compile_context>

<pallas_src>
import functools

import jax
import jax.numpy as jnp
from jax.experimental import pallas as pl
from jax.experimental.pallas import tpu as pltpu


def _round_up(x, m):
    return ((x + m - 1) // m) * m


# ----------------------------------------------------------------------------
# Pallas kernel
# ----------------------------------------------------------------------------
def _convgru_kernel(x_ref, h_ref, w1_ref, w2_ref, b1_ref, out_ref,
                    fxh_ref, fhr_ref, acc_ref, *, H, W, k):
    # x_ref : (1, Cin, H*W) f32      h_ref : (1, Ch, H*W) f32
    # w1_ref: (k*k, 3Ch, Cin+Ch) bf16   rows = [update | reset | out-gate x-part]
    # w2_ref: (k*k, Ch, Ch) bf16        out-gate weights applied to h*reset
    # b1_ref: (3Ch, 1) f32
    # out_ref: (1, Ch, NA) f32          NA = round_up(Hp*Wp, 128)
    # fxh_ref: (Cin+Ch, Ntot) f32       padded-flat [x ; h] staging buffer
    # fhr_ref: (Ch, Ntot) f32           padded-flat h*reset staging buffer
    # acc_ref: (3Ch, NA) f32            gate pre-activation accumulators
    Cin = x_ref.shape[1]
    Ch = h_ref.shape[1]
    p = k // 2
    Wp = W + 2 * p
    M = p * Wp + p                 # lane offset of the padded image inside fxh/fhr
    NA = out_ref.shape[2]          # accumulator / output lane width (mult. of 128)

    # --- 1) zero the padded staging buffers ---------------------------------
    # Halo + margins must be zero every step.  Done in full each step (a few
    # dense vreg stores) so the kernel stays correct when the "parallel" batch
    # axis is split across TensorCores, where per-core scratch would never see
    # a program_id(0)==0 initialization.
    fxh_ref[...] = jnp.zeros_like(fxh_ref)
    fhr_ref[...] = jnp.zeros_like(fhr_ref)

    # --- 2) scatter x / h image rows into padded-flat coordinates -----------
    for y in range(H):
        dst = M + (y + p) * Wp + p
        src = y * W
        fxh_ref[0:Cin, dst:dst + W] = x_ref[0, :, src:src + W]
        fxh_ref[Cin:Cin + Ch, dst:dst + W] = h_ref[0, :, src:src + W]

    # --- 3) fused update / reset / out-gate(x part) convolutions ------------
    # acc rows: [0:Ch]=update, [Ch:2Ch]=reset, [2Ch:3Ch]=out gate.
    acc_ref[...] = jnp.broadcast_to(b1_ref[...], acc_ref.shape)
    for t in range(k * k):
        dy, dx = divmod(t, k)
        s = dy * Wp + dx           # == M + (dy-p)*Wp + (dx-p)  (static offset)
        xh = fxh_ref[:, s:s + NA].astype(jnp.bfloat16)
        acc_ref[...] += jnp.dot(w1_ref[t], xh,
                                preferred_element_type=jnp.float32)

    update = jax.nn.sigmoid(acc_ref[0:Ch, :])
    reset = jax.nn.sigmoid(acc_ref[Ch:2 * Ch, :])

    # --- 4) h * reset in padded-flat coords ----------------------------------
    # (h's halo is zero, so the written halo of fhr is correctly zero too.)
    h_img = fxh_ref[Cin:Cin + Ch, M:M + NA]          # f32, exact pass-through h
    fhr_ref[:, M:M + NA] = h_img * reset

    # --- 5) out-gate hidden-state contribution -------------------------------
    for t in range(k * k):
        dy, dx = divmod(t, k)
        s = dy * Wp + dx
        hr = fhr_ref[:, s:s + NA].astype(jnp.bfloat16)
        acc_ref[2 * Ch:3 * Ch, :] += jnp.dot(w2_ref[t], hr,
                                             preferred_element_type=jnp.float32)

    out_inputs = jnp.tanh(acc_ref[2 * Ch:3 * Ch, :])

    # --- 6) GRU state update: one dense, lane-aligned store ------------------
    out_ref[0] = h_img * (1.0 - update) + out_inputs * update


# ----------------------------------------------------------------------------
# Wrapper: NCHW in / NCHW out (matches PyTorch semantics)
# ----------------------------------------------------------------------------
@functools.partial(jax.jit, static_argnames=("kernel_size",))
def convgru_forward(x_nchw, prev_state_nchw, params, kernel_size):
    """params: 'wz','wr','wo' of shape (Ch, Cin+Ch, k, k) (OIHW, update/reset/out
    gates) and 'bz','br','bo' of shape (Ch,).  Returns (new_state, new_state)."""
    k = kernel_size
    p = k // 2
    B, Cin, H, W = x_nchw.shape
    Ch = params["wz"].shape[0]

    if prev_state_nchw is None:
        prev_state_nchw = jnp.zeros((B, Ch, H, W), dtype=x_nchw.dtype)

    Hp, Wp = H + 2 * p, W + 2 * p
    Npf = Hp * Wp                      # padded-flat spatial size
    M = p * Wp + p                     # max tap shift magnitude
    NA = _round_up(Npf, 128)           # lane-dense accumulator / output width
    Ntot = _round_up(NA + 2 * M, 128)  # staging buffer width (taps slice inside)
    HW = H * W

    # Free reshapes only — no transpose / pad passes over HBM.
    x = x_nchw.reshape(B, Cin, HW).astype(jnp.float32)
    h = prev_state_nchw.reshape(B, Ch, HW).astype(jnp.float32)

    # --- fused per-tap weights (tiny; done per call for simplicity) ----------
    def tapify(w):   # OIHW (Ch, Cio, k, k) -> (k*k, Ch, Cio)
        return jnp.transpose(w, (2, 3, 0, 1)).reshape(k * k, Ch, w.shape[1])

    wzt = tapify(params["wz"].astype(jnp.float32))
    wrt = tapify(params["wr"].astype(jnp.float32))
    wot = tapify(params["wo"].astype(jnp.float32))
    wox = jnp.concatenate(
        [wot[:, :, :Cin], jnp.zeros((k * k, Ch, Ch), jnp.float32)], axis=2)
    w1 = jnp.concatenate([wzt, wrt, wox], axis=1).astype(jnp.bfloat16)
    w2 = wot[:, :, Cin:].astype(jnp.bfloat16)
    b1 = jnp.concatenate(
        [params["bz"], params["br"], params["bo"]]).reshape(3 * Ch, 1)
    b1 = b1.astype(jnp.float32)

    kernel = functools.partial(_convgru_kernel, H=H, W=W, k=k)

    grid_spec = pltpu.PrefetchScalarGridSpec(
        num_scalar_prefetch=0,
        grid=(B,),
        in_specs=[
            pl.BlockSpec((1, Cin, HW), lambda b: (b, 0, 0)),
            pl.BlockSpec((1, Ch, HW), lambda b: (b, 0, 0)),
            pl.BlockSpec((k * k, 3 * Ch, Cin + Ch), lambda b: (0, 0, 0)),
            pl.BlockSpec((k * k, Ch, Ch), lambda b: (0, 0, 0)),
            pl.BlockSpec((3 * Ch, 1), lambda b: (0, 0)),
        ],
        out_specs=pl.BlockSpec((1, Ch, NA), lambda b: (b, 0, 0)),
        scratch_shapes=[
            pltpu.VMEM((Cin + Ch, Ntot), jnp.float32),   # fxh (padded-flat [x;h])
            pltpu.VMEM((Ch, Ntot), jnp.float32),         # fhr (padded-flat h*reset)
            pltpu.VMEM((3 * Ch, NA), jnp.float32),       # gate accumulators
        ],
    )

    out_flat = pl.pallas_call(
        kernel,
        out_shape=jax.ShapeDtypeStruct((B, Ch, NA), jnp.float32),
        grid_spec=grid_spec,
        compiler_params=pltpu.CompilerParams(
            dimension_semantics=("parallel",)),
    )(x, h, w1, w2, b1)

    # Interior extraction: padded-flat -> NCHW.
    new_state = out_flat[:, :, :Npf].reshape(B, Ch, Hp, Wp)[:, :, p:p + H,
                                                            p:p + W]
    new_state = new_state.astype(x_nchw.dtype)
    return new_state, new_state


# ----------------------------------------------------------------------------
# Pure-JAX reference (for correctness check)
# ----------------------------------------------------------------------------
def convgru_reference(x, prev_state, params, kernel_size):
    p = kernel_size // 2
    if prev_state is None:
        prev_state = jnp.zeros(
            (x.shape[0], params["wz"].shape[0], x.shape[2], x.shape[3]),
            dtype=x.dtype)

    def conv(inp, w, b):
        y = jax.lax.conv_general_dilated(
            inp, w, window_strides=(1, 1), padding=[(p, p), (p, p)],
            dimension_numbers=("NCHW", "OIHW", "NCHW"))
        return y + b[None, :, None, None]

    stacked = jnp.concatenate([x, prev_state], axis=1)
    update = jax.nn.sigmoid(conv(stacked, params["wz"], params["bz"]))
    reset = jax.nn.sigmoid(conv(stacked, params["wr"], params["br"]))
    out_inputs = jnp.tanh(
        conv(jnp.concatenate([x, prev_state * reset], axis=1),
             params["wo"], params["bo"]))
    new_state = prev_state * (1 - update) + out_inputs * update
    return new_state


# ----------------------------------------------------------------------------
# Main
# ----------------------------------------------------------------------------
if __name__ == "__main__":
    input_size = 4      # Cin
    hidden_size = 8     # Ch
    kernel_size = 3
    B, H, W = 2, 16, 16

    key = jax.random.PRNGKey(0)
    kx, kh, kz, kr, ko, kbz, kbr, kbo = jax.random.split(key, 8)

    # Deterministic synthetic parameter init (PyTorch uses orthogonal_/zeros;
    # exact init values do not change forward semantics, only the numbers).
    wshape = (hidden_size, input_size + hidden_size, kernel_size, kernel_size)
    params = {
        "wz": 0.1 * jax.random.normal(kz, wshape, dtype=jnp.float32),
        "wr": 0.1 * jax.random.normal(kr, wshape, dtype=jnp.float32),
        "wo": 0.1 * jax.random.normal(ko, wshape, dtype=jnp.float32),
        "bz": 0.1 * jax.random.normal(kbz, (hidden_size,), dtype=jnp.float32),
        "br": 0.1 * jax.random.normal(kbr, (hidden_size,), dtype=jnp.float32),
        "bo": 0.1 * jax.random.normal(kbo, (hidden_size,), dtype=jnp.float32),
    }

    x = jax.random.normal(kx, (B, input_size, H, W), dtype=jnp.float32)
    prev_state = jax.random.normal(kh, (B, hidden_size, H, W),
                                   dtype=jnp.float32)

    # Run Pallas kernel (with a given prev_state, and with prev_state=None).
    new_state, _ = convgru_forward(x, prev_state, params, kernel_size)
    new_state = jax.block_until_ready(new_state)

    new_state_none, _ = convgru_forward(x, None, params, kernel_size)
    new_state_none = jax.block_until_ready(new_state_none)

    # Correctness check against pure-JAX f32 reference.  Matmul operands are
    # bf16 (MXU native), so the tolerance is looser than a pure-f32 kernel.
    ref = convgru_reference(x, prev_state, params, kernel_size)
    ref_none = convgru_reference(x, None, params, kernel_size)

    assert new_state.shape == (B, hidden_size, H, W)
    assert jnp.allclose(new_state, ref, atol=5e-2, rtol=5e-2)
    assert jnp.mean(jnp.abs(new_state - ref)) < 5e-3
    assert jnp.allclose(new_state_none, ref_none, atol=5e-2, rtol=5e-2)
    assert jnp.mean(jnp.abs(new_state_none - ref_none)) < 5e-3

    print("KERNEL_OK")
</pallas_src>

<mosaic_0001>
module attributes {stable_mosaic.version = 11 : i64} {
  func.func @_convgru_kernel(%arg0: i32, %arg1: memref<1x4x256xf32, #tpu.memory_space<vmem>>, %arg2: memref<1x8x256xf32, #tpu.memory_space<vmem>>, %arg3: memref<9x24x12xbf16, #tpu.memory_space<vmem>>, %arg4: memref<9x8x8xbf16, #tpu.memory_space<vmem>>, %arg5: memref<24x1xf32, #tpu.memory_space<vmem>>, %arg6: memref<1x8x384xf32, #tpu.memory_space<vmem>>, %arg7: memref<12x512xf32, #tpu.memory_space<vmem>>, %arg8: memref<8x512xf32, #tpu.memory_space<vmem>>, %arg9: memref<24x384xf32, #tpu.memory_space<vmem>>) attributes {dimension_semantics = [#tpu.dimension_semantics<parallel>], iteration_bounds = array<i64: 2>, scalar_prefetch = 0 : i64, scratch_operands = 3 : i64, tpu.core_type = #tpu.core_type<tc>, window_params = [{transform_indices = @transform_0, window_bounds = array<i64: 1, 4, 256>}, {transform_indices = @transform_1, window_bounds = array<i64: 1, 8, 256>}, {pipeline_mode = #tpu.pipeline_mode<synchronous>, transform_indices = @transform_2, window_bounds = array<i64: 9, 24, 12>}, {pipeline_mode = #tpu.pipeline_mode<synchronous>, transform_indices = @transform_3, window_bounds = array<i64: 9, 8, 8>}, {pipeline_mode = #tpu.pipeline_mode<synchronous>, transform_indices = @transform_4, window_bounds = array<i64: 24, 1>}, {transform_indices = @transform_5, window_bounds = array<i64: 1, 8, 384>}]} {
    %cst = arith.constant 0.000000e+00 : f32
    %0 = vector.broadcast %cst : f32 to vector<12x512xf32>
    %c0 = arith.constant 0 : index
    %c0_0 = arith.constant 0 : index
    %1 = vector.load %arg7[%c0, %c0_0] : memref<12x512xf32, #tpu.memory_space<vmem>>, vector<12x512xf32>
    tpu.vector_store %arg7[%c0, %c0_0], %0 {strides = array<i32>} : memref<12x512xf32, #tpu.memory_space<vmem>>, vector<12x512xf32>,
    %cst_1 = arith.constant 0.000000e+00 : f32
    %2 = vector.broadcast %cst_1 : f32 to vector<8x512xf32>
    %c0_2 = arith.constant 0 : index
    %c0_3 = arith.constant 0 : index
    %3 = vector.load %arg8[%c0_2, %c0_3] : memref<8x512xf32, #tpu.memory_space<vmem>>, vector<8x512xf32>
    tpu.vector_store %arg8[%c0_2, %c0_3], %2 {strides = array<i32>} : memref<8x512xf32, #tpu.memory_space<vmem>>, vector<8x512xf32>,
    %c0_4 = arith.constant 0 : index
    %c0_5 = arith.constant 0 : index
    %c0_6 = arith.constant 0 : index
    %4 = vector.load %arg1[%c0_4, %c0_5, %c0_6] : memref<1x4x256xf32, #tpu.memory_space<vmem>>, vector<1x4x16xf32>
    %5 = vector.shape_cast %4 : vector<1x4x16xf32> to vector<4x16xf32>
    %c0_7 = arith.constant 0 : index
    %c38 = arith.constant 38 : index
    %6 = vector.load %arg7[%c0_7, %c38] : memref<12x512xf32, #tpu.memory_space<vmem>>, vector<4x16xf32>
    tpu.vector_store %arg7[%c0_7, %c38], %5 {strides = array<i32>} : memref<12x512xf32, #tpu.memory_space<vmem>>, vector<4x16xf32>,
    %c0_8 = arith.constant 0 : index
    %c0_9 = arith.constant 0 : index
    %c0_10 = arith.constant 0 : index
    %7 = vector.load %arg2[%c0_8, %c0_9, %c0_10] : memref<1x8x256xf32, #tpu.memory_space<vmem>>, vector<1x8x16xf32>
    %8 = vector.shape_cast %7 : vector<1x8x16xf32> to vector<8x16xf32>
    %c4 = arith.constant 4 : index
    %c38_11 = arith.constant 38 : index
    %9 = vector.load %arg7[%c4, %c38_11] : memref<12x512xf32, #tpu.memory_space<vmem>>, vector<8x16xf32>
    tpu.vector_store %arg7[%c4, %c38_11], %8 {strides = array<i32>} : memref<12x512xf32, #tpu.memory_space<vmem>>, vector<8x16xf32>,
    %c0_12 = arith.constant 0 : index
    %c0_13 = arith.constant 0 : index
    %c16 = arith.constant 16 : index
    %10 = vector.load %arg1[%c0_12, %c0_13, %c16] : memref<1x4x256xf32, #tpu.memory_space<vmem>>, vector<1x4x16xf32>
    %11 = vector.shape_cast %10 : vector<1x4x16xf32> to vector<4x16xf32>
    %c0_14 = arith.constant 0 : index
    %c56 = arith.constant 56 : index
    %12 = vector.load %arg7[%c0_14, %c56] : memref<12x512xf32, #tpu.memory_space<vmem>>, vector<4x16xf32>
    tpu.vector_store %arg7[%c0_14, %c56], %11 {strides = array<i32>} : memref<12x512xf32, #tpu.memory_space<vmem>>, vector<4x16xf32>,
    %c0_15 = arith.constant 0 : index
    %c0_16 = arith.constant 0 : index
    %c16_17 = arith.constant 16 : index
    %13 = vector.load %arg2[%c0_15, %c0_16, %c16_17] : memref<1x8x256xf32, #tpu.memory_space<vmem>>, vector<1x8x16xf32>
    %14 = vector.shape_cast %13 : vector<1x8x16xf32> to vector<8x16xf32>
    %c4_18 = arith.constant 4 : index
    %c56_19 = arith.constant 56 : index
    %15 = vector.load %arg7[%c4_18, %c56_19] : memref<12x512xf32, #tpu.memory_space<vmem>>, vector<8x16xf32>
    tpu.vector_store %arg7[%c4_18, %c56_19], %14 {strides = array<i32>} : memref<12x512xf32, #tpu.memory_space<vmem>>, vector<8x16xf32>,
    %c0_20 = arith.constant 0 : index
    %c0_21 = arith.constant 0 : index
    %c32 = arith.constant 32 : index
    %16 = vector.load %arg1[%c0_20, %c0_21, %c32] : memref<1x4x256xf32, #tpu.memory_space<vmem>>, vector<1x4x16xf32>
    %17 = vector.shape_cast %16 : vector<1x4x16xf32> to vector<4x16xf32>
    %c0_22 = arith.constant 0 : index
    %c74 = arith.constant 74 : index
    %18 = vector.load %arg7[%c0_22, %c74] : memref<12x512xf32, #tpu.memory_space<vmem>>, vector<4x16xf32>
    tpu.vector_store %arg7[%c0_22, %c74], %17 {strides = array<i32>} : memref<12x512xf32, #tpu.memory_space<vmem>>, vector<4x16xf32>,
    %c0_23 = arith.constant 0 : index
    %c0_24 = arith.constant 0 : index
    %c32_25 = arith.constant 32 : index
    %19 = vector.load %arg2[%c0_23, %c0_24, %c32_25] : memref<1x8x256xf32, #tpu.memory_space<vmem>>, vector<1x8x16xf32>
    %20 = vector.shape_cast %19 : vector<1x8x16xf32> to vector<8x16xf32>
    %c4_26 = arith.constant 4 : index
    %c74_27 = arith.constant 74 : index
    %21 = vector.load %arg7[%c4_26, %c74_27] : memref<12x512xf32, #tpu.memory_space<vmem>>, vector<8x16xf32>
    tpu.vector_store %arg7[%c4_26, %c74_27], %20 {strides = array<i32>} : memref<12x512xf32, #tpu.memory_space<vmem>>, vector<8x16xf32>,
    %c0_28 = arith.constant 0 : index
    %c0_29 = arith.constant 0 : index
    %c48 = arith.constant 48 : index
    %22 = vector.load %arg1[%c0_28, %c0_29, %c48] : memref<1x4x256xf32, #tpu.memory_space<vmem>>, vector<1x4x16xf32>
    %23 = vector.shape_cast %22 : vector<1x4x16xf32> to vector<4x16xf32>
    %c0_30 = arith.constant 0 : index
    %c92 = arith.constant 92 : index
    %24 = vector.load %arg7[%c0_30, %c92] : memref<12x512xf32, #tpu.memory_space<vmem>>, vector<4x16xf32>
    tpu.vector_store %arg7[%c0_30, %c92], %23 {strides = array<i32>} : memref<12x512xf32, #tpu.memory_space<vmem>>, vector<4x16xf32>,
    %c0_31 = arith.constant 0 : index
    %c0_32 = arith.constant 0 : index
    %c48_33 = arith.constant 48 : index
    %25 = vector.load %arg2[%c0_31, %c0_32, %c48_33] : memref<1x8x256xf32, #tpu.memory_space<vmem>>, vector<1x8x16xf32>
    %26 = vector.shape_cast %25 : vector<1x8x16xf32> to vector<8x16xf32>
    %c4_34 = arith.constant 4 : index
    %c92_35 = arith.constant 92 : index
    %27 = vector.load %arg7[%c4_34, %c92_35] : memref<12x512xf32, #tpu.memory_space<vmem>>, vector<8x16xf32>
    tpu.vector_store %arg7[%c4_34, %c92_35], %26 {strides = array<i32>} : memref<12x512xf32, #tpu.memory_space<vmem>>, vector<8x16xf32>,
    %c0_36 = arith.constant 0 : index
    %c0_37 = arith.constant 0 : index
    %c64 = arith.constant 64 : index
    %28 = vector.load %arg1[%c0_36, %c0_37, %c64] : memref<1x4x256xf32, #tpu.memory_space<vmem>>, vector<1x4x16xf32>
    %29 = vector.shape_cast %28 : vector<1x4x16xf32> to vector<4x16xf32>
    %c0_38 = arith.constant 0 : index
    %c110 = arith.constant 110 : index
    %30 = vector.load %arg7[%c0_38, %c110] : memref<12x512xf32, #tpu.memory_space<vmem>>, vector<4x16xf32>
    tpu.vector_store %arg7[%c0_38, %c110], %29 {strides = array<i32>} : memref<12x512xf32, #tpu.memory_space<vmem>>, vector<4x16xf32>,
    %c0_39 = arith.constant 0 : index
    %c0_40 = arith.constant 0 : index
    %c64_41 = arith.constant 64 : index
    %31 = vector.load %arg2[%c0_39, %c0_40, %c64_41] : memref<1x8x256xf32, #tpu.memory_space<vmem>>, vector<1x8x16xf32>
    %32 = vector.shape_cast %31 : vector<1x8x16xf32> to vector<8x16xf32>
    %c4_42 = arith.constant 4 : index
    %c110_43 = arith.constant 110 : index
    %33 = vector.load %arg7[%c4_42, %c110_43] : memref<12x512xf32, #tpu.memory_space<vmem>>, vector<8x16xf32>
    tpu.vector_store %arg7[%c4_42, %c110_43], %32 {strides = array<i32>} : memref<12x512xf32, #tpu.memory_space<vmem>>, vector<8x16xf32>,
    %c0_44 = arith.constant 0 : index
    %c0_45 = arith.constant 0 : index
    %c80 = arith.constant 80 : index
    %34 = vector.load %arg1[%c0_44, %c0_45, %c80] : memref<1x4x256xf32, #tpu.memory_space<vmem>>, vector<1x4x16xf32>
    %35 = vector.shape_cast %34 : vector<1x4x16xf32> to vector<4x16xf32>
    %c0_46 = arith.constant 0 : index
    %c128 = arith.constant 128 : index
    %36 = vector.load %arg7[%c0_46, %c128] : memref<12x512xf32, #tpu.memory_space<vmem>>, vector<4x16xf32>
    tpu.vector_store %arg7[%c0_46, %c128], %35 {strides = array<i32>} : memref<12x512xf32, #tpu.memory_space<vmem>>, vector<4x16xf32>,
    %c0_47 = arith.constant 0 : index
    %c0_48 = arith.constant 0 : index
    %c80_49 = arith.constant 80 : index
    %37 = vector.load %arg2[%c0_47, %c0_48, %c80_49] : memref<1x8x256xf32, #tpu.memory_space<vmem>>, vector<1x8x16xf32>
    %38 = vector.shape_cast %37 : vector<1x8x16xf32> to vector<8x16xf32>
    %c4_50 = arith.constant 4 : index
    %c128_51 = arith.constant 128 : index
    %39 = vector.load %arg7[%c4_50, %c128_51] : memref<12x512xf32, #tpu.memory_space<vmem>>, vector<8x16xf32>
    tpu.vector_store %arg7[%c4_50, %c128_51], %38 {strides = array<i32>} : memref<12x512xf32, #tpu.memory_space<vmem>>, vector<8x16xf32>,
    %c0_52 = arith.constant 0 : index
    %c0_53 = arith.constant 0 : index
    %c96 = arith.constant 96 : index
    %40 = vector.load %arg1[%c0_52, %c0_53, %c96] : memref<1x4x256xf32, #tpu.memory_space<vmem>>, vector<1x4x16xf32>
    %41 = vector.shape_cast %40 : vector<1x4x16xf32> to vector<4x16xf32>
    %c0_54 = arith.constant 0 : index
    %c146 = arith.constant 146 : index
    %42 = vector.load %arg7[%c0_54, %c146] : memref<12x512xf32, #tpu.memory_space<vmem>>, vector<4x16xf32>
    tpu.vector_store %arg7[%c0_54, %c146], %41 {strides = array<i32>} : memref<12x512xf32, #tpu.memory_space<vmem>>, vector<4x16xf32>,
    %c0_55 = arith.constant 0 : index
    %c0_56 = arith.constant 0 : index
    %c96_57 = arith.constant 96 : index
    %43 = vector.load %arg2[%c0_55, %c0_56, %c96_57] : memref<1x8x256xf32, #tpu.memory_space<vmem>>, vector<1x8x16xf32>
    %44 = vector.shape_cast %43 : vector<1x8x16xf32> to vector<8x16xf32>
    %c4_58 = arith.constant 4 : index
    %c146_59 = arith.constant 146 : index
    %45 = vector.load %arg7[%c4_58, %c146_59] : memref<12x512xf32, #tpu.memory_space<vmem>>, vector<8x16xf32>
    tpu.vector_store %arg7[%c4_58, %c146_59], %44 {strides = array<i32>} : memref<12x512xf32, #tpu.memory_space<vmem>>, vector<8x16xf32>,
    %c0_60 = arith.constant 0 : index
    %c0_61 = arith.constant 0 : index
    %c112 = arith.constant 112 : index
    %46 = vector.load %arg1[%c0_60, %c0_61, %c112] : memref<1x4x256xf32, #tpu.memory_space<vmem>>, vector<1x4x16xf32>
    %47 = vector.shape_cast %46 : vector<1x4x16xf32> to vector<4x16xf32>
    %c0_62 = arith.constant 0 : index
    %c164 = arith.constant 164 : index
    %48 = vector.load %arg7[%c0_62, %c164] : memref<12x512xf32, #tpu.memory_space<vmem>>, vector<4x16xf32>
    tpu.vector_store %arg7[%c0_62, %c164], %47 {strides = array<i32>} : memref<12x512xf32, #tpu.memory_space<vmem>>, vector<4x16xf32>,
    %c0_63 = arith.constant 0 : index
    %c0_64 = arith.constant 0 : index
    %c112_65 = arith.constant 112 : index
    %49 = vector.load %arg2[%c0_63, %c0_64, %c112_65] : memref<1x8x256xf32, #tpu.memory_space<vmem>>, vector<1x8x16xf32>
    %50 = vector.shape_cast %49 : vector<1x8x16xf32> to vector<8x16xf32>
    %c4_66 = arith.constant 4 : index
    %c164_67 = arith.constant 164 : index
    %51 = vector.load %arg7[%c4_66, %c164_67] : memref<12x512xf32, #tpu.memory_space<vmem>>, vector<8x16xf32>
    tpu.vector_store %arg7[%c4_66, %c164_67], %50 {strides = array<i32>} : memref<12x512xf32, #tpu.memory_space<vmem>>, vector<8x16xf32>,
    %c0_68 = arith.constant 0 : index
    %c0_69 = arith.constant 0 : index
    %c128_70 = arith.constant 128 : index
    %52 = vector.load %arg1[%c0_68, %c0_69, %c128_70] : memref<1x4x256xf32, #tpu.memory_space<vmem>>, vector<1x4x16xf32>
    %53 = vector.shape_cast %52 : vector<1x4x16xf32> to vector<4x16xf32>
    %c0_71 = arith.constant 0 : index
    %c182 = arith.constant 182 : index
    %54 = vector.load %arg7[%c0_71, %c182] : memref<12x512xf32, #tpu.memory_space<vmem>>, vector<4x16xf32>
    tpu.vector_store %arg7[%c0_71, %c182], %53 {strides = array<i32>} : memref<12x512xf32, #tpu.memory_space<vmem>>, vector<4x16xf32>,
    %c0_72 = arith.constant 0 : index
    %c0_73 = arith.constant 0 : index
    %c128_74 = arith.constant 128 : index
    %55 = vector.load %arg2[%c0_72, %c0_73, %c128_74] : memref<1x8x256xf32, #tpu.memory_space<vmem>>, vector<1x8x16xf32>
    %56 = vector.shape_cast %55 : vector<1x8x16xf32> to vector<8x16xf32>
    %c4_75 = arith.constant 4 : index
    %c182_76 = arith.constant 182 : index
    %57 = vector.load %arg7[%c4_75, %c182_76] : memref<12x512xf32, #tpu.memory_space<vmem>>, vector<8x16xf32>
    tpu.vector_store %arg7[%c4_75, %c182_76], %56 {strides = array<i32>} : memref<12x512xf32, #tpu.memory_space<vmem>>, vector<8x16xf32>,
    %c0_77 = arith.constant 0 : index
    %c0_78 = arith.constant 0 : index
    %c144 = arith.constant 144 : index
    %58 = vector.load %arg1[%c0_77, %c0_78, %c144] : memref<1x4x256xf32, #tpu.memory_space<vmem>>, vector<1x4x16xf32>
    %59 = vector.shape_cast %58 : vector<1x4x16xf32> to vector<4x16xf32>
    %c0_79 = arith.constant 0 : index
    %c200 = arith.constant 200 : index
    %60 = vector.load %arg7[%c0_79, %c200] : memref<12x512xf32, #tpu.memory_space<vmem>>, vector<4x16xf32>
    tpu.vector_store %arg7[%c0_79, %c200], %59 {strides = array<i32>} : memref<12x512xf32, #tpu.memory_space<vmem>>, vector<4x16xf32>,
    %c0_80 = arith.constant 0 : index
    %c0_81 = arith.constant 0 : index
    %c144_82 = arith.constant 144 : index
    %61 = vector.load %arg2[%c0_80, %c0_81, %c144_82] : memref<1x8x256xf32, #tpu.memory_space<vmem>>, vector<1x8x16xf32>
    %62 = vector.shape_cast %61 : vector<1x8x16xf32> to vector<8x16xf32>
    %c4_83 = arith.constant 4 : index
    %c200_84 = arith.constant 200 : index
    %63 = vector.load %arg7[%c4_83, %c200_84] : memref<12x512xf32, #tpu.memory_space<vmem>>, vector<8x16xf32>
    tpu.vector_store %arg7[%c4_83, %c200_84], %62 {strides = array<i32>} : memref<12x512xf32, #tpu.memory_space<vmem>>, vector<8x16xf32>,
    %c0_85 = arith.constant 0 : index
    %c0_86 = arith.constant 0 : index
    %c160 = arith.constant 160 : index
    %64 = vector.load %arg1[%c0_85, %c0_86, %c160] : memref<1x4x256xf32, #tpu.memory_space<vmem>>, vector<1x4x16xf32>
    %65 = vector.shape_cast %64 : vector<1x4x16xf32> to vector<4x16xf32>
    %c0_87 = arith.constant 0 : index
    %c218 = arith.constant 218 : index
    %66 = vector.load %arg7[%c0_87, %c218] : memref<12x512xf32, #tpu.memory_space<vmem>>, vector<4x16xf32>
    tpu.vector_store %arg7[%c0_87, %c218], %65 {strides = array<i32>} : memref<12x512xf32, #tpu.memory_space<vmem>>, vector<4x16xf32>,
    %c0_88 = arith.constant 0 : index
    %c0_89 = arith.constant 0 : index
    %c160_90 = arith.constant 160 : index
    %67 = vector.load %arg2[%c0_88, %c0_89, %c160_90] : memref<1x8x256xf32, #tpu.memory_space<vmem>>, vector<1x8x16xf32>
    %68 = vector.shape_cast %67 : vector<1x8x16xf32> to vector<8x16xf32>
    %c4_91 = arith.constant 4 : index
    %c218_92 = arith.constant 218 : index
    %69 = vector.load %arg7[%c4_91, %c218_92] : memref<12x512xf32, #tpu.memory_space<vmem>>, vector<8x16xf32>
    tpu.vector_store %arg7[%c4_91, %c218_92], %68 {strides = array<i32>} : memref<12x512xf32, #tpu.memory_space<vmem>>, vector<8x16xf32>,
    %c0_93 = arith.constant 0 : index
    %c0_94 = arith.constant 0 : index
    %c176 = arith.constant 176 : index
    %70 = vector.load %arg1[%c0_93, %c0_94, %c176] : memref<1x4x256xf32, #tpu.memory_space<vmem>>, vector<1x4x16xf32>
    %71 = vector.shape_cast %70 : vector<1x4x16xf32> to vector<4x16xf32>
    %c0_95 = arith.constant 0 : index
    %c236 = arith.constant 236 : index
    %72 = vector.load %arg7[%c0_95, %c236] : memref<12x512xf32, #tpu.memory_space<vmem>>, vector<4x16xf32>
    tpu.vector_store %arg7[%c0_95, %c236], %71 {strides = array<i32>} : memref<12x512xf32, #tpu.memory_space<vmem>>, vector<4x16xf32>,
    %c0_96 = arith.constant 0 : index
    %c0_97 = arith.constant 0 : index
    %c176_98 = arith.constant 176 : index
    %73 = vector.load %arg2[%c0_96, %c0_97, %c176_98] : memref<1x8x256xf32, #tpu.memory_space<vmem>>, vector<1x8x16xf32>
    %74 = vector.shape_cast %73 : vector<1x8x16xf32> to vector<8x16xf32>
    %c4_99 = arith.constant 4 : index
    %c236_100 = arith.constant 236 : index
    %75 = vector.load %arg7[%c4_99, %c236_100] : memref<12x512xf32, #tpu.memory_space<vmem>>, vector<8x16xf32>
    tpu.vector_store %arg7[%c4_99, %c236_100], %74 {strides = array<i32>} : memref<12x512xf32, #tpu.memory_space<vmem>>, vector<8x16xf32>,
    %c0_101 = arith.constant 0 : index
    %c0_102 = arith.constant 0 : index
    %c192 = arith.constant 192 : index
    %76 = vector.load %arg1[%c0_101, %c0_102, %c192] : memref<1x4x256xf32, #tpu.memory_space<vmem>>, vector<1x4x16xf32>
    %77 = vector.shape_cast %76 : vector<1x4x16xf32> to vector<4x16xf32>
    %c0_103 = arith.constant 0 : index
    %c254 = arith.constant 254 : index
    %78 = vector.load %arg7[%c0_103, %c254] : memref<12x512xf32, #tpu.memory_space<vmem>>, vector<4x16xf32>
    tpu.vector_store %arg7[%c0_103, %c254], %77 {strides = array<i32>} : memref<12x512xf32, #tpu.memory_space<vmem>>, vector<4x16xf32>,
    %c0_104 = arith.constant 0 : index
    %c0_105 = arith.constant 0 : index
    %c192_106 = arith.constant 192 : index
    %79 = vector.load %arg2[%c0_104, %c0_105, %c192_106] : memref<1x8x256xf32, #tpu.memory_space<vmem>>, vector<1x8x16xf32>
    %80 = vector.shape_cast %79 : vector<1x8x16xf32> to vector<8x16xf32>
    %c4_107 = arith.constant 4 : index
    %c254_108 = arith.constant 254 : index
    %81 = vector.load %arg7[%c4_107, %c254_108] : memref<12x512xf32, #tpu.memory_space<vmem>>, vector<8x16xf32>
    tpu.vector_store %arg7[%c4_107, %c254_108], %80 {strides = array<i32>} : memref<12x512xf32, #tpu.memory_space<vmem>>, vector<8x16xf32>,
    %c0_109 = arith.constant 0 : index
    %c0_110 = arith.constant 0 : index
    %c208 = arith.constant 208 : index
    %82 = vector.load %arg1[%c0_109, %c0_110, %c208] : memref<1x4x256xf32, #tpu.memory_space<vmem>>, vector<1x4x16xf32>
    %83 = vector.shape_cast %82 : vector<1x4x16xf32> to vector<4x16xf32>
    %c0_111 = arith.constant 0 : index
    %c272 = arith.constant 272 : index
    %84 = vector.load %arg7[%c0_111, %c272] : memref<12x512xf32, #tpu.memory_space<vmem>>, vector<4x16xf32>
    tpu.vector_store %arg7[%c0_111, %c272], %83 {strides = array<i32>} : memref<12x512xf32, #tpu.memory_space<vmem>>, vector<4x16xf32>,
    %c0_112 = arith.constant 0 : index
    %c0_113 = arith.constant 0 : index
    %c208_114 = arith.constant 208 : index
    %85 = vector.load %arg2[%c0_112, %c0_113, %c208_114] : memref<1x8x256xf32, #tpu.memory_space<vmem>>, vector<1x8x16xf32>
    %86 = vector.shape_cast %85 : vector<1x8x16xf32> to vector<8x16xf32>
    %c4_115 = arith.constant 4 : index
    %c272_116 = arith.constant 272 : index
    %87 = vector.load %arg7[%c4_115, %c272_116] : memref<12x512xf32, #tpu.memory_space<vmem>>, vector<8x16xf32>
    tpu.vector_store %arg7[%c4_115, %c272_116], %86 {strides = array<i32>} : memref<12x512xf32, #tpu.memory_space<vmem>>, vector<8x16xf32>,
    %c0_117 = arith.constant 0 : index
    %c0_118 = arith.constant 0 : index
    %c224 = arith.constant 224 : index
    %88 = vector.load %arg1[%c0_117, %c0_118, %c224] : memref<1x4x256xf32, #tpu.memory_space<vmem>>, vector<1x4x16xf32>
    %89 = vector.shape_cast %88 : vector<1x4x16xf32> to vector<4x16xf32>
    %c0_119 = arith.constant 0 : index
    %c290 = arith.constant 290 : index
    %90 = vector.load %arg7[%c0_119, %c290] : memref<12x512xf32, #tpu.memory_space<vmem>>, vector<4x16xf32>
    tpu.vector_store %arg7[%c0_119, %c290], %89 {strides = array<i32>} : memref<12x512xf32, #tpu.memory_space<vmem>>, vector<4x16xf32>,
    %c0_120 = arith.constant 0 : index
    %c0_121 = arith.constant 0 : index
    %c224_122 = arith.constant 224 : index
    %91 = vector.load %arg2[%c0_120, %c0_121, %c224_122] : memref<1x8x256xf32, #tpu.memory_space<vmem>>, vector<1x8x16xf32>
    %92 = vector.shape_cast %91 : vector<1x8x16xf32> to vector<8x16xf32>
    %c4_123 = arith.constant 4 : index
    %c290_124 = arith.constant 290 : index
    %93 = vector.load %arg7[%c4_123, %c290_124] : memref<12x512xf32, #tpu.memory_space<vmem>>, vector<8x16xf32>
    tpu.vector_store %arg7[%c4_123, %c290_124], %92 {strides = array<i32>} : memref<12x512xf32, #tpu.memory_space<vmem>>, vector<8x16xf32>,
    %c0_125 = arith.constant 0 : index
    %c0_126 = arith.constant 0 : index
    %c240 = arith.constant 240 : index
    %94 = vector.load %arg1[%c0_125, %c0_126, %c240] : memref<1x4x256xf32, #tpu.memory_space<vmem>>, vector<1x4x16xf32>
    %95 = vector.shape_cast %94 : vector<1x4x16xf32> to vector<4x16xf32>
    %c0_127 = arith.constant 0 : index
    %c308 = arith.constant 308 : index
    %96 = vector.load %arg7[%c0_127, %c308] : memref<12x512xf32, #tpu.memory_space<vmem>>, vector<4x16xf32>
    tpu.vector_store %arg7[%c0_127, %c308], %95 {strides = array<i32>} : memref<12x512xf32, #tpu.memory_space<vmem>>, vector<4x16xf32>,
    %c0_128 = arith.constant 0 : index
    %c0_129 = arith.constant 0 : index
    %c240_130 = arith.constant 240 : index
    %97 = vector.load %arg2[%c0_128, %c0_129, %c240_130] : memref<1x8x256xf32, #tpu.memory_space<vmem>>, vector<1x8x16xf32>
    %98 = vector.shape_cast %97 : vector<1x8x16xf32> to vector<8x16xf32>
    %c4_131 = arith.constant 4 : index
    %c308_132 = arith.constant 308 : index
    %99 = vector.load %arg7[%c4_131, %c308_132] : memref<12x512xf32, #tpu.memory_space<vmem>>, vector<8x16xf32>
    tpu.vector_store %arg7[%c4_131, %c308_132], %98 {strides = array<i32>} : memref<12x512xf32, #tpu.memory_space<vmem>>, vector<8x16xf32>,
    %c0_133 = arith.constant 0 : index
    %c0_134 = arith.constant 0 : index
    %100 = vector.load %arg5[%c0_133, %c0_134] : memref<24x1xf32, #tpu.memory_space<vmem>>, vector<24x1xf32>
    %101 = vector.shape_cast %100 : vector<24x1xf32> to vector<24x1xf32>
    %102 = vector.broadcast %101 : vector<24x1xf32> to vector<24x384xf32>
    %c0_135 = arith.constant 0 : index
    %c0_136 = arith.constant 0 : index
    %103 = vector.load %arg9[%c0_135, %c0_136] : memref<24x384xf32, #tpu.memory_space<vmem>>, vector<24x384xf32>
    tpu.vector_store %arg9[%c0_135, %c0_136], %102 {strides = array<i32>} : memref<24x384xf32, #tpu.memory_space<vmem>>, vector<24x384xf32>,
    %c0_137 = arith.constant 0 : index
    %c0_138 = arith.constant 0 : index
    %104 = vector.load %arg7[%c0_137, %c0_138] : memref<12x512xf32, #tpu.memory_space<vmem>>, vector<12x384xf32>
    %105 = arith.truncf %104 : vector<12x384xf32> to vector<12x384xbf16>
    %c0_139 = arith.constant 0 : index
    %c0_140 = arith.constant 0 : index
    %106 = vector.load %arg9[%c0_139, %c0_140] : memref<24x384xf32, #tpu.memory_space<vmem>>, vector<24x384xf32>
    %c0_141 = arith.constant 0 : index
    %c0_142 = arith.constant 0 : index
    %c0_143 = arith.constant 0 : index
    %107 = vector.load %arg3[%c0_141, %c0_142, %c0_143] : memref<9x24x12xbf16, #tpu.memory_space<vmem>>, vector<1x24x12xbf16>
    %108 = vector.shape_cast %107 : vector<1x24x12xbf16> to vector<24x12xbf16>
    %cst_144 = arith.constant dense<0.000000e+00> : vector<24x384xf32>
    %109 = tpu.matmul %108, %105, %cst_144 {dimension_numbers = #tpu.dot_dimension_numbers<[1], [0], [0], [1], [0, 0, 1, 1], [], []>} : vector<24x12xbf16>, vector<12x384xbf16>, vector<24x384xf32> -> vector<24x384xf32>
    %110 = arith.addf %106, %109 : vector<24x384xf32>
    %c0_145 = arith.constant 0 : index
    %c0_146 = arith.constant 0 : index
    %111 = vector.load %arg9[%c0_145, %c0_146] : memref<24x384xf32, #tpu.memory_space<vmem>>, vector<24x384xf32>
    tpu.vector_store %arg9[%c0_145, %c0_146], %110 {strides = array<i32>} : memref<24x384xf32, #tpu.memory_space<vmem>>, vector<24x384xf32>,
    %c0_147 = arith.constant 0 : index
    %c1 = arith.constant 1 : index
    %112 = vector.load %arg7[%c0_147, %c1] : memref<12x512xf32, #tpu.memory_space<vmem>>, vector<12x384xf32>
    %113 = arith.truncf %112 : vector<12x384xf32> to vector<12x384xbf16>
    %c0_148 = arith.constant 0 : index
    %c0_149 = arith.constant 0 : index
    %114 = vector.load %arg9[%c0_148, %c0_149] : memref<24x384xf32, #tpu.memory_space<vmem>>, vector<24x384xf32>
    %c1_150 = arith.constant 1 : index
    %c0_151 = arith.constant 0 : index
    %c0_152 = arith.constant 0 : index
    %115 = vector.load %arg3[%c1_150, %c0_151, %c0_152] : memref<9x24x12xbf16, #tpu.memory_space<vmem>>, vector<1x24x12xbf16>
    %116 = vector.shape_cast %115 : vector<1x24x12xbf16> to vector<24x12xbf16>
    %cst_153 = arith.constant dense<0.000000e+00> : vector<24x384xf32>
    %117 = tpu.matmul %116, %113, %cst_153 {dimension_numbers = #tpu.dot_dimension_numbers<[1], [0], [0], [1], [0, 0, 1, 1], [], []>} : vector<24x12xbf16>, vector<12x384xbf16>, vector<24x384xf32> -> vector<24x384xf32>
    %118 = arith.addf %114, %117 : vector<24x384xf32>
    %c0_154 = arith.constant 0 : index
    %c0_155 = arith.constant 0 : index
    %119 = vector.load %arg9[%c0_154, %c0_155] : memref<24x384xf32, #tpu.memory_space<vmem>>, vector<24x384xf32>
    tpu.vector_store %arg9[%c0_154, %c0_155], %118 {strides = array<i32>} : memref<24x384xf32, #tpu.memory_space<vmem>>, vector<24x384xf32>,
    %c0_156 = arith.constant 0 : index
    %c2 = arith.constant 2 : index
    %120 = vector.load %arg7[%c0_156, %c2] : memref<12x512xf32, #tpu.memory_space<vmem>>, vector<12x384xf32>
    %121 = arith.truncf %120 : vector<12x384xf32> to vector<12x384xbf16>
    %c0_157 = arith.constant 0 : index
    %c0_158 = arith.constant 0 : index
    %122 = vector.load %arg9[%c0_157, %c0_158] : memref<24x384xf32, #tpu.memory_space<vmem>>, vector<24x384xf32>
    %c2_159 = arith.constant 2 : index
    %c0_160 = arith.constant 0 : index
    %c0_161 = arith.constant 0 : index
    %123 = vector.load %arg3[%c2_159, %c0_160, %c0_161] : memref<9x24x12xbf16, #tpu.memory_space<vmem>>, vector<1x24x12xbf16>
    %124 = vector.shape_cast %123 : vector<1x24x12xbf16> to vector<24x12xbf16>
    %cst_162 = arith.constant dense<0.000000e+00> : vector<24x384xf32>
    %125 = tpu.matmul %124, %121, %cst_162 {dimension_numbers = #tpu.dot_dimension_numbers<[1], [0], [0], [1], [0, 0, 1, 1], [], []>} : vector<24x12xbf16>, vector<12x384xbf16>, vector<24x384xf32> -> vector<24x384xf32>
    %126 = arith.addf %122, %125 : vector<24x384xf32>
    %c0_163 = arith.constant 0 : index
    %c0_164 = arith.constant 0 : index
    %127 = vector.load %arg9[%c0_163, %c0_164] : memref<24x384xf32, #tpu.memory_space<vmem>>, vector<24x384xf32>
    tpu.vector_store %arg9[%c0_163, %c0_164], %126 {strides = array<i32>} : memref<24x384xf32, #tpu.memory_space<vmem>>, vector<24x384xf32>,
    %c0_165 = arith.constant 0 : index
    %c18 = arith.constant 18 : index
    %128 = vector.load %arg7[%c0_165, %c18] : memref<12x512xf32, #tpu.memory_space<vmem>>, vector<12x384xf32>
    %129 = arith.truncf %128 : vector<12x384xf32> to vector<12x384xbf16>
    %c0_166 = arith.constant 0 : index
    %c0_167 = arith.constant 0 : index
    %130 = vector.load %arg9[%c0_166, %c0_167] : memref<24x384xf32, #tpu.memory_space<vmem>>, vector<24x384xf32>
    %c3 = arith.constant 3 : index
    %c0_168 = arith.constant 0 : index
    %c0_169 = arith.constant 0 : index
    %131 = vector.load %arg3[%c3, %c0_168, %c0_169] : memref<9x24x12xbf16, #tpu.memory_space<vmem>>, vector<1x24x12xbf16>
    %132 = vector.shape_cast %131 : vector<1x24x12xbf16> to vector<24x12xbf16>
    %cst_170 = arith.constant dense<0.000000e+00> : vector<24x384xf32>
    %133 = tpu.matmul %132, %129, %cst_170 {dimension_numbers = #tpu.dot_dimension_numbers<[1], [0], [0], [1], [0, 0, 1, 1], [], []>} : vector<24x12xbf16>, vector<12x384xbf16>, vector<24x384xf32> -> vector<24x384xf32>
    %134 = arith.addf %130, %133 : vector<24x384xf32>
    %c0_171 = arith.constant 0 : index
    %c0_172 = arith.constant 0 : index
    %135 = vector.load %arg9[%c0_171, %c0_172] : memref<24x384xf32, #tpu.memory_space<vmem>>, vector<24x384xf32>
    tpu.vector_store %arg9[%c0_171, %c0_172], %134 {strides = array<i32>} : memref<24x384xf32, #tpu.memory_space<vmem>>, vector<24x384xf32>,
    %c0_173 = arith.constant 0 : index
    %c19 = arith.constant 19 : index
    %136 = vector.load %arg7[%c0_173, %c19] : memref<12x512xf32, #tpu.memory_space<vmem>>, vector<12x384xf32>
    %137 = arith.truncf %136 : vector<12x384xf32> to vector<12x384xbf16>
    %c0_174 = arith.constant 0 : index
    %c0_175 = arith.constant 0 : index
    %138 = vector.load %arg9[%c0_174, %c0_175] : memref<24x384xf32, #tpu.memory_space<vmem>>, vector<24x384xf32>
    %c4_176 = arith.constant 4 : index
    %c0_177 = arith.constant 0 : index
    %c0_178 = arith.constant 0 : index
    %139 = vector.load %arg3[%c4_176, %c0_177, %c0_178] : memref<9x24x12xbf16, #tpu.memory_space<vmem>>, vector<1x24x12xbf16>
    %140 = vector.shape_cast %139 : vector<1x24x12xbf16> to vector<24x12xbf16>
    %cst_179 = arith.constant dense<0.000000e+00> : vector<24x384xf32>
    %141 = tpu.matmul %140, %137, %cst_179 {dimension_numbers = #tpu.dot_dimension_numbers<[1], [0], [0], [1], [0, 0, 1, 1], [], []>} : vector<24x12xbf16>, vector<12x384xbf16>, vector<24x384xf32> -> vector<24x384xf32>
    %142 = arith.addf %138, %141 : vector<24x384xf32>
    %c0_180 = arith.constant 0 : index
    %c0_181 = arith.constant 0 : index
    %143 = vector.load %arg9[%c0_180, %c0_181] : memref<24x384xf32, #tpu.memory_space<vmem>>, vector<24x384xf32>
    tpu.vector_store %arg9[%c0_180, %c0_181], %142 {strides = array<i32>} : memref<24x384xf32, #tpu.memory_space<vmem>>, vector<24x384xf32>,
    %c0_182 = arith.constant 0 : index
    %c20 = arith.constant 20 : index
    %144 = vector.load %arg7[%c0_182, %c20] : memref<12x512xf32, #tpu.memory_space<vmem>>, vector<12x384xf32>
    %145 = arith.truncf %144 : vector<12x384xf32> to vector<12x384xbf16>
    %c0_183 = arith.constant 0 : index
    %c0_184 = arith.constant 0 : index
    %146 = vector.load %arg9[%c0_183, %c0_184] : memref<24x384xf32, #tpu.memory_space<vmem>>, vector<24x384xf32>
    %c5 = arith.constant 5 : index
    %c0_185 = arith.constant 0 : index
    %c0_186 = arith.constant 0 : index
    %147 = vector.load %arg3[%c5, %c0_185, %c0_186] : memref<9x24x12xbf16, #tpu.memory_space<vmem>>, vector<1x24x12xbf16>
    %148 = vector.shape_cast %147 : vector<1x24x12xbf16> to vector<24x12xbf16>
    %cst_187 = arith.constant dense<0.000000e+00> : vector<24x384xf32>
    %149 = tpu.matmul %148, %145, %cst_187 {dimension_numbers = #tpu.dot_dimension_numbers<[1], [0], [0], [1], [0, 0, 1, 1], [], []>} : vector<24x12xbf16>, vector<12x384xbf16>, vector<24x384xf32> -> vector<24x384xf32>
    %150 = arith.addf %146, %149 : vector<24x384xf32>
    %c0_188 = arith.constant 0 : index
    %c0_189 = arith.constant 0 : index
    %151 = vector.load %arg9[%c0_188, %c0_189] : memref<24x384xf32, #tpu.memory_space<vmem>>, vector<24x384xf32>
    tpu.vector_store %arg9[%c0_188, %c0_189], %150 {strides = array<i32>} : memref<24x384xf32, #tpu.memory_space<vmem>>, vector<24x384xf32>,
    %c0_190 = arith.constant 0 : index
    %c36 = arith.constant 36 : index
    %152 = vector.load %arg7[%c0_190, %c36] : memref<12x512xf32, #tpu.memory_space<vmem>>, vector<12x384xf32>
    %153 = arith.truncf %152 : vector<12x384xf32> to vector<12x384xbf16>
    %c0_191 = arith.constant 0 : index
    %c0_192 = arith.constant 0 : index
    %154 = vector.load %arg9[%c0_191, %c0_192] : memref<24x384xf32, #tpu.memory_space<vmem>>, vector<24x384xf32>
    %c6 = arith.constant 6 : index
    %c0_193 = arith.constant 0 : index
    %c0_194 = arith.constant 0 : index
    %155 = vector.load %arg3[%c6, %c0_193, %c0_194] : memref<9x24x12xbf16, #tpu.memory_space<vmem>>, vector<1x24x12xbf16>
    %156 = vector.shape_cast %155 : vector<1x24x12xbf16> to vector<24x12xbf16>
    %cst_195 = arith.constant dense<0.000000e+00> : vector<24x384xf32>
    %157 = tpu.matmul %156, %153, %cst_195 {dimension_numbers = #tpu.dot_dimension_numbers<[1], [0], [0], [1], [0, 0, 1, 1], [], []>} : vector<24x12xbf16>, vector<12x384xbf16>, vector<24x384xf32> -> vector<24x384xf32>
    %158 = arith.addf %154, %157 : vector<24x384xf32>
    %c0_196 = arith.constant 0 : index
    %c0_197 = arith.constant 0 : index
    %159 = vector.load %arg9[%c0_196, %c0_197] : memref<24x384xf32, #tpu.memory_space<vmem>>, vector<24x384xf32>
    tpu.vector_store %arg9[%c0_196, %c0_197], %158 {strides = array<i32>} : memref<24x384xf32, #tpu.memory_space<vmem>>, vector<24x384xf32>,
    %c0_198 = arith.constant 0 : index
    %c37 = arith.constant 37 : index
    %160 = vector.load %arg7[%c0_198, %c37] : memref<12x512xf32, #tpu.memory_space<vmem>>, vector<12x384xf32>
    %161 = arith.truncf %160 : vector<12x384xf32> to vector<12x384xbf16>
    %c0_199 = arith.constant 0 : index
    %c0_200 = arith.constant 0 : index
    %162 = vector.load %arg9[%c0_199, %c0_200] : memref<24x384xf32, #tpu.memory_space<vmem>>, vector<24x384xf32>
    %c7 = arith.constant 7 : index
    %c0_201 = arith.constant 0 : index
    %c0_202 = arith.constant 0 : index
    %163 = vector.load %arg3[%c7, %c0_201, %c0_202] : memref<9x24x12xbf16, #tpu.memory_space<vmem>>, vector<1x24x12xbf16>
    %164 = vector.shape_cast %163 : vector<1x24x12xbf16> to vector<24x12xbf16>
    %cst_203 = arith.constant dense<0.000000e+00> : vector<24x384xf32>
    %165 = tpu.matmul %164, %161, %cst_203 {dimension_numbers = #tpu.dot_dimension_numbers<[1], [0], [0], [1], [0, 0, 1, 1], [], []>} : vector<24x12xbf16>, vector<12x384xbf16>, vector<24x384xf32> -> vector<24x384xf32>
    %166 = arith.addf %162, %165 : vector<24x384xf32>
    %c0_204 = arith.constant 0 : index
    %c0_205 = arith.constant 0 : index
    %167 = vector.load %arg9[%c0_204, %c0_205] : memref<24x384xf32, #tpu.memory_space<vmem>>, vector<24x384xf32>
    tpu.vector_store %arg9[%c0_204, %c0_205], %166 {strides = array<i32>} : memref<24x384xf32, #tpu.memory_space<vmem>>, vector<24x384xf32>,
    %c0_206 = arith.constant 0 : index
    %c38_207 = arith.constant 38 : index
    %168 = vector.load %arg7[%c0_206, %c38_207] : memref<12x512xf32, #tpu.memory_space<vmem>>, vector<12x384xf32>
    %169 = arith.truncf %168 : vector<12x384xf32> to vector<12x384xbf16>
    %c0_208 = arith.constant 0 : index
    %c0_209 = arith.constant 0 : index
    %170 = vector.load %arg9[%c0_208, %c0_209] : memref<24x384xf32, #tpu.memory_space<vmem>>, vector<24x384xf32>
    %c8 = arith.constant 8 : index
    %c0_210 = arith.constant 0 : index
    %c0_211 = arith.constant 0 : index
    %171 = vector.load %arg3[%c8, %c0_210, %c0_211] : memref<9x24x12xbf16, #tpu.memory_space<vmem>>, vector<1x24x12xbf16>
    %172 = vector.shape_cast %171 : vector<1x24x12xbf16> to vector<24x12xbf16>
    %cst_212 = arith.constant dense<0.000000e+00> : vector<24x384xf32>
    %173 = tpu.matmul %172, %169, %cst_212 {dimension_numbers = #tpu.dot_dimension_numbers<[1], [0], [0], [1], [0, 0, 1, 1], [], []>} : vector<24x12xbf16>, vector<12x384xbf16>, vector<24x384xf32> -> vector<24x384xf32>
    %174 = arith.addf %170, %173 : vector<24x384xf32>
    %c0_213 = arith.constant 0 : index
    %c0_214 = arith.constant 0 : index
    %175 = vector.load %arg9[%c0_213, %c0_214] : memref<24x384xf32, #tpu.memory_space<vmem>>, vector<24x384xf32>
    tpu.vector_store %arg9[%c0_213, %c0_214], %174 {strides = array<i32>} : memref<24x384xf32, #tpu.memory_space<vmem>>, vector<24x384xf32>,
    %c0_215 = arith.constant 0 : index
    %c0_216 = arith.constant 0 : index
    %176 = vector.load %arg9[%c0_215, %c0_216] : memref<24x384xf32, #tpu.memory_space<vmem>>, vector<8x384xf32>
    %177 = arith.negf %176 : vector<8x384xf32>
    %178 = math.exp %177 : vector<8x384xf32>
    %cst_217 = arith.constant 1.000000e+00 : f32
    %179 = vector.broadcast %cst_217 : f32 to vector<8x384xf32>
    %180 = arith.addf %179, %178 : vector<8x384xf32>
    %181 = arith.divf %179, %180 : vector<8x384xf32>
    %c8_218 = arith.constant 8 : index
    %c0_219 = arith.constant 0 : index
    %182 = vector.load %arg9[%c8_218, %c0_219] : memref<24x384xf32, #tpu.memory_space<vmem>>, vector<8x384xf32>
    %183 = arith.negf %182 : vector<8x384xf32>
    %184 = math.exp %183 : vector<8x384xf32>
    %cst_220 = arith.constant 1.000000e+00 : f32
    %185 = vector.broadcast %cst_220 : f32 to vector<8x384xf32>
    %186 = arith.addf %185, %184 : vector<8x384xf32>
    %187 = arith.divf %185, %186 : vector<8x384xf32>
    %c4_221 = arith.constant 4 : index
    %c19_222 = arith.constant 19 : index
    %188 = vector.load %arg7[%c4_221, %c19_222] : memref<12x512xf32, #tpu.memory_space<vmem>>, vector<8x384xf32>
    %189 = arith.mulf %188, %187 : vector<8x384xf32>
    %c0_223 = arith.constant 0 : index
    %c19_224 = arith.constant 19 : index
    %190 = vector.load %arg8[%c0_223, %c19_224] : memref<8x512xf32, #tpu.memory_space<vmem>>, vector<8x384xf32>
    tpu.vector_store %arg8[%c0_223, %c19_224], %189 {strides = array<i32>} : memref<8x512xf32, #tpu.memory_space<vmem>>, vector<8x384xf32>,
    %c0_225 = arith.constant 0 : index
    %c0_226 = arith.constant 0 : index
    %191 = vector.load %arg8[%c0_225, %c0_226] : memref<8x512xf32, #tpu.memory_space<vmem>>, vector<8x384xf32>
    %192 = arith.truncf %191 : vector<8x384xf32> to vector<8x384xbf16>
    %c16_227 = arith.constant 16 : index
    %c0_228 = arith.constant 0 : index
    %193 = vector.load %arg9[%c16_227, %c0_228] : memref<24x384xf32, #tpu.memory_space<vmem>>, vector<8x384xf32>
    %c0_229 = arith.constant 0 : index
    %c0_230 = arith.constant 0 : index
    %c0_231 = arith.constant 0 : index
    %194 = vector.load %arg4[%c0_229, %c0_230, %c0_231] : memref<9x8x8xbf16, #tpu.memory_space<vmem>>, vector<1x8x8xbf16>
    %195 = vector.shape_cast %194 : vector<1x8x8xbf16> to vector<8x8xbf16>
    %cst_232 = arith.constant dense<0.000000e+00> : vector<8x384xf32>
    %196 = tpu.matmul %195, %192, %cst_232 {dimension_numbers = #tpu.dot_dimension_numbers<[1], [0], [0], [1], [0, 0, 1, 1], [], []>} : vector<8x8xbf16>, vector<8x384xbf16>, vector<8x384xf32> -> vector<8x384xf32>
    %197 = arith.addf %193, %196 : vector<8x384xf32>
    %c16_233 = arith.constant 16 : index
    %c0_234 = arith.constant 0 : index
    %198 = vector.load %arg9[%c16_233, %c0_234] : memref<24x384xf32, #tpu.memory_space<vmem>>, vector<8x384xf32>
    tpu.vector_store %arg9[%c16_233, %c0_234], %197 {strides = array<i32>} : memref<24x384xf32, #tpu.memory_space<vmem>>, vector<8x384xf32>,
    %c0_235 = arith.constant 0 : index
    %c1_236 = arith.constant 1 : index
    %199 = vector.load %arg8[%c0_235, %c1_236] : memref<8x512xf32, #tpu.memory_space<vmem>>, vector<8x384xf32>
    %200 = arith.truncf %199 : vector<8x384xf32> to vector<8x384xbf16>
    %c16_237 = arith.constant 16 : index
    %c0_238 = arith.constant 0 : index
    %201 = vector.load %arg9[%c16_237, %c0_238] : memref<24x384xf32, #tpu.memory_space<vmem>>, vector<8x384xf32>
    %c1_239 = arith.constant 1 : index
    %c0_240 = arith.constant 0 : index
    %c0_241 = arith.constant 0 : index
    %202 = vector.load %arg4[%c1_239, %c0_240, %c0_241] : memref<9x8x8xbf16, #tpu.memory_space<vmem>>, vector<1x8x8xbf16>
    %203 = vector.shape_cast %202 : vector<1x8x8xbf16> to vector<8x8xbf16>
    %cst_242 = arith.constant dense<0.000000e+00> : vector<8x384xf32>
    %204 = tpu.matmul %203, %200, %cst_242 {dimension_numbers = #tpu.dot_dimension_numbers<[1], [0], [0], [1], [0, 0, 1, 1], [], []>} : vector<8x8xbf16>, vector<8x384xbf16>, vector<8x384xf32> -> vector<8x384xf32>
    %205 = arith.addf %201, %204 : vector<8x384xf32>
    %c16_243 = arith.constant 16 : index
    %c0_244 = arith.constant 0 : index
    %206 = vector.load %arg9[%c16_243, %c0_244] : memref<24x384xf32, #tpu.memory_space<vmem>>, vector<8x384xf32>
    tpu.vector_store %arg9[%c16_243, %c0_244], %205 {strides = array<i32>} : memref<24x384xf32, #tpu.memory_space<vmem>>, vector<8x384xf32>,
    %c0_245 = arith.constant 0 : index
    %c2_246 = arith.constant 2 : index
    %207 = vector.load %arg8[%c0_245, %c2_246] : memref<8x512xf32, #tpu.memory_space<vmem>>, vector<8x384xf32>
    %208 = arith.truncf %207 : vector<8x384xf32> to vector<8x384xbf16>
    %c16_247 = arith.constant 16 : index
    %c0_248 = arith.constant 0 : index
    %209 = vector.load %arg9[%c16_247, %c0_248] : memref<24x384xf32, #tpu.memory_space<vmem>>, vector<8x384xf32>
    %c2_249 = arith.constant 2 : index
    %c0_250 = arith.constant 0 : index
    %c0_251 = arith.constant 0 : index
    %210 = vector.load %arg4[%c2_249, %c0_250, %c0_251] : memref<9x8x8xbf16, #tpu.memory_space<vmem>>, vector<1x8x8xbf16>
    %211 = vector.shape_cast %210 : vector<1x8x8xbf16> to vector<8x8xbf16>
    %cst_252 = arith.constant dense<0.000000e+00> : vector<8x384xf32>
    %212 = tpu.matmul %211, %208, %cst_252 {dimension_numbers = #tpu.dot_dimension_numbers<[1], [0], [0], [1], [0, 0, 1, 1], [], []>} : vector<8x8xbf16>, vector<8x384xbf16>, vector<8x384xf32> -> vector<8x384xf32>
    %213 = arith.addf %209, %212 : vector<8x384xf32>
    %c16_253 = arith.constant 16 : index
    %c0_254 = arith.constant 0 : index
    %214 = vector.load %arg9[%c16_253, %c0_254] : memref<24x384xf32, #tpu.memory_space<vmem>>, vector<8x384xf32>
    tpu.vector_store %arg9[%c16_253, %c0_254], %213 {strides = array<i32>} : memref<24x384xf32, #tpu.memory_space<vmem>>, vector<8x384xf32>,
    %c0_255 = arith.constant 0 : index
    %c18_256 = arith.constant 18 : index
    %215 = vector.load %arg8[%c0_255, %c18_256] : memref<8x512xf32, #tpu.memory_space<vmem>>, vector<8x384xf32>
    %216 = arith.truncf %215 : vector<8x384xf32> to vector<8x384xbf16>
    %c16_257 = arith.constant 16 : index
    %c0_258 = arith.constant 0 : index
    %217 = vector.load %arg9[%c16_257, %c0_258] : memref<24x384xf32, #tpu.memory_space<vmem>>, vector<8x384xf32>
    %c3_259 = arith.constant 3 : index
    %c0_260 = arith.constant 0 : index
    %c0_261 = arith.constant 0 : index
    %218 = vector.load %arg4[%c3_259, %c0_260, %c0_261] : memref<9x8x8xbf16, #tpu.memory_space<vmem>>, vector<1x8x8xbf16>
    %219 = vector.shape_cast %218 : vector<1x8x8xbf16> to vector<8x8xbf16>
    %cst_262 = arith.constant dense<0.000000e+00> : vector<8x384xf32>
    %220 = tpu.matmul %219, %216, %cst_262 {dimension_numbers = #tpu.dot_dimension_numbers<[1], [0], [0], [1], [0, 0, 1, 1], [], []>} : vector<8x8xbf16>, vector<8x384xbf16>, vector<8x384xf32> -> vector<8x384xf32>
    %221 = arith.addf %217, %220 : vector<8x384xf32>
    %c16_263 = arith.constant 16 : index
    %c0_264 = arith.constant 0 : index
    %222 = vector.load %arg9[%c16_263, %c0_264] : memref<24x384xf32, #tpu.memory_space<vmem>>, vector<8x384xf32>
    tpu.vector_store %arg9[%c16_263, %c0_264], %221 {strides = array<i32>} : memref<24x384xf32, #tpu.memory_space<vmem>>, vector<8x384xf32>,
    %c0_265 = arith.constant 0 : index
    %c19_266 = arith.constant 19 : index
    %223 = vector.load %arg8[%c0_265, %c19_266] : memref<8x512xf32, #tpu.memory_space<vmem>>, vector<8x384xf32>
    %224 = arith.truncf %223 : vector<8x384xf32> to vector<8x384xbf16>
    %c16_267 = arith.constant 16 : index
    %c0_268 = arith.constant 0 : index
    %225 = vector.load %arg9[%c16_267, %c0_268] : memref<24x384xf32, #tpu.memory_space<vmem>>, vector<8x384xf32>
    %c4_269 = arith.constant 4 : index
    %c0_270 = arith.constant 0 : index
    %c0_271 = arith.constant 0 : index
    %226 = vector.load %arg4[%c4_269, %c0_270, %c0_271] : memref<9x8x8xbf16, #tpu.memory_space<vmem>>, vector<1x8x8xbf16>
    %227 = vector.shape_cast %226 : vector<1x8x8xbf16> to vector<8x8xbf16>
    %cst_272 = arith.constant dense<0.000000e+00> : vector<8x384xf32>
    %228 = tpu.matmul %227, %224, %cst_272 {dimension_numbers = #tpu.dot_dimension_numbers<[1], [0], [0], [1], [0, 0, 1, 1], [], []>} : vector<8x8xbf16>, vector<8x384xbf16>, vector<8x384xf32> -> vector<8x384xf32>
    %229 = arith.addf %225, %228 : vector<8x384xf32>
    %c16_273 = arith.constant 16 : index
    %c0_274 = arith.constant 0 : index
    %230 = vector.load %arg9[%c16_273, %c0_274] : memref<24x384xf32, #tpu.memory_space<vmem>>, vector<8x384xf32>
    tpu.vector_store %arg9[%c16_273, %c0_274], %229 {strides = array<i32>} : memref<24x384xf32, #tpu.memory_space<vmem>>, vector<8x384xf32>,
    %c0_275 = arith.constant 0 : index
    %c20_276 = arith.constant 20 : index
    %231 = vector.load %arg8[%c0_275, %c20_276] : memref<8x512xf32, #tpu.memory_space<vmem>>, vector<8x384xf32>
    %232 = arith.truncf %231 : vector<8x384xf32> to vector<8x384xbf16>
    %c16_277 = arith.constant 16 : index
    %c0_278 = arith.constant 0 : index
    %233 = vector.load %arg9[%c16_277, %c0_278] : memref<24x384xf32, #tpu.memory_space<vmem>>, vector<8x384xf32>
    %c5_279 = arith.constant 5 : index
    %c0_280 = arith.constant 0 : index
    %c0_281 = arith.constant 0 : index
    %234 = vector.load %arg4[%c5_279, %c0_280, %c0_281] : memref<9x8x8xbf16, #tpu.memory_space<vmem>>, vector<1x8x8xbf16>
    %235 = vector.shape_cast %234 : vector<1x8x8xbf16> to vector<8x8xbf16>
    %cst_282 = arith.constant dense<0.000000e+00> : vector<8x384xf32>
    %236 = tpu.matmul %235, %232, %cst_282 {dimension_numbers = #tpu.dot_dimension_numbers<[1], [0], [0], [1], [0, 0, 1, 1], [], []>} : vector<8x8xbf16>, vector<8x384xbf16>, vector<8x384xf32> -> vector<8x384xf32>
    %237 = arith.addf %233, %236 : vector<8x384xf32>
    %c16_283 = arith.constant 16 : index
    %c0_284 = arith.constant 0 : index
    %238 = vector.load %arg9[%c16_283, %c0_284] : memref<24x384xf32, #tpu.memory_space<vmem>>, vector<8x384xf32>
    tpu.vector_store %arg9[%c16_283, %c0_284], %237 {strides = array<i32>} : memref<24x384xf32, #tpu.memory_space<vmem>>, vector<8x384xf32>,
    %c0_285 = arith.constant 0 : index
    %c36_286 = arith.constant 36 : index
    %239 = vector.load %arg8[%c0_285, %c36_286] : memref<8x512xf32, #tpu.memory_space<vmem>>, vector<8x384xf32>
    %240 = arith.truncf %239 : vector<8x384xf32> to vector<8x384xbf16>
    %c16_287 = arith.constant 16 : index
    %c0_288 = arith.constant 0 : index
    %241 = vector.load %arg9[%c16_287, %c0_288] : memref<24x384xf32, #tpu.memory_space<vmem>>, vector<8x384xf32>
    %c6_289 = arith.constant 6 : index
    %c0_290 = arith.constant 0 : index
    %c0_291 = arith.constant 0 : index
    %242 = vector.load %arg4[%c6_289, %c0_290, %c0_291] : memref<9x8x8xbf16, #tpu.memory_space<vmem>>, vector<1x8x8xbf16>
    %243 = vector.shape_cast %242 : vector<1x8x8xbf16> to vector<8x8xbf16>
    %cst_292 = arith.constant dense<0.000000e+00> : vector<8x384xf32>
    %244 = tpu.matmul %243, %240, %cst_292 {dimension_numbers = #tpu.dot_dimension_numbers<[1], [0], [0], [1], [0, 0, 1, 1], [], []>} : vector<8x8xbf16>, vector<8x384xbf16>, vector<8x384xf32> -> vector<8x384xf32>
    %245 = arith.addf %241, %244 : vector<8x384xf32>
    %c16_293 = arith.constant 16 : index
    %c0_294 = arith.constant 0 : index
    %246 = vector.load %arg9[%c16_293, %c0_294] : memref<24x384xf32, #tpu.memory_space<vmem>>, vector<8x384xf32>
    tpu.vector_store %arg9[%c16_293, %c0_294], %245 {strides = array<i32>} : memref<24x384xf32, #tpu.memory_space<vmem>>, vector<8x384xf32>,
    %c0_295 = arith.constant 0 : index
    %c37_296 = arith.constant 37 : index
    %247 = vector.load %arg8[%c0_295, %c37_296] : memref<8x512xf32, #tpu.memory_space<vmem>>, vector<8x384xf32>
    %248 = arith.truncf %247 : vector<8x384xf32> to vector<8x384xbf16>
    %c16_297 = arith.constant 16 : index
    %c0_298 = arith.constant 0 : index
    %249 = vector.load %arg9[%c16_297, %c0_298] : memref<24x384xf32, #tpu.memory_space<vmem>>, vector<8x384xf32>
    %c7_299 = arith.constant 7 : index
    %c0_300 = arith.constant 0 : index
    %c0_301 = arith.constant 0 : index
    %250 = vector.load %arg4[%c7_299, %c0_300, %c0_301] : memref<9x8x8xbf16, #tpu.memory_space<vmem>>, vector<1x8x8xbf16>
    %251 = vector.shape_cast %250 : vector<1x8x8xbf16> to vector<8x8xbf16>
    %cst_302 = arith.constant dense<0.000000e+00> : vector<8x384xf32>
    %252 = tpu.matmul %251, %248, %cst_302 {dimension_numbers = #tpu.dot_dimension_numbers<[1], [0], [0], [1], [0, 0, 1, 1], [], []>} : vector<8x8xbf16>, vector<8x384xbf16>, vector<8x384xf32> -> vector<8x384xf32>
    %253 = arith.addf %249, %252 : vector<8x384xf32>
    %c16_303 = arith.constant 16 : index
    %c0_304 = arith.constant 0 : index
    %254 = vector.load %arg9[%c16_303, %c0_304] : memref<24x384xf32, #tpu.memory_space<vmem>>, vector<8x384xf32>
    tpu.vector_store %arg9[%c16_303, %c0_304], %253 {strides = array<i32>} : memref<24x384xf32, #tpu.memory_space<vmem>>, vector<8x384xf32>,
    %c0_305 = arith.constant 0 : index
    %c38_306 = arith.constant 38 : index
    %255 = vector.load %arg8[%c0_305, %c38_306] : memref<8x512xf32, #tpu.memory_space<vmem>>, vector<8x384xf32>
    %256 = arith.truncf %255 : vector<8x384xf32> to vector<8x384xbf16>
    %c16_307 = arith.constant 16 : index
    %c0_308 = arith.constant 0 : index
    %257 = vector.load %arg9[%c16_307, %c0_308] : memref<24x384xf32, #tpu.memory_space<vmem>>, vector<8x384xf32>
    %c8_309 = arith.constant 8 : index
    %c0_310 = arith.constant 0 : index
    %c0_311 = arith.constant 0 : index
    %258 = vector.load %arg4[%c8_309, %c0_310, %c0_311] : memref<9x8x8xbf16, #tpu.memory_space<vmem>>, vector<1x8x8xbf16>
    %259 = vector.shape_cast %258 : vector<1x8x8xbf16> to vector<8x8xbf16>
    %cst_312 = arith.constant dense<0.000000e+00> : vector<8x384xf32>
    %260 = tpu.matmul %259, %256, %cst_312 {dimension_numbers = #tpu.dot_dimension_numbers<[1], [0], [0], [1], [0, 0, 1, 1], [], []>} : vector<8x8xbf16>, vector<8x384xbf16>, vector<8x384xf32> -> vector<8x384xf32>
    %261 = arith.addf %257, %260 : vector<8x384xf32>
    %c16_313 = arith.constant 16 : index
    %c0_314 = arith.constant 0 : index
    %262 = vector.load %arg9[%c16_313, %c0_314] : memref<24x384xf32, #tpu.memory_space<vmem>>, vector<8x384xf32>
    tpu.vector_store %arg9[%c16_313, %c0_314], %261 {strides = array<i32>} : memref<24x384xf32, #tpu.memory_space<vmem>>, vector<8x384xf32>,
    %c16_315 = arith.constant 16 : index
    %c0_316 = arith.constant 0 : index
    %263 = vector.load %arg9[%c16_315, %c0_316] : memref<24x384xf32, #tpu.memory_space<vmem>>, vector<8x384xf32>
    %264 = math.tanh %263 : vector<8x384xf32>
    %cst_317 = arith.constant 1.000000e+00 : f32
    %265 = vector.broadcast %cst_317 : f32 to vector<8x384xf32>
    %266 = arith.subf %265, %181 : vector<8x384xf32>
    %267 = arith.mulf %188, %266 : vector<8x384xf32>
    %268 = arith.mulf %264, %181 : vector<8x384xf32>
    %269 = arith.addf %267, %268 : vector<8x384xf32>
    %c0_318 = arith.constant 0 : index
    %c0_319 = arith.constant 0 : index
    %c0_320 = arith.constant 0 : index
    %270 = vector.load %arg6[%c0_318, %c0_319, %c0_320] : memref<1x8x384xf32, #tpu.memory_space<vmem>>, vector<1x8x384xf32>
    %271 = vector.shape_cast %270 : vector<1x8x384xf32> to vector<8x384xf32>
    %272 = vector.shape_cast %269 : vector<8x384xf32> to vector<1x8x384xf32>
    tpu.vector_store %arg6[%c0_318, %c0_319, %c0_320], %272 {strides = array<i32>} : memref<1x8x384xf32, #tpu.memory_space<vmem>>, vector<1x8x384xf32>,
    return
  }
  func.func @transform_0(%arg0: i32) -> (i32, i32, i32) {
    %c0_i32 = arith.constant 0 : i32
    %c0_i32_0 = arith.constant 0 : i32
    %c0_i32_1 = arith.constant 0 : i32
    return %arg0, %c0_i32, %c0_i32_0 : i32, i32, i32
  }
  func.func @transform_1(%arg0: i32) -> (i32, i32, i32) {
    %c0_i32 = arith.constant 0 : i32
    %c0_i32_0 = arith.constant 0 : i32
    %c0_i32_1 = arith.constant 0 : i32
    return %arg0, %c0_i32, %c0_i32_0 : i32, i32, i32
  }
  func.func @transform_2(%arg0: i32) -> (i32, i32, i32) {
    %c0_i32 = arith.constant 0 : i32
    %c0_i32_0 = arith.constant 0 : i32
    %c0_i32_1 = arith.constant 0 : i32
    %c0_i32_2 = arith.constant 0 : i32
    return %c0_i32, %c0_i32_0, %c0_i32_1 : i32, i32, i32
  }
  func.func @transform_3(%arg0: i32) -> (i32, i32, i32) {
    %c0_i32 = arith.constant 0 : i32
    %c0_i32_0 = arith.constant 0 : i32
    %c0_i32_1 = arith.constant 0 : i32
    %c0_i32_2 = arith.constant 0 : i32
    return %c0_i32, %c0_i32_0, %c0_i32_1 : i32, i32, i32
  }
  func.func @transform_4(%arg0: i32) -> (i32, i32) {
    %c0_i32 = arith.constant 0 : i32
    %c0_i32_0 = arith.constant 0 : i32
    %c0_i32_1 = arith.constant 0 : i32
    return %c0_i32, %c0_i32_0 : i32, i32
  }
  func.func @transform_5(%arg0: i32) -> (i32, i32, i32) {
    %c0_i32 = arith.constant 0 : i32
    %c0_i32_0 = arith.constant 0 : i32
    %c0_i32_1 = arith.constant 0 : i32
    return %arg0, %c0_i32, %c0_i32_0 : i32, i32, i32
  }
}

</mosaic_0001>

<llo_original>
// kernel: convgru_forward.1
$region0: #{convgru_forward.1}
  #allocation0 [shape = 'u32[]', space=smem, size = 0x4, offset = 0x4, fixed_abs, tag = 'smem constant byte address 0x4 - core index']
  #allocation1 [shape = 'u32[144,128]{1,0:T(1,128)}', space=vmem, size = 0x12000, scoped, tag = 'internal scratch']
  #allocation2 [shape = 'f32[12,512]{1,0:T(8,128)}', space=vmem, size = 0x8000, scoped, tag = 'scratch operand']
  #allocation3 [shape = 'f32[8,512]{1,0:T(8,128)}', space=vmem, size = 0x4000, scoped, tag = 'scratch operand']
  #allocation4 [shape = 'f32[24,384]{1,0:T(8,128)}', space=vmem, size = 0x9000, scoped, tag = 'scratch operand']
  %s0 = inlined_call_operand.vmem [shape: f32[2,4,256], index: 0, kind: input, shape index: {}]
  %s1 = inlined_call_operand.vmem [shape: f32[2,8,256], index: 1, kind: input, shape index: {}]
  %s2 = inlined_call_operand.vmem [shape: bf16[9,24,12], index: 2, kind: input, shape index: {}]
  %s3 = inlined_call_operand.vmem [shape: bf16[9,8,8], index: 3, kind: input, shape index: {}]
  %s4 = inlined_call_operand.vmem [shape: f32[24,1], index: 4, kind: input, shape index: {}]
  %s5 = inlined_call_operand.vmem [shape: f32[2,8,384], index: 5, kind: output, shape index: {}]
  %s6 = sld [smem:[#allocation0]]
  $region53: #{convgru_forward.1} parent=0
    _
  %s8 = ssub.s32 1, %s6
  %s9 = scalar_select 0, %s8, %s6
  loop: start=0, step=1, limit=4
  $region2: #{convgru_forward.1} parent=0 // loop_pre_header
    _
  $region3: #{convgru_forward.1} parent=0 // loop_header
    %s11 = sphi 0, %s15
    %p12 = scmp.ge.s32.totalorder %s11, 4
    %s21 = sphi 0, %s23
    %s24 = sphi 0, %s21
    %s25 = sphi 0, %s24
    %s41 = sphi 0, %s25
    %s47 = sphi 0, %s49
    %s50 = sphi 0, %s47
    %s51 = sphi 0, %s50
    %s67 = sphi 0, %s51
    %s71 = sphi 0, %s71
    %s73 = sphi 0, %s71
    %s74 = sphi 0, %s73
    %s88 = sphi 0, %s74
    %s92 = sphi 0, %s92
    %s94 = sphi 0, %s92
    %s95 = sphi 0, %s94
    %s109 = sphi 0, %s95
    %s113 = sphi 0, %s113
    %s115 = sphi 0, %s113
    %s116 = sphi 0, %s115
    %s130 = sphi 0, %s116
    %s136 = sphi 0, %s138
    %s139 = sphi 0, %s136
    %s140 = sphi 0, %s139
    %s156 = sphi 0, %s140
  $region4: #{convgru_forward.1} parent=0 // loop_header_branch
    %14 = sbr.rel (%p12) target = $region8
  $region5: #{convgru_forward.1} parent=0 // loop_body
    %s16 = ssub.s32 %s11, 1
    %s17 = ssub.s32 %s11, 2
    %s18 = sadd.s32 %s11, 1
    %s19 = ssub.s32 %s11, %s18
    %p20 = scmp.eq.s32.totalorder %s19, 0
    %s22 = sadd.s32 %s21, 1
    %s23 = scalar_select %p20, %s21, %s22
    %p26 = pneg %p20
    %p27 = scmp.eq.s32.totalorder %s11, 1
    %p28 = por %p26, %p27
    %p29 = scmp.ne.s32.totalorder %s21, %s24
    %p30 = scmp.eq.s32.totalorder %s11, 0
    %p31 = por %p29, %p30
    %p32 = scmp.ne.s32.totalorder %s21, %s24
    %p33 = scmp.eq.s32.totalorder %s16, 1
    %p34 = por %p32, %p33
    %p35 = scmp.ne.s32.totalorder %s24, %s25
    %p36 = scmp.eq.s32.totalorder %s16, 0
    %p37 = por %p35, %p36
    %p38 = scmp.ne.s32.totalorder %s24, %s25
    %p39 = scmp.eq.s32.totalorder %s17, 1
    %p40 = por %p38, %p39
    %p42 = scmp.ne.s32.totalorder %s25, %s41
    %p43 = scmp.eq.s32.totalorder %s17, 0
    %p44 = por %p42, %p43
    %s45 = ssub.s32 %s11, %s18
    %p46 = scmp.eq.s32.totalorder %s45, 0
    %s48 = sadd.s32 %s47, 1
    %s49 = scalar_select %p46, %s47, %s48
    %p52 = pneg %p46
    %p53 = scmp.eq.s32.totalorder %s11, 1
    %p54 = por %p52, %p53
    %p55 = scmp.ne.s32.totalorder %s47, %s50
    %p56 = scmp.eq.s32.totalorder %s11, 0
    %p57 = por %p55, %p56
    %p58 = scmp.ne.s32.totalorder %s47, %s50
    %p59 = scmp.eq.s32.totalorder %s16, 1
    %p60 = por %p58, %p59
    %p61 = scmp.ne.s32.totalorder %s50, %s51
    %p62 = scmp.eq.s32.totalorder %s16, 0
    %p63 = por %p61, %p62
    %p64 = scmp.ne.s32.totalorder %s50, %s51
    %p65 = scmp.eq.s32.totalorder %s17, 1
    %p66 = por %p64, %p65
    %p68 = scmp.ne.s32.totalorder %s51, %s67
    %p69 = scmp.eq.s32.totalorder %s17, 0
    %p70 = por %p68, %p69
    %s72 = sadd.s32 %s71, 1
    %p75 = scmp.eq.s32.totalorder %s11, 1
    %p76 = scmp.ne.s32.totalorder %s71, %s73
    %p77 = scmp.eq.s32.totalorder %s11, 0
    %p78 = por %p76, %p77
    %p79 = scmp.ne.s32.totalorder %s71, %s73
    %p80 = scmp.eq.s32.totalorder %s16, 1
    %p81 = por %p79, %p80
    %p82 = scmp.ne.s32.totalorder %s73, %s74
    %p83 = scmp.eq.s32.totalorder %s16, 0
    %p84 = por %p82, %p83
    %p85 = scmp.ne.s32.totalorder %s73, %s74
    %p86 = scmp.eq.s32.totalorder %s17, 1
    %p87 = por %p85, %p86
    %p89 = scmp.ne.s32.totalorder %s74, %s88
    %p90 = scmp.eq.s32.totalorder %s17, 0
    %p91 = por %p89, %p90
    %s93 = sadd.s32 %s92, 1
    %p96 = scmp.eq.s32.totalorder %s11, 1
    %p97 = scmp.ne.s32.totalorder %s92, %s94
    %p98 = scmp.eq.s32.totalorder %s11, 0
    %p99 = por %p97, %p98
    %p100 = scmp.ne.s32.totalorder %s92, %s94
    %p101 = scmp.eq.s32.totalorder %s16, 1
    %p102 = por %p100, %p101
    %p103 = scmp.ne.s32.totalorder %s94, %s95
    %p104 = scmp.eq.s32.totalorder %s16, 0
    %p105 = por %p103, %p104
    %p106 = scmp.ne.s32.totalorder %s94, %s95
    %p107 = scmp.eq.s32.totalorder %s17, 1
    %p108 = por %p106, %p107
    %p110 = scmp.ne.s32.totalorder %s95, %s109
    %p111 = scmp.eq.s32.totalorder %s17, 0
    %p112 = por %p110, %p111
    %s114 = sadd.s32 %s113, 1
    %p117 = scmp.eq.s32.totalorder %s11, 1
    %p118 = scmp.ne.s32.totalorder %s113, %s115
    %p119 = scmp.eq.s32.totalorder %s11, 0
    %p120 = por %p118, %p119
    %p121 = scmp.ne.s32.totalorder %s113, %s115
    %p122 = scmp.eq.s32.totalorder %s16, 1
    %p123 = por %p121, %p122
    %p124 = scmp.ne.s32.totalorder %s115, %s116
    %p125 = scmp.eq.s32.totalorder %s16, 0
    %p126 = por %p124, %p125
    %p127 = scmp.ne.s32.totalorder %s115, %s116
    %p128 = scmp.eq.s32.totalorder %s17, 1
    %p129 = por %p127, %p128
    %p131 = scmp.ne.s32.totalorder %s116, %s130
    %p132 = scmp.eq.s32.totalorder %s17, 0
    %p133 = por %p131, %p132
    %s134 = ssub.s32 %s11, %s18
    %p135 = scmp.eq.s32.totalorder %s134, 0
    %s137 = sadd.s32 %s136, 1
    %s138 = scalar_select %p135, %s136, %s137
    %p141 = pneg %p135
    %p142 = scmp.eq.s32.totalorder %s11, 1
    %p143 = por %p141, %p142
    %p144 = scmp.ne.s32.totalorder %s136, %s139
    %p145 = scmp.eq.s32.totalorder %s11, 0
    %p146 = por %p144, %p145
    %p147 = scmp.ne.s32.totalorder %s136, %s139
    %p148 = scmp.eq.s32.totalorder %s16, 1
    %p149 = por %p147, %p148
    %p150 = scmp.ne.s32.totalorder %s139, %s140
    %p151 = scmp.eq.s32.totalorder %s16, 0
    %p152 = por %p150, %p151
    %p153 = scmp.ne.s32.totalorder %s139, %s140
    %p154 = scmp.eq.s32.totalorder %s17, 1
    %p155 = por %p153, %p154
    %p157 = scmp.ne.s32.totalorder %s140, %s156
    %p158 = scmp.eq.s32.totalorder %s17, 0
    %p159 = por %p157, %p158
    %p160 = scmp.le.s32.totalorder 1, %s11
    %p161 = scmp.lt.s32.totalorder %s11, 3
    %p162 = pnand %p160, %p161
    %p163 = pneg %p162
    // Predicated region
    $region9: #{convgru_forward.1} parent=5 // pred_check
      _
    $region10: #{convgru_forward.1} parent=5 // pred_check_branch
      %165 = sbr.rel (%p162) target = $region12
    $region11: #{convgru_forward.1} parent=5 // pred_region
      %s166 = ssub.s32 %s11, 1
      // Predicated region
      $region13: #{convgru_forward.1} parent=11 // pred_check
        %p167 = pneg %p84
      $region14: #{convgru_forward.1} parent=11 // pred_check_branch
        %169 = sbr.rel (%p167) target = $region16
      $region15: #{convgru_forward.1} parent=11 // pred_region
        _
      $region16: #{convgru_forward.1} parent=11 // pred_fallthru
        _
      // Predicated region
      $region17: #{convgru_forward.1} parent=11 // pred_check
        %p170 = pneg %p105
      $region18: #{convgru_forward.1} parent=11 // pred_check_branch
        %172 = sbr.rel (%p170) target = $region20
      $region19: #{convgru_forward.1} parent=11 // pred_region
        _
      $region20: #{convgru_forward.1} parent=11 // pred_fallthru
        _
      // Predicated region
      $region21: #{convgru_forward.1} parent=11 // pred_check
        %p173 = pneg %p126
      $region22: #{convgru_forward.1} parent=11 // pred_check_branch
        %175 = sbr.rel (%p173) target = $region24
      $region23: #{convgru_forward.1} parent=11 // pred_region
        _
      $region24: #{convgru_forward.1} parent=11 // pred_fallthru
        _
    $region12: #{convgru_forward.1} parent=5 // pred_fallthru
      _
    %p176 = scmp.lt.s32.totalorder %s11, 2
    // Predicated region
    $region25: #{convgru_forward.1} parent=5 // pred_check
      %p177 = pneg %p176
    $region26: #{convgru_forward.1} parent=5 // pred_check_branch
      %179 = sbr.rel (%p177) target = $region28
    $region27: #{convgru_forward.1} parent=5 // pred_region
      // Predicated region
      $region29: #{convgru_forward.1} parent=27 // pred_check
        %p180 = pneg %p31
      $region30: #{convgru_forward.1} parent=27 // pred_check_branch
        %182 = sbr.rel (%p180) target = $region32
      $region31: #{convgru_forward.1} parent=27 // pred_region
        %p183 = scmp.lt.s32.totalorder %s11, 1
        %s184 = scalar_select %p183, %s11, 1
        %s185 = smul.addr %s184, 2
        %s186 = smul.addr %s185, 4
        %s187 = scalar_lea.vmem %s0, %s186
      $region32: #{convgru_forward.1} parent=27 // pred_fallthru
        _
      // Predicated region
      $region33: #{convgru_forward.1} parent=27 // pred_check
        %p188 = pneg %p57
      $region34: #{convgru_forward.1} parent=27 // pred_check_branch
        %190 = sbr.rel (%p188) target = $region36
      $region35: #{convgru_forward.1} parent=27 // pred_region
        %p191 = scmp.lt.s32.totalorder %s11, 1
        %s192 = scalar_select %p191, %s11, 1
        %s193 = smul.addr %s192, 2
        %s194 = smul.addr %s193, 8
        %s195 = scalar_lea.vmem %s1, %s194
      $region36: #{convgru_forward.1} parent=27 // pred_fallthru
        _
    $region28: #{convgru_forward.1} parent=5 // pred_fallthru
      _
    %p196 = scmp.le.s32.totalorder 1, %s11
    %p197 = scmp.lt.s32.totalorder %s11, 3
    %p198 = pnand %p196, %p197
    %p199 = pneg %p198
    // Predicated region
    $region37: #{convgru_forward.1} parent=5 // pred_check
      _
    $region38: #{convgru_forward.1} parent=5 // pred_check_branch
      %201 = sbr.rel (%p198) target = $region40
    $region39: #{convgru_forward.1} parent=5 // pred_region
      %s202 = ssub.s32 %s11, 1
      %p203 = scmp.lt.s32.totalorder %s16, 1
      %s204 = scalar_select %p203, %s16, 1
      %s205 = smul.addr %s204, 2
      %s206 = smul.addr %s205, 4
      %s207 = scalar_lea.vmem %s0, %s206
      %p208 = pneg %p37
      %p209 = pneg %p34
      %p210 = scmp.lt.s32.totalorder %s16, 1
      %s211 = scalar_select %p210, %s16, 1
      %s212 = smul.addr %s211, 2
      %s213 = smul.addr %s212, 8
      %s214 = scalar_lea.vmem %s1, %s213
      %p215 = pneg %p63
      %p216 = pneg %p60
      %p217 = pneg %p84
      %p218 = pneg %p81
      %p219 = pneg %p105
      %p220 = pneg %p102
      %p221 = pneg %p126
      %p222 = pneg %p123
      %p223 = pneg %p152
      %p224 = pneg %p149
      %p225 = scmp.lt.s32.totalorder %s16, 1
      %s226 = scalar_select %p225, %s16, 1
      %s227 = smul.addr %s226, 3
      %s228 = smul.addr %s227, 8
      %s229 = scalar_lea.vmem %s5, %s228
      %p230 = scmp.lt.s32.totalorder %s16, 1
      %s231 = scalar_select %p230, %s16, 1
      %s232 = smul.addr %s231, 2
      %s233 = smul.addr %s232, 4
      %s234 = scalar_lea.vmem %s0, %s233
      %p235 = scmp.lt.s32.totalorder %s16, 1
      %s236 = scalar_select %p235, %s16, 1
      %s237 = smul.addr %s236, 2
      %s238 = smul.addr %s237, 8
      %s239 = scalar_lea.vmem %s1, %s238
      %p240 = scmp.lt.s32.totalorder %s16, 1
      %s241 = scalar_select %p240, %s16, 1
      %s242 = smul.addr %s241, 3
      %s243 = smul.addr %s242, 8
      %s244 = scalar_lea.vmem %s5, %s243
      %246 = vst [vmem:[#allocation2] sm:$0xff] 0.0
      %247 = vst [vmem:[#allocation2 + $0x8] sm:$0xff] 0.0
      %248 = vst [vmem:[#allocation2 + $0x10] sm:$0xff] 0.0
      %249 = vst [vmem:[#allocation2 + $0x18] sm:$0xff] 0.0
      %250 = vst [vmem:[#allocation2 + $0x20] sm:$0xf] 0.0
      %251 = vst [vmem:[#allocation2 + $0x28] sm:$0xf] 0.0
      %252 = vst [vmem:[#allocation2 + $0x30] sm:$0xf] 0.0
      %253 = vst [vmem:[#allocation2 + $0x38] sm:$0xf] 0.0
      %254 = vst [vmem:[#allocation3] sm:$0xff] 0.0
      %255 = vst [vmem:[#allocation3 + $0x8] sm:$0xff] 0.0
      %256 = vst [vmem:[#allocation3 + $0x10] sm:$0xff] 0.0
      %257 = vst [vmem:[#allocation3 + $0x18] sm:$0xff] 0.0
      %v258 = vld [vmem:[%s234] sm:$0xf]
      %260 = vrot.lane.b32.xlu0 %v258, 38
      %v261 = vpop.permute.xlu0 %260
      %vm263 = vcmask 437552
      %264 = vst.msk [vmem:[#allocation2] sm:$0xf] %vm263, %v261
      %v265 = vld [vmem:[%s239] sm:$0xff]
      %v267 = vrot.slane %v265, 4
      %268 = vrot.lane.b32.xlu0 %v267, 38
      %v269 = vpop.permute.xlu0 %268
      %vm271 = vcmask 441652
      %272 = vst.msk [vmem:[#allocation2] sm:$0xf0] %vm271, %v269
      %273 = vst.msk [vmem:[#allocation2 + $0x20] sm:$0xf] %vm263, %v269
      %v274 = vld [vmem:[%s234] sm:$0xf]
      %276 = vrot.lane.b32.xlu0 %v274, 40
      %v277 = vpop.permute.xlu0 %276
      %vm279 = vcmask 585152
      %280 = vst.msk [vmem:[#allocation2] sm:$0xf] %vm279, %v277
      %v281 = vld [vmem:[%s239] sm:$0xff]
      %v283 = vrot.slane %v281, 4
      %284 = vrot.lane.b32.xlu0 %v283, 40
      %v285 = vpop.permute.xlu0 %284
      %vm287 = vcmask 589252
      %288 = vst.msk [vmem:[#allocation2] sm:$0xf0] %vm287, %v285
      %289 = vst.msk [vmem:[#allocation2 + $0x20] sm:$0xf] %vm279, %v285
      %v290 = vld [vmem:[%s234] sm:$0xf]
      %292 = vrot.lane.b32.xlu0 %v290, 42
      %v293 = vpop.permute.xlu0 %292
      %vm295 = vcmask 732752
      %296 = vst.msk [vmem:[#allocation2] sm:$0xf] %vm295, %v293
      %v297 = vld [vmem:[%s239] sm:$0xff]
      %v299 = vrot.slane %v297, 4
      %300 = vrot.lane.b32.xlu0 %v299, 42
      %v301 = vpop.permute.xlu0 %300
      %vm303 = vcmask 736852
      %304 = vst.msk [vmem:[#allocation2] sm:$0xf0] %vm303, %v301
      %305 = vst.msk [vmem:[#allocation2 + $0x20] sm:$0xf] %vm295, %v301
      %v306 = vld [vmem:[%s234] sm:$0xf]
      %308 = vrot.lane.b32.xlu0 %v306, 44
      %v309 = vpop.permute.xlu0 %308
      %vm311 = vcmask 880352
      %312 = vst.msk [vmem:[#allocation2] sm:$0xf] %vm311, %v309
      %v313 = vld [vmem:[%s239] sm:$0xff]
      %v315 = vrot.slane %v313, 4
      %316 = vrot.lane.b32.xlu0 %v315, 44
      %v317 = vpop.permute.xlu0 %316
      %vm319 = vcmask 884452
      %320 = vst.msk [vmem:[#allocation2] sm:$0xf0] %vm319, %v317
      %321 = vst.msk [vmem:[#allocation2 + $0x20] sm:$0xf] %vm311, %v317
      %v322 = vld [vmem:[%s234] sm:$0xf]
      %324 = vrot.lane.b32.xlu0 %v322, 46
      %v325 = vpop.permute.xlu0 %324
      %vm327 = vcmask 1027952
      %328 = vst.msk [vmem:[#allocation2] sm:$0xf] %vm327, %v325
      %v329 = vld [vmem:[%s239] sm:$0xff]
      %v331 = vrot.slane %v329, 4
      %332 = vrot.lane.b32.xlu0 %v331, 46
      %v333 = vpop.permute.xlu0 %332
      %vm335 = vcmask 1032052
      %336 = vst.msk [vmem:[#allocation2] sm:$0xf0] %vm335, %v333
      %337 = vst.msk [vmem:[#allocation2 + $0x20] sm:$0xf] %vm327, %v333
      %v338 = vld [vmem:[%s234] sm:$0xf]
      %340 = vrot.lane.b32.xlu0 %v338, 48
      %v341 = vpop.permute.xlu0 %340
      %vm343 = vcmask 125952
      %344 = vst.msk [vmem:[#allocation2 + $0x8] sm:$0xf] %vm343, %v341
      %v345 = vld [vmem:[%s239] sm:$0xff]
      %v347 = vrot.slane %v345, 4
      %348 = vrot.lane.b32.xlu0 %v347, 48
      %v349 = vpop.permute.xlu0 %348
      %vm351 = vcmask 130052
      %352 = vst.msk [vmem:[#allocation2 + $0x8] sm:$0xf0] %vm351, %v349
      %353 = vst.msk [vmem:[#allocation2 + $0x28] sm:$0xf] %vm343, %v349
      %v354 = vld [vmem:[%s234] sm:$0xf]
      %356 = vrot.lane.b32.xlu0 %v354, 50
      %v357 = vpop.permute.xlu0 %356
      %vm359 = vcmask 273552
      %360 = vst.msk [vmem:[#allocation2 + $0x8] sm:$0xf] %vm359, %v357
      %v361 = vld [vmem:[%s239] sm:$0xff]
      %v363 = vrot.slane %v361, 4
      %364 = vrot.lane.b32.xlu0 %v363, 50
      %v365 = vpop.permute.xlu0 %364
      %vm367 = vcmask 277652
      %368 = vst.msk [vmem:[#allocation2 + $0x8] sm:$0xf0] %vm367, %v365
      %369 = vst.msk [vmem:[#allocation2 + $0x28] sm:$0xf] %vm359, %v365
      %v370 = vld [vmem:[%s234] sm:$0xf]
      %372 = vrot.lane.b32.xlu0 %v370, 52
      %v373 = vpop.permute.xlu0 %372
      %vm375 = vcmask 421152
      %376 = vst.msk [vmem:[#allocation2 + $0x8] sm:$0xf] %vm375, %v373
      %v377 = vld [vmem:[%s239] sm:$0xff]
      %v379 = vrot.slane %v377, 4
      %380 = vrot.lane.b32.xlu0 %v379, 52
      %v381 = vpop.permute.xlu0 %380
      %vm383 = vcmask 425252
      %384 = vst.msk [vmem:[#allocation2 + $0x8] sm:$0xf0] %vm383, %v381
      %385 = vst.msk [vmem:[#allocation2 + $0x28] sm:$0xf] %vm375, %v381
      %v386 = vld [vmem:[%s234 + $0x4] sm:$0xf]
      %388 = vrot.lane.b32.xlu0 %v386, 54
      %v389 = vpop.permute.xlu0 %388
      %vm391 = vcmask 568752
      %392 = vst.msk [vmem:[#allocation2 + $0x8] sm:$0xf] %vm391, %v389
      %v393 = vld [vmem:[%s239 + $0x8] sm:$0xff]
      %v395 = vrot.slane %v393, 4
      %396 = vrot.lane.b32.xlu0 %v395, 54
      %v397 = vpop.permute.xlu0 %396
      %vm399 = vcmask 572852
      %400 = vst.msk [vmem:[#allocation2 + $0x8] sm:$0xf0] %vm399, %v397
      %401 = vst.msk [vmem:[#allocation2 + $0x28] sm:$0xf] %vm391, %v397
      %v402 = vld [vmem:[%s234 + $0x4] sm:$0xf]
      %404 = vrot.lane.b32.xlu0 %v402, 56
      %v405 = vpop.permute.xlu0 %404
      %vm407 = vcmask 716352
      %408 = vst.msk [vmem:[#allocation2 + $0x8] sm:$0xf] %vm407, %v405
      %v409 = vld [vmem:[%s239 + $0x8] sm:$0xff]
      %v411 = vrot.slane %v409, 4
      %412 = vrot.lane.b32.xlu0 %v411, 56
      %v413 = vpop.permute.xlu0 %412
      %vm415 = vcmask 720452
      %416 = vst.msk [vmem:[#allocation2 + $0x8] sm:$0xf0] %vm415, %v413
      %417 = vst.msk [vmem:[#allocation2 + $0x28] sm:$0xf] %vm407, %v413
      %v418 = vld [vmem:[%s234 + $0x4] sm:$0xf]
      %420 = vrot.lane.b32.xlu0 %v418, 58
      %v421 = vpop.permute.xlu0 %420
      %vm423 = vcmask 863952
      %424 = vst.msk [vmem:[#allocation2 + $0x8] sm:$0xf] %vm423, %v421
      %v425 = vld [vmem:[%s239 + $0x8] sm:$0xff]
      %v427 = vrot.slane %v425, 4
      %428 = vrot.lane.b32.xlu0 %v427, 58
      %v429 = vpop.permute.xlu0 %428
      %vm431 = vcmask 868052
      %432 = vst.msk [vmem:[#allocation2 + $0x8] sm:$0xf0] %vm431, %v429
      %433 = vst.msk [vmem:[#allocation2 + $0x28] sm:$0xf] %vm423, %v429
      %v434 = vld [vmem:[%s234 + $0x4] sm:$0xf]
      %436 = vrot.lane.b32.xlu0 %v434, 60
      %v437 = vpop.permute.xlu0 %436
      %vm439 = vcmask 1011552
      %440 = vst.msk [vmem:[#allocation2 + $0x8] sm:$0xf] %vm439, %v437
      %v441 = vld [vmem:[%s239 + $0x8] sm:$0xff]
      %v443 = vrot.slane %v441, 4
      %444 = vrot.lane.b32.xlu0 %v443, 60
      %v445 = vpop.permute.xlu0 %444
      %vm447 = vcmask 1015652
      %448 = vst.msk [vmem:[#allocation2 + $0x8] sm:$0xf0] %vm447, %v445
      %449 = vst.msk [vmem:[#allocation2 + $0x28] sm:$0xf] %vm439, %v445
      %v450 = vld [vmem:[%s234 + $0x4] sm:$0xf]
      %452 = vrot.lane.b32.xlu0 %v450, 62
      %v453 = vpop.permute.xlu0 %452
      %vm455 = vcmask 1044464
      %456 = vst.msk [vmem:[#allocation2 + $0x8] sm:$0xf] %vm455, %v453
      %vm457 = vcmask 109568
      %458 = vst.msk [vmem:[#allocation2 + $0x10] sm:$0xf] %vm457, %v453
      %v459 = vld [vmem:[%s239 + $0x8] sm:$0xff]
      %v461 = vrot.slane %v459, 4
      %462 = vrot.lane.b32.xlu0 %v461, 62
      %v463 = vpop.permute.xlu0 %462
      %vm465 = vcmask 1048564
      %466 = vst.msk [vmem:[#allocation2 + $0x8] sm:$0xf0] %vm465, %v463
      %vm467 = vcmask 113668
      %468 = vst.msk [vmem:[#allocation2 + $0x10] sm:$0xf0] %vm467, %v463
      %469 = vst.msk [vmem:[#allocation2 + $0x28] sm:$0xf] %vm455, %v463
      %470 = vst.msk [vmem:[#allocation2 + $0x30] sm:$0xf] %vm457, %v463
      %v471 = vld [vmem:[%s234 + $0x4] sm:$0xf]
      %473 = vrot.lane.b32.xlu0 %v471, 64
      %v474 = vpop.permute.xlu0 %473
      %vm476 = vcmask 257152
      %477 = vst.msk [vmem:[#allocation2 + $0x10] sm:$0xf] %vm476, %v474
      %v478 = vld [vmem:[%s239 + $0x8] sm:$0xff]
      %v480 = vrot.slane %v478, 4
      %481 = vrot.lane.b32.xlu0 %v480, 64
      %v482 = vpop.permute.xlu0 %481
      %vm484 = vcmask 261252
      %485 = vst.msk [vmem:[#allocation2 + $0x10] sm:$0xf0] %vm484, %v482
      %486 = vst.msk [vmem:[#allocation2 + $0x30] sm:$0xf] %vm476, %v482
      %v487 = vld [vmem:[%s234 + $0x4] sm:$0xf]
      %489 = vrot.lane.b32.xlu0 %v487, 66
      %v490 = vpop.permute.xlu0 %489
      %vm492 = vcmask 404752
      %493 = vst.msk [vmem:[#allocation2 + $0x10] sm:$0xf] %vm492, %v490
      %v494 = vld [vmem:[%s239 + $0x8] sm:$0xff]
      %v496 = vrot.slane %v494, 4
      %497 = vrot.lane.b32.xlu0 %v496, 66
      %v498 = vpop.permute.xlu0 %497
      %vm500 = vcmask 408852
      %501 = vst.msk [vmem:[#allocation2 + $0x10] sm:$0xf0] %vm500, %v498
      %502 = vst.msk [vmem:[#allocation2 + $0x30] sm:$0xf] %vm492, %v498
      %v503 = vld [vmem:[%s234 + $0x4] sm:$0xf]
      %505 = vrot.lane.b32.xlu0 %v503, 68
      %v506 = vpop.permute.xlu0 %505
      %vm508 = vcmask 552352
      %509 = vst.msk [vmem:[#allocation2 + $0x10] sm:$0xf] %vm508, %v506
      %v510 = vld [vmem:[%s239 + $0x8] sm:$0xff]
      %v512 = vrot.slane %v510, 4
      %513 = vrot.lane.b32.xlu0 %v512, 68
      %v514 = vpop.permute.xlu0 %513
      %vm516 = vcmask 556452
      %517 = vst.msk [vmem:[#allocation2 + $0x10] sm:$0xf0] %vm516, %v514
      %518 = vst.msk [vmem:[#allocation2 + $0x30] sm:$0xf] %vm508, %v514
      %v519 = vld [vmem:[%s4] sm:$0xff]
      %v520 = vld [vmem:[%s4 + $0x8] sm:$0xff]
      %v521 = vld [vmem:[%s4 + $0x10] sm:$0xff]
      %523 = vset.pattern.permute.xlu0 0
      %524 = vperm.xlu0 %523, %v519
      %v525 = vpop.permute.xlu0 %524
      %528 = vset.pattern.permute.xlu0 0
      %529 = vperm.xlu0 %528, %v520
      %v530 = vpop.permute.xlu0 %529
      %533 = vset.pattern.permute.xlu0 0
      %534 = vperm.xlu0 %533, %v521
      %v535 = vpop.permute.xlu0 %534
      %537 = vst [vmem:[#allocation4] sm:$0xff] %v525
      %538 = vst [vmem:[#allocation4 + $0x8] sm:$0xff] %v525
      %539 = vst [vmem:[#allocation4 + $0x10] sm:$0xff] %v525
      %540 = vst [vmem:[#allocation4 + $0x18] sm:$0xff] %v530
      %541 = vst [vmem:[#allocation4 + $0x20] sm:$0xff] %v530
      %542 = vst [vmem:[#allocation4 + $0x28] sm:$0xff] %v530
      %543 = vst [vmem:[#allocation4 + $0x30] sm:$0xff] %v535
      %544 = vst [vmem:[#allocation4 + $0x38] sm:$0xff] %v535
      %545 = vst [vmem:[#allocation4 + $0x40] sm:$0xff] %v535
      %v546 = vld [vmem:[#allocation2] sm:$0xff]
      %v547 = vld [vmem:[#allocation2 + $0x8] sm:$0xff]
      %v548 = vld [vmem:[#allocation2 + $0x10] sm:$0xff]
      %v549 = vld [vmem:[#allocation2 + $0x20] sm:$0xf]
      %v550 = vld [vmem:[#allocation2 + $0x28] sm:$0xf]
      %v551 = vld [vmem:[#allocation2 + $0x30] sm:$0xf]
      %v552 = vpack.c.bf16 %v549, %v546
      %v553 = vpack.c.bf16 %v550, %v547
      %v554 = vpack.c.bf16 %v551, %v548
      %v555 = vld [vmem:[#allocation4] sm:$0xff]
      %v556 = vld [vmem:[#allocation4 + $0x8] sm:$0xff]
      %v557 = vld [vmem:[#allocation4 + $0x10] sm:$0xff]
      %v558 = vld [vmem:[#allocation4 + $0x18] sm:$0xff]
      %v559 = vld [vmem:[#allocation4 + $0x20] sm:$0xff]
      %v560 = vld [vmem:[#allocation4 + $0x28] sm:$0xff]
      %v561 = vld [vmem:[#allocation4 + $0x30] sm:$0xff]
      %v562 = vld [vmem:[#allocation4 + $0x38] sm:$0xff]
      %v563 = vld [vmem:[#allocation4 + $0x40] sm:$0xff]
      %v564 = vld [vmem:[%s2] sm:$0xf]
      %v565 = vld [vmem:[%s2 + $0x4] sm:$0xf]
      %v566 = vld [vmem:[%s2 + $0x8] sm:$0xf]
      %v570 = vunpack.c.l.b16 %v564
      %v571 = vunpack.c.l.b16 %v565
      %v572 = vunpack.c.l.b16 %v566
      %v573 = vpack.c.b16 %v571, %v570
      %v574 = vpack.c.b16 %v572, %v572
      %vm575 = vcmask 97280
      %v577 = vsel %vm575, %v573, 0
      %v580 = vsel %vm575, %v574, 0
      %vm582 = vcmask 1045504
      %v584 = vsel %vm582, %v552, 0
      %v587 = vsel %vm582, %v553, 0
      %v590 = vsel %vm582, %v554, 0
      %592 = vmatprep.subr.bf16.mxu0 %v587
      %593 = vmatpush1.bf16.msra.mxu0 %v584
      %594 = vmatprep.subr.bf16.mxu0 0
      %595 = vmatpush1.bf16.msra.mxu0 0
      %596 = vmatprep.subr.bf16.mxu0 0
      %597 = vmatpush1.bf16.msra.mxu0 0
      %598 = vmatprep.subr.bf16.mxu0 0
      %599 = vmatpush1.bf16.msra.mxu0 0
      %600 = vmatprep.subr.bf16.mxu0 0
      %601 = vmatpush1.bf16.msra.mxu0 0
      %602 = vmatprep.subr.bf16.mxu0 0
      %603 = vmatpush1.bf16.msra.mxu0 0
      %604 = vmatprep.subr.bf16.mxu0 0
      %605 = vmatpush1.bf16.msra.mxu0 0
      %606 = vmatprep.subr.bf16.mxu0 0
      %607 = vmatpush1.bf16.msra.mxu0 0
      %608 = vmatprep.subr.bf16.mxu0 0
      %609 = vmatpush1.bf16.msra.mxu0 0
      %610 = vmatprep.subr.bf16.mxu0 0
      %611 = vmatpush1.bf16.msra.mxu0 0
      %612 = vmatprep.subr.bf16.mxu0 0
      %613 = vmatpush1.bf16.msra.mxu0 0
      %614 = vmatprep.subr.bf16.mxu0 0
      %615 = vmatpush1.bf16.msra.mxu0 0
      %616 = vmatprep.subr.bf16.mxu0 0
      %617 = vmatpush1.bf16.msra.mxu0 0
      %618 = vmatprep.subr.bf16.mxu0 0
      %619 = vmatpush1.bf16.msra.mxu0 0
      %620 = vmatprep.subr.bf16.mxu0 0
      %621 = vmatpush1.bf16.msra.mxu0 0
      %622 = vmatprep.subr.bf16.mxu0 0
      %623 = vmatpush1.bf16.msra.mxu0 0
      %624 = vmatprep.mubr.bf16.mxu0 0
      %625 = vmatmul.mubr.bf16.gmra.mrb[0].mxu0 %v577
      %v626 = vpop.f32.mrb[0].mxu0
      %v627 = vadd.f32 0.0, %v626
      %v628 = vpop.f32.mrb[0].mxu0
      %v629 = vadd.f32 0.0, %v628
      %v630 = vpop.f32.mrb[0].mxu0
      %v631 = vadd.f32 0.0, %v630
      %v632 = vpop.f32.mrb[0].mxu0
      %v633 = vadd.f32 0.0, %v632
      %634 = vmatprep.mubr.bf16.mxu0 0
      %635 = vmatmul.mubr.bf16.gmra.mrb[0].mxu0 %v580
      %v636 = vpop.f32.mrb[0].mxu0
      %v637 = vadd.f32 0.0, %v636
      %v638 = vpop.f32.mrb[0].mxu0
      %v639 = vadd.f32 0.0, %v638
      %v640 = vpop.f32.mrb[0].mxu0
      %v641 = vpop.f32.mrb[0].mxu0
      %642 = vdwg.mxu0
      %643 = vmatprep.subr.bf16.mxu0 0
      %644 = vmatpush1.bf16.msra.mxu0 %v590
      %645 = vmatprep.subr.bf16.mxu0 0
      %646 = vmatpush1.bf16.msra.mxu0 0
      %647 = vmatprep.subr.bf16.mxu0 0
      %648 = vmatpush1.bf16.msra.mxu0 0
      %649 = vmatprep.subr.bf16.mxu0 0
      %650 = vmatpush1.bf16.msra.mxu0 0
      %651 = vmatprep.subr.bf16.mxu0 0
      %652 = vmatpush1.bf16.msra.mxu0 0
      %653 = vmatprep.subr.bf16.mxu0 0
      %654 = vmatpush1.bf16.msra.mxu0 0
      %655 = vmatprep.subr.bf16.mxu0 0
      %656 = vmatpush1.bf16.msra.mxu0 0
      %657 = vmatprep.subr.bf16.mxu0 0
      %658 = vmatpush1.bf16.msra.mxu0 0
      %659 = vmatprep.subr.bf16.mxu0 0
      %660 = vmatpush1.bf16.msra.mxu0 0
      %661 = vmatprep.subr.bf16.mxu0 0
      %662 = vmatpush1.bf16.msra.mxu0 0
      %663 = vmatprep.subr.bf16.mxu0 0
      %664 = vmatpush1.bf16.msra.mxu0 0
      %665 = vmatprep.subr.bf16.mxu0 0
      %666 = vmatpush1.bf16.msra.mxu0 0
      %667 = vmatprep.subr.bf16.mxu0 0
      %668 = vmatpush1.bf16.msra.mxu0 0
      %669 = vmatprep.subr.bf16.mxu0 0
      %670 = vmatpush1.bf16.msra.mxu0 0
      %671 = vmatprep.subr.bf16.mxu0 0
      %672 = vmatpush1.bf16.msra.mxu0 0
      %673 = vmatprep.subr.bf16.mxu0 0
      %674 = vmatpush1.bf16.msra.mxu0 0
      %675 = vmatprep.mubr.bf16.mxu0 0
      %676 = vmatmul.mubr.bf16.gmra.mrb[0].mxu0 %v577
      %v677 = vpop.f32.mrb[0].mxu0
      %v678 = vadd.f32 0.0, %v677
      %v679 = vpop.f32.mrb[0].mxu0
      %v680 = vpop.f32.mrb[0].mxu0
      %v681 = vadd.f32 0.0, %v680
      %v682 = vpop.f32.mrb[0].mxu0
      %683 = vmatprep.mubr.bf16.mxu0 0
      %684 = vmatmul.mubr.bf16.gmra.mrb[0].mxu0 %v580
      %v685 = vpop.f32.mrb[0].mxu0
      %v686 = vadd.f32 0.0, %v685
      %v687 = vpop.f32.mrb[0].mxu0
      %v688 = vpop.f32.mrb[0].mxu0
      %v689 = vpop.f32.mrb[0].mxu0
      %690 = vdwg.mxu0
      %v691 = vadd.f32 %v555, %v627
      %v692 = vadd.f32 %v556, %v629
      %v693 = vadd.f32 %v557, %v678
      %v694 = vadd.f32 %v558, %v631
      %v695 = vadd.f32 %v559, %v633
      %v696 = vadd.f32 %v560, %v681
      %v697 = vadd.f32 %v561, %v637
      %v698 = vadd.f32 %v562, %v639
      %v699 = vadd.f32 %v563, %v686
      %700 = vst [vmem:[#allocation4] sm:$0xff] %v691
      %701 = vst [vmem:[#allocation4 + $0x8] sm:$0xff] %v692
      %702 = vst [vmem:[#allocation4 + $0x10] sm:$0xff] %v693
      %703 = vst [vmem:[#allocation4 + $0x18] sm:$0xff] %v694
      %704 = vst [vmem:[#allocation4 + $0x20] sm:$0xff] %v695
      %705 = vst [vmem:[#allocation4 + $0x28] sm:$0xff] %v696
      %706 = vst [vmem:[#allocation4 + $0x30] sm:$0xff] %v697
      %707 = vst [vmem:[#allocation4 + $0x38] sm:$0xff] %v698
      %708 = vst [vmem:[#allocation4 + $0x40] sm:$0xff] %v699
      %v709 = vld [vmem:[#allocation2] sm:$0xff]
      %v710 = vld [vmem:[#allocation2 + $0x8] sm:$0xff]
      %v711 = vld [vmem:[#allocation2 + $0x10] sm:$0xff]
      %v712 = vld [vmem:[#allocation2 + $0x18] sm:$0xff]
      %v713 = vld [vmem:[#allocation2 + $0x20] sm:$0xf]
      %v714 = vld [vmem:[#allocation2 + $0x28] sm:$0xf]
      %v715 = vld [vmem:[#allocation2 + $0x30] sm:$0xf]
      %v716 = vld [vmem:[#allocation2 + $0x38] sm:$0xf]
      %v717 = vpack.c.bf16 %v713, %v709
      %v718 = vpack.c.bf16 %v714, %v710
      %v719 = vpack.c.bf16 %v715, %v711
      %v720 = vpack.c.bf16 %v716, %v712
      %v721 = vld [vmem:[#allocation4] sm:$0xff]
      %v722 = vld [vmem:[#allocation4 + $0x8] sm:$0xff]
      %v723 = vld [vmem:[#allocation4 + $0x10] sm:$0xff]
      %v724 = vld [vmem:[#allocation4 + $0x18] sm:$0xff]
      %v725 = vld [vmem:[#allocation4 + $0x20] sm:$0xff]
      %v726 = vld [vmem:[#allocation4 + $0x28] sm:$0xff]
      %v727 = vld [vmem:[#allocation4 + $0x30] sm:$0xff]
      %v728 = vld [vmem:[#allocation4 + $0x38] sm:$0xff]
      %v729 = vld [vmem:[#allocation4 + $0x40] sm:$0xff]
      %s730 = scalar_lea.vmem %s2, 12
      %v731 = vld [vmem:[%s730] sm:$0xf]
      %v732 = vld [vmem:[%s730 + $0x4] sm:$0xf]
      %v733 = vld [vmem:[%s730 + $0x8] sm:$0xf]
      %v737 = vunpack.c.l.b16 %v731
      %v738 = vunpack.c.l.b16 %v732
      %v739 = vunpack.c.l.b16 %v733
      %v740 = vpack.c.b16 %v738, %v737
      %v741 = vpack.c.b16 %v739, %v739
      %746 = vrot.lane.b32.xlu0 %v717, 127
      %v747 = vpop.permute.xlu0 %746
      %748 = vrot.lane.b32.xlu0 %v718, 127
      %v749 = vpop.permute.xlu0 %748
      %750 = vrot.lane.b32.xlu0 %v719, 127
      %v751 = vpop.permute.xlu0 %750
      %752 = vrot.lane.b32.xlu0 %v720, 127
      %v753 = vpop.permute.xlu0 %752
      %vm754 = vcmask 1039360
      %v755 = vsel %vm754, %v747, %v749
      %v756 = vsel %vm754, %v749, %v751
      %v757 = vsel %vm754, %v751, %v753
      %v759 = vsel %vm575, %v740, 0
      %v762 = vsel %vm575, %v741, 0
      %v765 = vsel %vm582, %v755, 0
      %v768 = vsel %vm582, %v756, 0
      %v771 = vsel %vm582, %v757, 0
      %773 = vmatprep.subr.bf16.mxu0 %v768
      %774 = vmatpush1.bf16.msra.mxu0 %v765
      %775 = vmatprep.subr.bf16.mxu0 0
      %776 = vmatpush1.bf16.msra.mxu0 0
      %777 = vmatprep.subr.bf16.mxu0 0
      %778 = vmatpush1.bf16.msra.mxu0 0
      %779 = vmatprep.subr.bf16.mxu0 0
      %780 = vmatpush1.bf16.msra.mxu0 0
      %781 = vmatprep.subr.bf16.mxu0 0
      %782 = vmatpush1.bf16.msra.mxu0 0
      %783 = vmatprep.subr.bf16.mxu0 0
      %784 = vmatpush1.bf16.msra.mxu0 0
      %785 = vmatprep.subr.bf16.mxu0 0
      %786 = vmatpush1.bf16.msra.mxu0 0
      %787 = vmatprep.subr.bf16.mxu0 0
      %788 = vmatpush1.bf16.msra.mxu0 0
      %789 = vmatprep.subr.bf16.mxu0 0
      %790 = vmatpush1.bf16.msra.mxu0 0
      %791 = vmatprep.subr.bf16.mxu0 0
      %792 = vmatpush1.bf16.msra.mxu0 0
      %793 = vmatprep.subr.bf16.mxu0 0
      %794 = vmatpush1.bf16.msra.mxu0 0
      %795 = vmatprep.subr.bf16.mxu0 0
      %796 = vmatpush1.bf16.msra.mxu0 0
      %797 = vmatprep.subr.bf16.mxu0 0
      %798 = vmatpush1.bf16.msra.mxu0 0
      %799 = vmatprep.subr.bf16.mxu0 0
      %800 = vmatpush1.bf16.msra.mxu0 0
      %801 = vmatprep.subr.bf16.mxu0 0
      %802 = vmatpush1.bf16.msra.mxu0 0
      %803 = vmatprep.subr.bf16.mxu0 0
      %804 = vmatpush1.bf16.msra.mxu0 0
      %805 = vmatprep.mubr.bf16.mxu0 0
      %806 = vmatmul.mubr.bf16.gmra.mrb[0].mxu0 %v759
      %v807 = vpop.f32.mrb[0].mxu0
      %v808 = vadd.f32 0.0, %v807
      %v809 = vpop.f32.mrb[0].mxu0
      %v810 = vadd.f32 0.0, %v809
      %v811 = vpop.f32.mrb[0].mxu0
      %v812 = vadd.f32 0.0, %v811
      %v813 = vpop.f32.mrb[0].mxu0
      %v814 = vadd.f32 0.0, %v813
      %815 = vmatprep.mubr.bf16.mxu0 0
      %816 = vmatmul.mubr.bf16.gmra.mrb[0].mxu0 %v762
      %v817 = vpop.f32.mrb[0].mxu0
      %v818 = vadd.f32 0.0, %v817
      %v819 = vpop.f32.mrb[0].mxu0
      %v820 = vadd.f32 0.0, %v819
      %v821 = vpop.f32.mrb[0].mxu0
      %v822 = vpop.f32.mrb[0].mxu0
      %823 = vdwg.mxu0
      %824 = vmatprep.subr.bf16.mxu0 0
      %825 = vmatpush1.bf16.msra.mxu0 %v771
      %826 = vmatprep.subr.bf16.mxu0 0
      %827 = vmatpush1.bf16.msra.mxu0 0
      %828 = vmatprep.subr.bf16.mxu0 0
      %829 = vmatpush1.bf16.msra.mxu0 0
      %830 = vmatprep.subr.bf16.mxu0 0
      %831 = vmatpush1.bf16.msra.mxu0 0
      %832 = vmatprep.subr.bf16.mxu0 0
      %833 = vmatpush1.bf16.msra.mxu0 0
      %834 = vmatprep.subr.bf16.mxu0 0
      %835 = vmatpush1.bf16.msra.mxu0 0
      %836 = vmatprep.subr.bf16.mxu0 0
      %837 = vmatpush1.bf16.msra.mxu0 0
      %838 = vmatprep.subr.bf16.mxu0 0
      %839 = vmatpush1.bf16.msra.mxu0 0
      %840 = vmatprep.subr.bf16.mxu0 0
      %841 = vmatpush1.bf16.msra.mxu0 0
      %842 = vmatprep.subr.bf16.mxu0 0
      %843 = vmatpush1.bf16.msra.mxu0 0
      %844 = vmatprep.subr.bf16.mxu0 0
      %845 = vmatpush1.bf16.msra.mxu0 0
      %846 = vmatprep.subr.bf16.mxu0 0
      %847 = vmatpush1.bf16.msra.mxu0 0
      %848 = vmatprep.subr.bf16.mxu0 0
      %849 = vmatpush1.bf16.msra.mxu0 0
      %850 = vmatprep.subr.bf16.mxu0 0
      %851 = vmatpush1.bf16.msra.mxu0 0
      %852 = vmatprep.subr.bf16.mxu0 0
      %853 = vmatpush1.bf16.msra.mxu0 0
      %854 = vmatprep.subr.bf16.mxu0 0
      %855 = vmatpush1.bf16.msra.mxu0 0
      %856 = vmatprep.mubr.bf16.mxu0 0
      %857 = vmatmul.mubr.bf16.gmra.mrb[0].mxu0 %v759
      %v858 = vpop.f32.mrb[0].mxu0
      %v859 = vadd.f32 0.0, %v858
      %v860 = vpop.f32.mrb[0].mxu0
      %v861 = vpop.f32.mrb[0].mxu0
      %v862 = vadd.f32 0.0, %v861
      %v863 = vpop.f32.mrb[0].mxu0
      %864 = vmatprep.mubr.bf16.mxu0 0
      %865 = vmatmul.mubr.bf16.gmra.mrb[0].mxu0 %v762
      %v866 = vpop.f32.mrb[0].mxu0
      %v867 = vadd.f32 0.0, %v866
      %v868 = vpop.f32.mrb[0].mxu0
      %v869 = vpop.f32.mrb[0].mxu0
      %v870 = vpop.f32.mrb[0].mxu0
      %871 = vdwg.mxu0
      %v872 = vadd.f32 %v721, %v808
      %v873 = vadd.f32 %v722, %v810
      %v874 = vadd.f32 %v723, %v859
      %v875 = vadd.f32 %v724, %v812
      %v876 = vadd.f32 %v725, %v814
      %v877 = vadd.f32 %v726, %v862
      %v878 = vadd.f32 %v727, %v818
      %v879 = vadd.f32 %v728, %v820
      %v880 = vadd.f32 %v729, %v867
      %881 = vst [vmem:[#allocation4] sm:$0xff] %v872
      %882 = vst [vmem:[#allocation4 + $0x8] sm:$0xff] %v873
      %883 = vst [vmem:[#allocation4 + $0x10] sm:$0xff] %v874
      %884 = vst [vmem:[#allocation4 + $0x18] sm:$0xff] %v875
      %885 = vst [vmem:[#allocation4 + $0x20] sm:$0xff] %v876
      %886 = vst [vmem:[#allocation4 + $0x28] sm:$0xff] %v877
      %887 = vst [vmem:[#allocation4 + $0x30] sm:$0xff] %v878
      %888 = vst [vmem:[#allocation4 + $0x38] sm:$0xff] %v879
      %889 = vst [vmem:[#allocation4 + $0x40] sm:$0xff] %v880
      %v890 = vld [vmem:[#allocation2] sm:$0xff]
      %v891 = vld [vmem:[#allocation2 + $0x8] sm:$0xff]
      %v892 = vld [vmem:[#allocation2 + $0x10] sm:$0xff]
      %v893 = vld [vmem:[#allocation2 + $0x18] sm:$0xff]
      %v894 = vld [vmem:[#allocation2 + $0x20] sm:$0xf]
      %v895 = vld [vmem:[#allocation2 + $0x28] sm:$0xf]
      %v896 = vld [vmem:[#allocation2 + $0x30] sm:$0xf]
      %v897 = vld [vmem:[#allocation2 + $0x38] sm:$0xf]
      %v898 = vpack.c.bf16 %v894, %v890
      %v899 = vpack.c.bf16 %v895, %v891
      %v900 = vpack.c.bf16 %v896, %v892
      %v901 = vpack.c.bf16 %v897, %v893
      %v902 = vld [vmem:[#allocation4] sm:$0xff]
      %v903 = vld [vmem:[#allocation4 + $0x8] sm:$0xff]
      %v904 = vld [vmem:[#allocation4 + $0x10] sm:$0xff]
      %v905 = vld [vmem:[#allocation4 + $0x18] sm:$0xff]
      %v906 = vld [vmem:[#allocation4 + $0x20] sm:$0xff]
      %v907 = vld [vmem:[#allocation4 + $0x28] sm:$0xff]
      %v908 = vld [vmem:[#allocation4 + $0x30] sm:$0xff]
      %v909 = vld [vmem:[#allocation4 + $0x38] sm:$0xff]
      %v910 = vld [vmem:[#allocation4 + $0x40] sm:$0xff]
      %s911 = scalar_lea.vmem %s2, 24
      %v912 = vld [vmem:[%s911] sm:$0xf]
      %v913 = vld [vmem:[%s911 + $0x4] sm:$0xf]
      %v914 = vld [vmem:[%s911 + $0x8] sm:$0xf]
      %v918 = vunpack.c.l.b16 %v912
      %v919 = vunpack.c.l.b16 %v913
      %v920 = vunpack.c.l.b16 %v914
      %v921 = vpack.c.b16 %v919, %v918
      %v922 = vpack.c.b16 %v920, %v920
      %927 = vrot.lane.b32.xlu0 %v898, 126
      %v928 = vpop.permute.xlu0 %927
      %929 = vrot.lane.b32.xlu0 %v899, 126
      %v930 = vpop.permute.xlu0 %929
      %931 = vrot.lane.b32.xlu0 %v900, 126
      %v932 = vpop.permute.xlu0 %931
      %933 = vrot.lane.b32.xlu0 %v901, 126
      %v934 = vpop.permute.xlu0 %933
      %vm935 = vcmask 1031168
      %v936 = vsel %vm935, %v928, %v930
      %v937 = vsel %vm935, %v930, %v932
      %v938 = vsel %vm935, %v932, %v934
      %v940 = vsel %vm575, %v921, 0
      %v943 = vsel %vm575, %v922, 0
      %v946 = vsel %vm582, %v936, 0
      %v949 = vsel %vm582, %v937, 0
      %v952 = vsel %vm582, %v938, 0
      %954 = vmatprep.subr.bf16.mxu0 %v949
      %955 = vmatpush1.bf16.msra.mxu0 %v946
      %956 = vmatprep.subr.bf16.mxu0 0
      %957 = vmatpush1.bf16.msra.mxu0 0
      %958 = vmatprep.subr.bf16.mxu0 0
      %959 = vmatpush1.bf16.msra.mxu0 0
      %960 = vmatprep.subr.bf16.mxu0 0
      %961 = vmatpush1.bf16.msra.mxu0 0
      %962 = vmatprep.subr.bf16.mxu0 0
      %963 = vmatpush1.bf16.msra.mxu0 0
      %964 = vmatprep.subr.bf16.mxu0 0
      %965 = vmatpush1.bf16.msra.mxu0 0
      %966 = vmatprep.subr.bf16.mxu0 0
      %967 = vmatpush1.bf16.msra.mxu0 0
      %968 = vmatprep.subr.bf16.mxu0 0
      %969 = vmatpush1.bf16.msra.mxu0 0
      %970 = vmatprep.subr.bf16.mxu0 0
      %971 = vmatpush1.bf16.msra.mxu0 0
      %972 = vmatprep.subr.bf16.mxu0 0
      %973 = vmatpush1.bf16.msra.mxu0 0
      %974 = vmatprep.subr.bf16.mxu0 0
      %975 = vmatpush1.bf16.msra.mxu0 0
      %976 = vmatprep.subr.bf16.mxu0 0
      %977 = vmatpush1.bf16.msra.mxu0 0
      %978 = vmatprep.subr.bf16.mxu0 0
      %979 = vmatpush1.bf16.msra.mxu0 0
      %980 = vmatprep.subr.bf16.mxu0 0
      %981 = vmatpush1.bf16.msra.mxu0 0
      %982 = vmatprep.subr.bf16.mxu0 0
      %983 = vmatpush1.bf16.msra.mxu0 0
      %984 = vmatprep.subr.bf16.mxu0 0
      %985 = vmatpush1.bf16.msra.mxu0 0
      %986 = vmatprep.mubr.bf16.mxu0 0
      %987 = vmatmul.mubr.bf16.gmra.mrb[0].mxu0 %v940
      %v988 = vpop.f32.mrb[0].mxu0
      %v989 = vadd.f32 0.0, %v988
      %v990 = vpop.f32.mrb[0].mxu0
      %v991 = vadd.f32 0.0, %v990
      %v992 = vpop.f32.mrb[0].mxu0
      %v993 = vadd.f32 0.0, %v992
      %v994 = vpop.f32.mrb[0].mxu0
      %v995 = vadd.f32 0.0, %v994
      %996 = vmatprep.mubr.bf16.mxu0 0
      %997 = vmatmul.mubr.bf16.gmra.mrb[0].mxu0 %v943
      %v998 = vpop.f32.mrb[0].mxu0
      %v999 = vadd.f32 0.0, %v998
      %v1000 = vpop.f32.mrb[0].mxu0
      %v1001 = vadd.f32 0.0, %v1000
      %v1002 = vpop.f32.mrb[0].mxu0
      %v1003 = vpop.f32.mrb[0].mxu0
      %1004 = vdwg.mxu0
      %1005 = vmatprep.subr.bf16.mxu0 0
      %1006 = vmatpush1.bf16.msra.mxu0 %v952
      %1007 = vmatprep.subr.bf16.mxu0 0
      %1008 = vmatpush1.bf16.msra.mxu0 0
      %1009 = vmatprep.subr.bf16.mxu0 0
      %1010 = vmatpush1.bf16.msra.mxu0 0
      %1011 = vmatprep.subr.bf16.mxu0 0
      %1012 = vmatpush1.bf16.msra.mxu0 0
      %1013 = vmatprep.subr.bf16.mxu0 0
      %1014 = vmatpush1.bf16.msra.mxu0 0
      %1015 = vmatprep.subr.bf16.mxu0 0
      %1016 = vmatpush1.bf16.msra.mxu0 0
      %1017 = vmatprep.subr.bf16.mxu0 0
      %1018 = vmatpush1.bf16.msra.mxu0 0
      %1019 = vmatprep.subr.bf16.mxu0 0
      %1020 = vmatpush1.bf16.msra.mxu0 0
      %1021 = vmatprep.subr.bf16.mxu0 0
      %1022 = vmatpush1.bf16.msra.mxu0 0
      %1023 = vmatprep.subr.bf16.mxu0 0
      %1024 = vmatpush1.bf16.msra.mxu0 0
      %1025 = vmatprep.subr.bf16.mxu0 0
      %1026 = vmatpush1.bf16.msra.mxu0 0
      %1027 = vmatprep.subr.bf16.mxu0 0
      %1028 = vmatpush1.bf16.msra.mxu0 0
      %1029 = vmatprep.subr.bf16.mxu0 0
      %1030 = vmatpush1.bf16.msra.mxu0 0
      %1031 = vmatprep.subr.bf16.mxu0 0
      %1032 = vmatpush1.bf16.msra.mxu0 0
      %1033 = vmatprep.subr.bf16.mxu0 0
      %1034 = vmatpush1.bf16.msra.mxu0 0
      %1035 = vmatprep.subr.bf16.mxu0 0
      %1036 = vmatpush1.bf16.msra.mxu0 0
      %1037 = vmatprep.mubr.bf16.mxu0 0
      %1038 = vmatmul.mubr.bf16.gmra.mrb[0].mxu0 %v940
      %v1039 = vpop.f32.mrb[0].mxu0
      %v1040 = vadd.f32 0.0, %v1039
      %v1041 = vpop.f32.mrb[0].mxu0
      %v1042 = vpop.f32.mrb[0].mxu0
      %v1043 = vadd.f32 0.0, %v1042
      %v1044 = vpop.f32.mrb[0].mxu0
      %1045 = vmatprep.mubr.bf16.mxu0 0
      %1046 = vmatmul.mubr.bf16.gmra.mrb[0].mxu0 %v943
      %v1047 = vpop.f32.mrb[0].mxu0
      %v1048 = vadd.f32 0.0, %v1047
      %v1049 = vpop.f32.mrb[0].mxu0
      %v1050 = vpop.f32.mrb[0].mxu0
      %v1051 = vpop.f32.mrb[0].mxu0
      %1052 = vdwg.mxu0
      %v1053 = vadd.f32 %v902, %v989
      %v1054 = vadd.f32 %v903, %v991
      %v1055 = vadd.f32 %v904, %v1040
      %v1056 = vadd.f32 %v905, %v993
      %v1057 = vadd.f32 %v906, %v995
      %v1058 = vadd.f32 %v907, %v1043
      %v1059 = vadd.f32 %v908, %v999
      %v1060 = vadd.f32 %v909, %v1001
      %v1061 = vadd.f32 %v910, %v1048
      %1062 = vst [vmem:[#allocation4] sm:$0xff] %v1053
      %1063 = vst [vmem:[#allocation4 + $0x8] sm:$0xff] %v1054
      %1064 = vst [vmem:[#allocation4 + $0x10] sm:$0xff] %v1055
      %1065 = vst [vmem:[#allocation4 + $0x18] sm:$0xff] %v1056
      %1066 = vst [vmem:[#allocation4 + $0x20] sm:$0xff] %v1057
      %1067 = vst [vmem:[#allocation4 + $0x28] sm:$0xff] %v1058
      %1068 = vst [vmem:[#allocation4 + $0x30] sm:$0xff] %v1059
      %1069 = vst [vmem:[#allocation4 + $0x38] sm:$0xff] %v1060
      %1070 = vst [vmem:[#allocation4 + $0x40] sm:$0xff] %v1061
      %v1071 = vld [vmem:[#allocation2] sm:$0xff]
      %v1072 = vld [vmem:[#allocation2 + $0x8] sm:$0xff]
      %v1073 = vld [vmem:[#allocation2 + $0x10] sm:$0xff]
      %v1074 = vld [vmem:[#allocation2 + $0x18] sm:$0xff]
      %v1075 = vld [vmem:[#allocation2 + $0x20] sm:$0xf]
      %v1076 = vld [vmem:[#allocation2 + $0x28] sm:$0xf]
      %v1077 = vld [vmem:[#allocation2 + $0x30] sm:$0xf]
      %v1078 = vld [vmem:[#allocation2 + $0x38] sm:$0xf]
      %v1079 = vpack.c.bf16 %v1075, %v1071
      %v1080 = vpack.c.bf16 %v1076, %v1072
      %v1081 = vpack.c.bf16 %v1077, %v1073
      %v1082 = vpack.c.bf16 %v1078, %v1074
      %v1083 = vld [vmem:[#allocation4] sm:$0xff]
      %v1084 = vld [vmem:[#allocation4 + $0x8] sm:$0xff]
      %v1085 = vld [vmem:[#allocation4 + $0x10] sm:$0xff]
      %v1086 = vld [vmem:[#allocation4 + $0x18] sm:$0xff]
      %v1087 = vld [vmem:[#allocation4 + $0x20] sm:$0xff]
      %v1088 = vld [vmem:[#allocation4 + $0x28] sm:$0xff]
      %v1089 = vld [vmem:[#allocation4 + $0x30] sm:$0xff]
      %v1090 = vld [vmem:[#allocation4 + $0x38] sm:$0xff]
      %v1091 = vld [vmem:[#allocation4 + $0x40] sm:$0xff]
      %s1092 = scalar_lea.vmem %s2, 36
      %v1093 = vld [vmem:[%s1092] sm:$0xf]
      %v1094 = vld [vmem:[%s1092 + $0x4] sm:$0xf]
      %v1095 = vld [vmem:[%s1092 + $0x8] sm:$0xf]
      %v1099 = vunpack.c.l.b16 %v1093
      %v1100 = vunpack.c.l.b16 %v1094
      %v1101 = vunpack.c.l.b16 %v1095
      %v1102 = vpack.c.b16 %v1100, %v1099
      %v1103 = vpack.c.b16 %v1101, %v1101
      %1108 = vrot.lane.b32.xlu0 %v1079, 110
      %v1109 = vpop.permute.xlu0 %1108
      %1110 = vrot.lane.b32.xlu0 %v1080, 110
      %v1111 = vpop.permute.xlu0 %1110
      %1112 = vrot.lane.b32.xlu0 %v1081, 110
      %v1113 = vpop.permute.xlu0 %1112
      %1114 = vrot.lane.b32.xlu0 %v1082, 110
      %v1115 = vpop.permute.xlu0 %1114
      %vm1116 = vcmask 900096
      %v1117 = vsel %vm1116, %v1109, %v1111
      %v1118 = vsel %vm1116, %v1111, %v1113
      %v1119 = vsel %vm1116, %v1113, %v1115
      %v1121 = vsel %vm575, %v1102, 0
      %v1124 = vsel %vm575, %v1103, 0
      %v1127 = vsel %vm582, %v1117, 0
      %v1130 = vsel %vm582, %v1118, 0
      %v1133 = vsel %vm582, %v1119, 0
      %1135 = vmatprep.subr.bf16.mxu0 %v1130
      %1136 = vmatpush1.bf16.msra.mxu0 %v1127
      %1137 = vmatprep.subr.bf16.mxu0 0
      %1138 = vmatpush1.bf16.msra.mxu0 0
      %1139 = vmatprep.subr.bf16.mxu0 0
      %1140 = vmatpush1.bf16.msra.mxu0 0
      %1141 = vmatprep.subr.bf16.mxu0 0
      %1142 = vmatpush1.bf16.msra.mxu0 0
      %1143 = vmatprep.subr.bf16.mxu0 0
      %1144 = vmatpush1.bf16.msra.mxu0 0
      %1145 = vmatprep.subr.bf16.mxu0 0
      %1146 = vmatpush1.bf16.msra.mxu0 0
      %1147 = vmatprep.subr.bf16.mxu0 0
      %1148 = vmatpush1.bf16.msra.mxu0 0
      %1149 = vmatprep.subr.bf16.mxu0 0
      %1150 = vmatpush1.bf16.msra.mxu0 0
      %1151 = vmatprep.subr.bf16.mxu0 0
      %1152 = vmatpush1.bf16.msra.mxu0 0
      %1153 = vmatprep.subr.bf16.mxu0 0
      %1154 = vmatpush1.bf16.msra.mxu0 0
      %1155 = vmatprep.subr.bf16.mxu0 0
      %1156 = vmatpush1.bf16.msra.mxu0 0
      %1157 = vmatprep.subr.bf16.mxu0 0
      %1158 = vmatpush1.bf16.msra.mxu0 0
      %1159 = vmatprep.subr.bf16.mxu0 0
      %1160 = vmatpush1.bf16.msra.mxu0 0
      %1161 = vmatprep.subr.bf16.mxu0 0
      %1162 = vmatpush1.bf16.msra.mxu0 0
      %1163 = vmatprep.subr.bf16.mxu0 0
      %1164 = vmatpush1.bf16.msra.mxu0 0
      %1165 = vmatprep.subr.bf16.mxu0 0
      %1166 = vmatpush1.bf16.msra.mxu0 0
      %1167 = vmatprep.mubr.bf16.mxu0 0
      %1168 = vmatmul.mubr.bf16.gmra.mrb[0].mxu0 %v1121
      %v1169 = vpop.f32.mrb[0].mxu0
      %v1170 = vadd.f32 0.0, %v1169
      %v1171 = vpop.f32.mrb[0].mxu0
      %v1172 = vadd.f32 0.0, %v1171
      %v1173 = vpop.f32.mrb[0].mxu0
      %v1174 = vadd.f32 0.0, %v1173
      %v1175 = vpop.f32.mrb[0].mxu0
      %v1176 = vadd.f32 0.0, %v1175
      %1177 = vmatprep.mubr.bf16.mxu0 0
      %1178 = vmatmul.mubr.bf16.gmra.mrb[0].mxu0 %v1124
      %v1179 = vpop.f32.mrb[0].mxu0
      %v1180 = vadd.f32 0.0, %v1179
      %v1181 = vpop.f32.mrb[0].mxu0
      %v1182 = vadd.f32 0.0, %v1181
      %v1183 = vpop.f32.mrb[0].mxu0
      %v1184 = vpop.f32.mrb[0].mxu0
      %1185 = vdwg.mxu0
      %1186 = vmatprep.subr.bf16.mxu0 0
      %1187 = vmatpush1.bf16.msra.mxu0 %v1133
      %1188 = vmatprep.subr.bf16.mxu0 0
      %1189 = vmatpush1.bf16.msra.mxu0 0
      %1190 = vmatprep.subr.bf16.mxu0 0
      %1191 = vmatpush1.bf16.msra.mxu0 0
      %1192 = vmatprep.subr.bf16.mxu0 0
      %1193 = vmatpush1.bf16.msra.mxu0 0
      %1194 = vmatprep.subr.bf16.mxu0 0
      %1195 = vmatpush1.bf16.msra.mxu0 0
      %1196 = vmatprep.subr.bf16.mxu0 0
      %1197 = vmatpush1.bf16.msra.mxu0 0
      %1198 = vmatprep.subr.bf16.mxu0 0
      %1199 = vmatpush1.bf16.msra.mxu0 0
      %1200 = vmatprep.subr.bf16.mxu0 0
      %1201 = vmatpush1.bf16.msra.mxu0 0
      %1202 = vmatprep.subr.bf16.mxu0 0
      %1203 = vmatpush1.bf16.msra.mxu0 0
      %1204 = vmatprep.subr.bf16.mxu0 0
      %1205 = vmatpush1.bf16.msra.mxu0 0
      %1206 = vmatprep.subr.bf16.mxu0 0
      %1207 = vmatpush1.bf16.msra.mxu0 0
      %1208 = vmatprep.subr.bf16.mxu0 0
      %1209 = vmatpush1.bf16.msra.mxu0 0
      %1210 = vmatprep.subr.bf16.mxu0 0
      %1211 = vmatpush1.bf16.msra.mxu0 0
      %1212 = vmatprep.subr.bf16.mxu0 0
      %1213 = vmatpush1.bf16.msra.mxu0 0
      %1214 = vmatprep.subr.bf16.mxu0 0
      %1215 = vmatpush1.bf16.msra.mxu0 0
      %1216 = vmatprep.subr.bf16.mxu0 0
      %1217 = vmatpush1.bf16.msra.mxu0 0
      %1218 = vmatprep.mubr.bf16.mxu0 0
      %1219 = vmatmul.mubr.bf16.gmra.mrb[0].mxu0 %v1121
      %v1220 = vpop.f32.mrb[0].mxu0
      %v1221 = vadd.f32 0.0, %v1220
      %v1222 = vpop.f32.mrb[0].mxu0
      %v1223 = vpop.f32.mrb[0].mxu0
      %v1224 = vadd.f32 0.0, %v1223
      %v1225 = vpop.f32.mrb[0].mxu0
      %1226 = vmatprep.mubr.bf16.mxu0 0
      %1227 = vmatmul.mubr.bf16.gmra.mrb[0].mxu0 %v1124
      %v1228 = vpop.f32.mrb[0].mxu0
      %v1229 = vadd.f32 0.0, %v1228
      %v1230 = vpop.f32.mrb[0].mxu0
      %v1231 = vpop.f32.mrb[0].mxu0
      %v1232 = vpop.f32.mrb[0].mxu0
      %1233 = vdwg.mxu0
      %v1234 = vadd.f32 %v1083, %v1170
      %v1235 = vadd.f32 %v1084, %v1172
      %v1236 = vadd.f32 %v1085, %v1221
      %v1237 = vadd.f32 %v1086, %v1174
      %v1238 = vadd.f32 %v1087, %v1176
      %v1239 = vadd.f32 %v1088, %v1224
      %v1240 = vadd.f32 %v1089, %v1180
      %v1241 = vadd.f32 %v1090, %v1182
      %v1242 = vadd.f32 %v1091, %v1229
      %1243 = vst [vmem:[#allocation4] sm:$0xff] %v1234
      %1244 = vst [vmem:[#allocation4 + $0x8] sm:$0xff] %v1235
      %1245 = vst [vmem:[#allocation4 + $0x10] sm:$0xff] %v1236
      %1246 = vst [vmem:[#allocation4 + $0x18] sm:$0xff] %v1237
      %1247 = vst [vmem:[#allocation4 + $0x20] sm:$0xff] %v1238
      %1248 = vst [vmem:[#allocation4 + $0x28] sm:$0xff] %v1239
      %1249 = vst [vmem:[#allocation4 + $0x30] sm:$0xff] %v1240
      %1250 = vst [vmem:[#allocation4 + $0x38] sm:$0xff] %v1241
      %1251 = vst [vmem:[#allocation4 + $0x40] sm:$0xff] %v1242
      %v1252 = vld [vmem:[#allocation2] sm:$0xff]
      %v1253 = vld [vmem:[#allocation2 + $0x8] sm:$0xff]
      %v1254 = vld [vmem:[#allocation2 + $0x10] sm:$0xff]
      %v1255 = vld [vmem:[#allocation2 + $0x18] sm:$0xff]
      %v1256 = vld [vmem:[#allocation2 + $0x20] sm:$0xf]
      %v1257 = vld [vmem:[#allocation2 + $0x28] sm:$0xf]
      %v1258 = vld [vmem:[#allocation2 + $0x30] sm:$0xf]
      %v1259 = vld [vmem:[#allocation2 + $0x38] sm:$0xf]
      %v1260 = vpack.c.bf16 %v1256, %v1252
      %v1261 = vpack.c.bf16 %v1257, %v1253
      %v1262 = vpack.c.bf16 %v1258, %v1254
      %v1263 = vpack.c.bf16 %v1259, %v1255
      %v1264 = vld [vmem:[#allocation4] sm:$0xff]
      %v1265 = vld [vmem:[#allocation4 + $0x8] sm:$0xff]
      %v1266 = vld [vmem:[#allocation4 + $0x10] sm:$0xff]
      %v1267 = vld [vmem:[#allocation4 + $0x18] sm:$0xff]
      %v1268 = vld [vmem:[#allocation4 + $0x20] sm:$0xff]
      %v1269 = vld [vmem:[#allocation4 + $0x28] sm:$0xff]
      %v1270 = vld [vmem:[#allocation4 + $0x30] sm:$0xff]
      %v1271 = vld [vmem:[#allocation4 + $0x38] sm:$0xff]
      %v1272 = vld [vmem:[#allocation4 + $0x40] sm:$0xff]
      %s1273 = scalar_lea.vmem %s2, 48
      %v1274 = vld [vmem:[%s1273] sm:$0xf]
      %v1275 = vld [vmem:[%s1273 + $0x4] sm:$0xf]
      %v1276 = vld [vmem:[%s1273 + $0x8] sm:$0xf]
      %v1280 = vunpack.c.l.b16 %v1274
      %v1281 = vunpack.c.l.b16 %v1275
      %v1282 = vunpack.c.l.b16 %v1276
      %v1283 = vpack.c.b16 %v1281, %v1280
      %v1284 = vpack.c.b16 %v1282, %v1282
      %1289 = vrot.lane.b32.xlu0 %v1260, 109
      %v1290 = vpop.permute.xlu0 %1289
      %1291 = vrot.lane.b32.xlu0 %v1261, 109
      %v1292 = vpop.permute.xlu0 %1291
      %1293 = vrot.lane.b32.xlu0 %v1262, 109
      %v1294 = vpop.permute.xlu0 %1293
      %1295 = vrot.lane.b32.xlu0 %v1263, 109
      %v1296 = vpop.permute.xlu0 %1295
      %vm1297 = vcmask 891904
      %v1298 = vsel %vm1297, %v1290, %v1292
      %v1299 = vsel %vm1297, %v1292, %v1294
      %v1300 = vsel %vm1297, %v1294, %v1296
      %v1302 = vsel %vm575, %v1283, 0
      %v1305 = vsel %vm575, %v1284, 0
      %v1308 = vsel %vm582, %v1298, 0
      %v1311 = vsel %vm582, %v1299, 0
      %v1314 = vsel %vm582, %v1300, 0
      %1316 = vmatprep.subr.bf16.mxu0 %v1311
      %1317 = vmatpush1.bf16.msra.mxu0 %v1308
      %1318 = vmatprep.subr.bf16.mxu0 0
      %1319 = vmatpush1.bf16.msra.mxu0 0
      %1320 = vmatprep.subr.bf16.mxu0 0
      %1321 = vmatpush1.bf16.msra.mxu0 0
      %1322 = vmatprep.subr.bf16.mxu0 0
      %1323 = vmatpush1.bf16.msra.mxu0 0
      %1324 = vmatprep.subr.bf16.mxu0 0
      %1325 = vmatpush1.bf16.msra.mxu0 0
      %1326 = vmatprep.subr.bf16.mxu0 0
      %1327 = vmatpush1.bf16.msra.mxu0 0
      %1328 = vmatprep.subr.bf16.mxu0 0
      %1329 = vmatpush1.bf16.msra.mxu0 0
      %1330 = vmatprep.subr.bf16.mxu0 0
      %1331 = vmatpush1.bf16.msra.mxu0 0
      %1332 = vmatprep.subr.bf16.mxu0 0
      %1333 = vmatpush1.bf16.msra.mxu0 0
      %1334 = vmatprep.subr.bf16.mxu0 0
      %1335 = vmatpush1.bf16.msra.mxu0 0
      %1336 = vmatprep.subr.bf16.mxu0 0
      %1337 = vmatpush1.bf16.msra.mxu0 0
      %1338 = vmatprep.subr.bf16.mxu0 0
      %1339 = vmatpush1.bf16.msra.mxu0 0
      %1340 = vmatprep.subr.bf16.mxu0 0
      %1341 = vmatpush1.bf16.msra.mxu0 0
      %1342 = vmatprep.subr.bf16.mxu0 0
      %1343 = vmatpush1.bf16.msra.mxu0 0
      %1344 = vmatprep.subr.bf16.mxu0 0
      %1345 = vmatpush1.bf16.msra.mxu0 0
      %1346 = vmatprep.subr.bf16.mxu0 0
      %1347 = vmatpush1.bf16.msra.mxu0 0
      %1348 = vmatprep.mubr.bf16.mxu0 0
      %1349 = vmatmul.mubr.bf16.gmra.mrb[0].mxu0 %v1302
      %v1350 = vpop.f32.mrb[0].mxu0
      %v1351 = vadd.f32 0.0, %v1350
      %v1352 = vpop.f32.mrb[0].mxu0
      %v1353 = vadd.f32 0.0, %v1352
      %v1354 = vpop.f32.mrb[0].mxu0
      %v1355 = vadd.f32 0.0, %v1354
      %v1356 = vpop.f32.mrb[0].mxu0
      %v1357 = vadd.f32 0.0, %v1356
      %1358 = vmatprep.mubr.bf16.mxu0 0
      %1359 = vmatmul.mubr.bf16.gmra.mrb[0].mxu0 %v1305
      %v1360 = vpop.f32.mrb[0].mxu0
      %v1361 = vadd.f32 0.0, %v1360
      %v1362 = vpop.f32.mrb[0].mxu0
      %v1363 = vadd.f32 0.0, %v1362
      %v1364 = vpop.f32.mrb[0].mxu0
      %v1365 = vpop.f32.mrb[0].mxu0
      %1366 = vdwg.mxu0
      %1367 = vmatprep.subr.bf16.mxu0 0
      %1368 = vmatpush1.bf16.msra.mxu0 %v1314
      %1369 = vmatprep.subr.bf16.mxu0 0
      %1370 = vmatpush1.bf16.msra.mxu0 0
      %1371 = vmatprep.subr.bf16.mxu0 0
      %1372 = vmatpush1.bf16.msra.mxu0 0
      %1373 = vmatprep.subr.bf16.mxu0 0
      %1374 = vmatpush1.bf16.msra.mxu0 0
      %1375 = vmatprep.subr.bf16.mxu0 0
      %1376 = vmatpush1.bf16.msra.mxu0 0
      %1377 = vmatprep.subr.bf16.mxu0 0
      %1378 = vmatpush1.bf16.msra.mxu0 0
      %1379 = vmatprep.subr.bf16.mxu0 0
      %1380 = vmatpush1.bf16.msra.mxu0 0
      %1381 = vmatprep.subr.bf16.mxu0 0
      %1382 = vmatpush1.bf16.msra.mxu0 0
      %1383 = vmatprep.subr.bf16.mxu0 0
      %1384 = vmatpush1.bf16.msra.mxu0 0
      %1385 = vmatprep.subr.bf16.mxu0 0
      %1386 = vmatpush1.bf16.msra.mxu0 0
      %1387 = vmatprep.subr.bf16.mxu0 0
      %1388 = vmatpush1.bf16.msra.mxu0 0
      %1389 = vmatprep.subr.bf16.mxu0 0
      %1390 = vmatpush1.bf16.msra.mxu0 0
      %1391 = vmatprep.subr.bf16.mxu0 0
      %1392 = vmatpush1.bf16.msra.mxu0 0
      %1393 = vmatprep.subr.bf16.mxu0 0
      %1394 = vmatpush1.bf16.msra.mxu0 0
      %1395 = vmatprep.subr.bf16.mxu0 0
      %1396 = vmatpush1.bf16.msra.mxu0 0
      %1397 = vmatprep.subr.bf16.mxu0 0
      %1398 = vmatpush1.bf16.msra.mxu0 0
      %1399 = vmatprep.mubr.bf16.mxu0 0
      %1400 = vmatmul.mubr.bf16.gmra.mrb[0].mxu0 %v1302
      %v1401 = vpop.f32.mrb[0].mxu0
      %v1402 = vadd.f32 0.0, %v1401
      %v1403 = vpop.f32.mrb[0].mxu0
      %v1404 = vpop.f32.mrb[0].mxu0
      %v1405 = vadd.f32 0.0, %v1404
      %v1406 = vpop.f32.mrb[0].mxu0
      %1407 = vmatprep.mubr.bf16.mxu0 0
      %1408 = vmatmul.mubr.bf16.gmra.mrb[0].mxu0 %v1305
      %v1409 = vpop.f32.mrb[0].mxu0
      %v1410 = vadd.f32 0.0, %v1409
      %v1411 = vpop.f32.mrb[0].mxu0
      %v1412 = vpop.f32.mrb[0].mxu0
      %v1413 = vpop.f32.mrb[0].mxu0
      %1414 = vdwg.mxu0
      %v1415 = vadd.f32 %v1264, %v1351
      %v1416 = vadd.f32 %v1265, %v1353
      %v1417 = vadd.f32 %v1266, %v1402
      %v1418 = vadd.f32 %v1267, %v1355
      %v1419 = vadd.f32 %v1268, %v1357
      %v1420 = vadd.f32 %v1269, %v1405
      %v1421 = vadd.f32 %v1270, %v1361
      %v1422 = vadd.f32 %v1271, %v1363
      %v1423 = vadd.f32 %v1272, %v1410
      %1424 = vst [vmem:[#allocation4] sm:$0xff] %v1415
      %1425 = vst [vmem:[#allocation4 + $0x8] sm:$0xff] %v1416
      %1426 = vst [vmem:[#allocation4 + $0x10] sm:$0xff] %v1417
      %1427 = vst [vmem:[#allocation4 + $0x18] sm:$0xff] %v1418
      %1428 = vst [vmem:[#allocation4 + $0x20] sm:$0xff] %v1419
      %1429 = vst [vmem:[#allocation4 + $0x28] sm:$0xff] %v1420
      %1430 = vst [vmem:[#allocation4 + $0x30] sm:$0xff] %v1421
      %1431 = vst [vmem:[#allocation4 + $0x38] sm:$0xff] %v1422
      %1432 = vst [vmem:[#allocation4 + $0x40] sm:$0xff] %v1423
      %v1433 = vld [vmem:[#allocation2] sm:$0xff]
      %v1434 = vld [vmem:[#allocation2 + $0x8] sm:$0xff]
      %v1435 = vld [vmem:[#allocation2 + $0x10] sm:$0xff]
      %v1436 = vld [vmem:[#allocation2 + $0x18] sm:$0xff]
      %v1437 = vld [vmem:[#allocation2 + $0x20] sm:$0xf]
      %v1438 = vld [vmem:[#allocation2 + $0x28] sm:$0xf]
      %v1439 = vld [vmem:[#allocation2 + $0x30] sm:$0xf]
      %v1440 = vld [vmem:[#allocation2 + $0x38] sm:$0xf]
      %v1441 = vpack.c.bf16 %v1437, %v1433
      %v1442 = vpack.c.bf16 %v1438, %v1434
      %v1443 = vpack.c.bf16 %v1439, %v1435
      %v1444 = vpack.c.bf16 %v1440, %v1436
      %v1445 = vld [vmem:[#allocation4] sm:$0xff]
      %v1446 = vld [vmem:[#allocation4 + $0x8] sm:$0xff]
      %v1447 = vld [vmem:[#allocation4 + $0x10] sm:$0xff]
      %v1448 = vld [vmem:[#allocation4 + $0x18] sm:$0xff]
      %v1449 = vld [vmem:[#allocation4 + $0x20] sm:$0xff]
      %v1450 = vld [vmem:[#allocation4 + $0x28] sm:$0xff]
      %v1451 = vld [vmem:[#allocation4 + $0x30] sm:$0xff]
      %v1452 = vld [vmem:[#allocation4 + $0x38] sm:$0xff]
      %v1453 = vld [vmem:[#allocation4 + $0x40] sm:$0xff]
      %s1454 = scalar_lea.vmem %s2, 60
      %v1455 = vld [vmem:[%s1454] sm:$0xf]
      %v1456 = vld [vmem:[%s1454 + $0x4] sm:$0xf]
      %v1457 = vld [vmem:[%s1454 + $0x8] sm:$0xf]
      %v1461 = vunpack.c.l.b16 %v1455
      %v1462 = vunpack.c.l.b16 %v1456
      %v1463 = vunpack.c.l.b16 %v1457
      %v1464 = vpack.c.b16 %v1462, %v1461
      %v1465 = vpack.c.b16 %v1463, %v1463
      %1470 = vrot.lane.b32.xlu0 %v1441, 108
      %v1471 = vpop.permute.xlu0 %1470
      %1472 = vrot.lane.b32.xlu0 %v1442, 108
      %v1473 = vpop.permute.xlu0 %1472
      %1474 = vrot.lane.b32.xlu0 %v1443, 108
      %v1475 = vpop.permute.xlu0 %1474
      %1476 = vrot.lane.b32.xlu0 %v1444, 108
      %v1477 = vpop.permute.xlu0 %1476
      %vm1478 = vcmask 883712
      %v1479 = vsel %vm1478, %v1471, %v1473
      %v1480 = vsel %vm1478, %v1473, %v1475
      %v1481 = vsel %vm1478, %v1475, %v1477
      %v1483 = vsel %vm575, %v1464, 0
      %v1486 = vsel %vm575, %v1465, 0
      %v1489 = vsel %vm582, %v1479, 0
      %v1492 = vsel %vm582, %v1480, 0
      %v1495 = vsel %vm582, %v1481, 0
      %1497 = vmatprep.subr.bf16.mxu0 %v1492
      %1498 = vmatpush1.bf16.msra.mxu0 %v1489
      %1499 = vmatprep.subr.bf16.mxu0 0
      %1500 = vmatpush1.bf16.msra.mxu0 0
      %1501 = vmatprep.subr.bf16.mxu0 0
      %1502 = vmatpush1.bf16.msra.mxu0 0
      %1503 = vmatprep.subr.bf16.mxu0 0
      %1504 = vmatpush1.bf16.msra.mxu0 0
      %1505 = vmatprep.subr.bf16.mxu0 0
      %1506 = vmatpush1.bf16.msra.mxu0 0
      %1507 = vmatprep.subr.bf16.mxu0 0
      %1508 = vmatpush1.bf16.msra.mxu0 0
      %1509 = vmatprep.subr.bf16.mxu0 0
      %1510 = vmatpush1.bf16.msra.mxu0 0
      %1511 = vmatprep.subr.bf16.mxu0 0
      %1512 = vmatpush1.bf16.msra.mxu0 0
      %1513 = vmatprep.subr.bf16.mxu0 0
      %1514 = vmatpush1.bf16.msra.mxu0 0
      %1515 = vmatprep.subr.bf16.mxu0 0
      %1516 = vmatpush1.bf16.msra.mxu0 0
      %1517 = vmatprep.subr.bf16.mxu0 0
      %1518 = vmatpush1.bf16.msra.mxu0 0
      %1519 = vmatprep.subr.bf16.mxu0 0
      %1520 = vmatpush1.bf16.msra.mxu0 0
      %1521 = vmatprep.subr.bf16.mxu0 0
      %1522 = vmatpush1.bf16.msra.mxu0 0
      %1523 = vmatprep.subr.bf16.mxu0 0
      %1524 = vmatpush1.bf16.msra.mxu0 0
      %1525 = vmatprep.subr.bf16.mxu0 0
      %1526 = vmatpush1.bf16.msra.mxu0 0
      %1527 = vmatprep.subr.bf16.mxu0 0
      %1528 = vmatpush1.bf16.msra.mxu0 0
      %1529 = vmatprep.mubr.bf16.mxu0 0
      %1530 = vmatmul.mubr.bf16.gmra.mrb[0].mxu0 %v1483
      %v1531 = vpop.f32.mrb[0].mxu0
      %v1532 = vadd.f32 0.0, %v1531
      %v1533 = vpop.f32.mrb[0].mxu0
      %v1534 = vadd.f32 0.0, %v1533
      %v1535 = vpop.f32.mrb[0].mxu0
      %v1536 = vadd.f32 0.0, %v1535
      %v1537 = vpop.f32.mrb[0].mxu0
      %v1538 = vadd.f32 0.0, %v1537
      %1539 = vmatprep.mubr.bf16.mxu0 0
      %1540 = vmatmul.mubr.bf16.gmra.mrb[0].mxu0 %v1486
      %v1541 = vpop.f32.mrb[0].mxu0
      %v1542 = vadd.f32 0.0, %v1541
      %v1543 = vpop.f32.mrb[0].mxu0
      %v1544 = vadd.f32 0.0, %v1543
      %v1545 = vpop.f32.mrb[0].mxu0
      %v1546 = vpop.f32.mrb[0].mxu0
      %1547 = vdwg.mxu0
      %1548 = vmatprep.subr.bf16.mxu0 0
      %1549 = vmatpush1.bf16.msra.mxu0 %v1495
      %1550 = vmatprep.subr.bf16.mxu0 0
      %1551 = vmatpush1.bf16.msra.mxu0 0
      %1552 = vmatprep.subr.bf16.mxu0 0
      %1553 = vmatpush1.bf16.msra.mxu0 0
      %1554 = vmatprep.subr.bf16.mxu0 0
      %1555 = vmatpush1.bf16.msra.mxu0 0
      %1556 = vmatprep.subr.bf16.mxu0 0
      %1557 = vmatpush1.bf16.msra.mxu0 0
      %1558 = vmatprep.subr.bf16.mxu0 0
      %1559 = vmatpush1.bf16.msra.mxu0 0
      %1560 = vmatprep.subr.bf16.mxu0 0
      %1561 = vmatpush1.bf16.msra.mxu0 0
      %1562 = vmatprep.subr.bf16.mxu0 0
      %1563 = vmatpush1.bf16.msra.mxu0 0
      %1564 = vmatprep.subr.bf16.mxu0 0
      %1565 = vmatpush1.bf16.msra.mxu0 0
      %1566 = vmatprep.subr.bf16.mxu0 0
      %1567 = vmatpush1.bf16.msra.mxu0 0
      %1568 = vmatprep.subr.bf16.mxu0 0
      %1569 = vmatpush1.bf16.msra.mxu0 0
      %1570 = vmatprep.subr.bf16.mxu0 0
      %1571 = vmatpush1.bf16.msra.mxu0 0
      %1572 = vmatprep.subr.bf16.mxu0 0
      %1573 = vmatpush1.bf16.msra.mxu0 0
      %1574 = vmatprep.subr.bf16.mxu0 0
      %1575 = vmatpush1.bf16.msra.mxu0 0
      %1576 = vmatprep.subr.bf16.mxu0 0
      %1577 = vmatpush1.bf16.msra.mxu0 0
      %1578 = vmatprep.subr.bf16.mxu0 0
      %1579 = vmatpush1.bf16.msra.mxu0 0
      %1580 = vmatprep.mubr.bf16.mxu0 0
      %1581 = vmatmul.mubr.bf16.gmra.mrb[0].mxu0 %v1483
      %v1582 = vpop.f32.mrb[0].mxu0
      %v1583 = vadd.f32 0.0, %v1582
      %v1584 = vpop.f32.mrb[0].mxu0
      %v1585 = vpop.f32.mrb[0].mxu0
      %v1586 = vadd.f32 0.0, %v1585
      %v1587 = vpop.f32.mrb[0].mxu0
      %1588 = vmatprep.mubr.bf16.mxu0 0
      %1589 = vmatmul.mubr.bf16.gmra.mrb[0].mxu0 %v1486
      %v1590 = vpop.f32.mrb[0].mxu0
      %v1591 = vadd.f32 0.0, %v1590
      %v1592 = vpop.f32.mrb[0].mxu0
      %v1593 = vpop.f32.mrb[0].mxu0
      %v1594 = vpop.f32.mrb[0].mxu0
      %1595 = vdwg.mxu0
      %v1596 = vadd.f32 %v1445, %v1532
      %v1597 = vadd.f32 %v1446, %v1534
      %v1598 = vadd.f32 %v1447, %v1583
      %v1599 = vadd.f32 %v1448, %v1536
      %v1600 = vadd.f32 %v1449, %v1538
      %v1601 = vadd.f32 %v1450, %v1586
      %v1602 = vadd.f32 %v1451, %v1542
      %v1603 = vadd.f32 %v1452, %v1544
      %v1604 = vadd.f32 %v1453, %v1591
      %1605 = vst [vmem:[#allocation4] sm:$0xff] %v1596
      %1606 = vst [vmem:[#allocation4 + $0x8] sm:$0xff] %v1597
      %1607 = vst [vmem:[#allocation4 + $0x10] sm:$0xff] %v1598
      %1608 = vst [vmem:[#allocation4 + $0x18] sm:$0xff] %v1599
      %1609 = vst [vmem:[#allocation4 + $0x20] sm:$0xff] %v1600
      %1610 = vst [vmem:[#allocation4 + $0x28] sm:$0xff] %v1601
      %1611 = vst [vmem:[#allocation4 + $0x30] sm:$0xff] %v1602
      %1612 = vst [vmem:[#allocation4 + $0x38] sm:$0xff] %v1603
      %1613 = vst [vmem:[#allocation4 + $0x40] sm:$0xff] %v1604
      %v1614 = vld [vmem:[#allocation2] sm:$0xff]
      %v1615 = vld [vmem:[#allocation2 + $0x8] sm:$0xff]
      %v1616 = vld [vmem:[#allocation2 + $0x10] sm:$0xff]
      %v1617 = vld [vmem:[#allocation2 + $0x18] sm:$0xff]
      %v1618 = vld [vmem:[#allocation2 + $0x20] sm:$0xf]
      %v1619 = vld [vmem:[#allocation2 + $0x28] sm:$0xf]
      %v1620 = vld [vmem:[#allocation2 + $0x30] sm:$0xf]
      %v1621 = vld [vmem:[#allocation2 + $0x38] sm:$0xf]
      %v1622 = vpack.c.bf16 %v1618, %v1614
      %v1623 = vpack.c.bf16 %v1619, %v1615
      %v1624 = vpack.c.bf16 %v1620, %v1616
      %v1625 = vpack.c.bf16 %v1621, %v1617
      %v1626 = vld [vmem:[#allocation4] sm:$0xff]
      %v1627 = vld [vmem:[#allocation4 + $0x8] sm:$0xff]
      %v1628 = vld [vmem:[#allocation4 + $0x10] sm:$0xff]
      %v1629 = vld [vmem:[#allocation4 + $0x18] sm:$0xff]
      %v1630 = vld [vmem:[#allocation4 + $0x20] sm:$0xff]
      %v1631 = vld [vmem:[#allocation4 + $0x28] sm:$0xff]
      %v1632 = vld [vmem:[#allocation4 + $0x30] sm:$0xff]
      %v1633 = vld [vmem:[#allocation4 + $0x38] sm:$0xff]
      %v1634 = vld [vmem:[#allocation4 + $0x40] sm:$0xff]
      %s1635 = scalar_lea.vmem %s2, 72
      %v1636 = vld [vmem:[%s1635] sm:$0xf]
      %v1637 = vld [vmem:[%s1635 + $0x4] sm:$0xf]
      %v1638 = vld [vmem:[%s1635 + $0x8] sm:$0xf]
      %v1642 = vunpack.c.l.b16 %v1636
      %v1643 = vunpack.c.l.b16 %v1637
      %v1644 = vunpack.c.l.b16 %v1638
      %v1645 = vpack.c.b16 %v1643, %v1642
      %v1646 = vpack.c.b16 %v1644, %v1644
      %1651 = vrot.lane.b32.xlu0 %v1622, 92
      %v1652 = vpop.permute.xlu0 %1651
      %1653 = vrot.lane.b32.xlu0 %v1623, 92
      %v1654 = vpop.permute.xlu0 %1653
      %1655 = vrot.lane.b32.xlu0 %v1624, 92
      %v1656 = vpop.permute.xlu0 %1655
      %1657 = vrot.lane.b32.xlu0 %v1625, 92
      %v1658 = vpop.permute.xlu0 %1657
      %vm1659 = vcmask 752640
      %v1660 = vsel %vm1659, %v1652, %v1654
      %v1661 = vsel %vm1659, %v1654, %v1656
      %v1662 = vsel %vm1659, %v1656, %v1658
      %v1664 = vsel %vm575, %v1645, 0
      %v1667 = vsel %vm575, %v1646, 0
      %v1670 = vsel %vm582, %v1660, 0
      %v1673 = vsel %vm582, %v1661, 0
      %v1676 = vsel %vm582, %v1662, 0
      %1678 = vmatprep.subr.bf16.mxu0 %v1673
      %1679 = vmatpush1.bf16.msra.mxu0 %v1670
      %1680 = vmatprep.subr.bf16.mxu0 0
      %1681 = vmatpush1.bf16.msra.mxu0 0
      %1682 = vmatprep.subr.bf16.mxu0 0
      %1683 = vmatpush1.bf16.msra.mxu0 0
      %1684 = vmatprep.subr.bf16.mxu0 0
      %1685 = vmatpush1.bf16.msra.mxu0 0
      %1686 = vmatprep.subr.bf16.mxu0 0
      %1687 = vmatpush1.bf16.msra.mxu0 0
      %1688 = vmatprep.subr.bf16.mxu0 0
      %1689 = vmatpush1.bf16.msra.mxu0 0
      %1690 = vmatprep.subr.bf16.mxu0 0
      %1691 = vmatpush1.bf16.msra.mxu0 0
      %1692 = vmatprep.subr.bf16.mxu0 0
      %1693 = vmatpush1.bf16.msra.mxu0 0
      %1694 = vmatprep.subr.bf16.mxu0 0
      %1695 = vmatpush1.bf16.msra.mxu0 0
      %1696 = vmatprep.subr.bf16.mxu0 0
      %1697 = vmatpush1.bf16.msra.mxu0 0
      %1698 = vmatprep.subr.bf16.mxu0 0
      %1699 = vmatpush1.bf16.msra.mxu0 0
      %1700 = vmatprep.subr.bf16.mxu0 0
      %1701 = vmatpush1.bf16.msra.mxu0 0
      %1702 = vmatprep.subr.bf16.mxu0 0
      %1703 = vmatpush1.bf16.msra.mxu0 0
      %1704 = vmatprep.subr.bf16.mxu0 0
      %1705 = vmatpush1.bf16.msra.mxu0 0
      %1706 = vmatprep.subr.bf16.mxu0 0
      %1707 = vmatpush1.bf16.msra.mxu0 0
      %1708 = vmatprep.subr.bf16.mxu0 0
      %1709 = vmatpush1.bf16.msra.mxu0 0
      %1710 = vmatprep.mubr.bf16.mxu0 0
      %1711 = vmatmul.mubr.bf16.gmra.mrb[0].mxu0 %v1664
      %v1712 = vpop.f32.mrb[0].mxu0
      %v1713 = vadd.f32 0.0, %v1712
      %v1714 = vpop.f32.mrb[0].mxu0
      %v1715 = vadd.f32 0.0, %v1714
      %v1716 = vpop.f32.mrb[0].mxu0
      %v1717 = vadd.f32 0.0, %v1716
      %v1718 = vpop.f32.mrb[0].mxu0
      %v1719 = vadd.f32 0.0, %v1718
      %1720 = vmatprep.mubr.bf16.mxu0 0
      %1721 = vmatmul.mubr.bf16.gmra.mrb[0].mxu0 %v1667
      %v1722 = vpop.f32.mrb[0].mxu0
      %v1723 = vadd.f32 0.0, %v1722
      %v1724 = vpop.f32.mrb[0].mxu0
      %v1725 = vadd.f32 0.0, %v1724
      %v1726 = vpop.f32.mrb[0].mxu0
      %v1727 = vpop.f32.mrb[0].mxu0
      %1728 = vdwg.mxu0
      %1729 = vmatprep.subr.bf16.mxu0 0
      %1730 = vmatpush1.bf16.msra.mxu0 %v1676
      %1731 = vmatprep.subr.bf16.mxu0 0
      %1732 = vmatpush1.bf16.msra.mxu0 0
      %1733 = vmatprep.subr.bf16.mxu0 0
      %1734 = vmatpush1.bf16.msra.mxu0 0
      %1735 = vmatprep.subr.bf16.mxu0 0
      %1736 = vmatpush1.bf16.msra.mxu0 0
      %1737 = vmatprep.subr.bf16.mxu0 0
      %1738 = vmatpush1.bf16.msra.mxu0 0
      %1739 = vmatprep.subr.bf16.mxu0 0
      %1740 = vmatpush1.bf16.msra.mxu0 0
      %1741 = vmatprep.subr.bf16.mxu0 0
      %1742 = vmatpush1.bf16.msra.mxu0 0
      %1743 = vmatprep.subr.bf16.mxu0 0
      %1744 = vmatpush1.bf16.msra.mxu0 0
      %1745 = vmatprep.subr.bf16.mxu0 0
      %1746 = vmatpush1.bf16.msra.mxu0 0
      %1747 = vmatprep.subr.bf16.mxu0 0
      %1748 = vmatpush1.bf16.msra.mxu0 0
      %1749 = vmatprep.subr.bf16.mxu0 0
      %1750 = vmatpush1.bf16.msra.mxu0 0
      %1751 = vmatprep.subr.bf16.mxu0 0
      %1752 = vmatpush1.bf16.msra.mxu0 0
      %1753 = vmatprep.subr.bf16.mxu0 0
      %1754 = vmatpush1.bf16.msra.mxu0 0
      %1755 = vmatprep.subr.bf16.mxu0 0
      %1756 = vmatpush1.bf16.msra.mxu0 0
      %1757 = vmatprep.subr.bf16.mxu0 0
      %1758 = vmatpush1.bf16.msra.mxu0 0
      %1759 = vmatprep.subr.bf16.mxu0 0
      %1760 = vmatpush1.bf16.msra.mxu0 0
      %1761 = vmatprep.mubr.bf16.mxu0 0
      %1762 = vmatmul.mubr.bf16.gmra.mrb[0].mxu0 %v1664
      %v1763 = vpop.f32.mrb[0].mxu0
      %v1764 = vadd.f32 0.0, %v1763
      %v1765 = vpop.f32.mrb[0].mxu0
      %v1766 = vpop.f32.mrb[0].mxu0
      %v1767 = vadd.f32 0.0, %v1766
      %v1768 = vpop.f32.mrb[0].mxu0
      %1769 = vmatprep.mubr.bf16.mxu0 0
      %1770 = vmatmul.mubr.bf16.gmra.mrb[0].mxu0 %v1667
      %v1771 = vpop.f32.mrb[0].mxu0
      %v1772 = vadd.f32 0.0, %v1771
      %v1773 = vpop.f32.mrb[0].mxu0
      %v1774 = vpop.f32.mrb[0].mxu0
      %v1775 = vpop.f32.mrb[0].mxu0
      %1776 = vdwg.mxu0
      %v1777 = vadd.f32 %v1626, %v1713
      %v1778 = vadd.f32 %v1627, %v1715
      %v1779 = vadd.f32 %v1628, %v1764
      %v1780 = vadd.f32 %v1629, %v1717
      %v1781 = vadd.f32 %v1630, %v1719
      %v1782 = vadd.f32 %v1631, %v1767
      %v1783 = vadd.f32 %v1632, %v1723
      %v1784 = vadd.f32 %v1633, %v1725
      %v1785 = vadd.f32 %v1634, %v1772
      %1786 = vst [vmem:[#allocation4] sm:$0xff] %v1777
      %1787 = vst [vmem:[#allocation4 + $0x8] sm:$0xff] %v1778
      %1788 = vst [vmem:[#allocation4 + $0x10] sm:$0xff] %v1779
      %1789 = vst [vmem:[#allocation4 + $0x18] sm:$0xff] %v1780
      %1790 = vst [vmem:[#allocation4 + $0x20] sm:$0xff] %v1781
      %1791 = vst [vmem:[#allocation4 + $0x28] sm:$0xff] %v1782
      %1792 = vst [vmem:[#allocation4 + $0x30] sm:$0xff] %v1783
      %1793 = vst [vmem:[#allocation4 + $0x38] sm:$0xff] %v1784
      %1794 = vst [vmem:[#allocation4 + $0x40] sm:$0xff] %v1785
      %v1795 = vld [vmem:[#allocation2] sm:$0xff]
      %v1796 = vld [vmem:[#allocation2 + $0x8] sm:$0xff]
      %v1797 = vld [vmem:[#allocation2 + $0x10] sm:$0xff]
      %v1798 = vld [vmem:[#allocation2 + $0x18] sm:$0xff]
      %v1799 = vld [vmem:[#allocation2 + $0x20] sm:$0xf]
      %v1800 = vld [vmem:[#allocation2 + $0x28] sm:$0xf]
      %v1801 = vld [vmem:[#allocation2 + $0x30] sm:$0xf]
      %v1802 = vld [vmem:[#allocation2 + $0x38] sm:$0xf]
      %v1803 = vpack.c.bf16 %v1799, %v1795
      %v1804 = vpack.c.bf16 %v1800, %v1796
      %v1805 = vpack.c.bf16 %v1801, %v1797
      %v1806 = vpack.c.bf16 %v1802, %v1798
      %v1807 = vld [vmem:[#allocation4] sm:$0xff]
      %v1808 = vld [vmem:[#allocation4 + $0x8] sm:$0xff]
      %v1809 = vld [vmem:[#allocation4 + $0x10] sm:$0xff]
      %v1810 = vld [vmem:[#allocation4 + $0x18] sm:$0xff]
      %v1811 = vld [vmem:[#allocation4 + $0x20] sm:$0xff]
      %v1812 = vld [vmem:[#allocation4 + $0x28] sm:$0xff]
      %v1813 = vld [vmem:[#allocation4 + $0x30] sm:$0xff]
      %v1814 = vld [vmem:[#allocation4 + $0x38] sm:$0xff]
      %v1815 = vld [vmem:[#allocation4 + $0x40] sm:$0xff]
      %s1816 = scalar_lea.vmem %s2, 84
      %v1817 = vld [vmem:[%s1816] sm:$0xf]
      %v1818 = vld [vmem:[%s1816 + $0x4] sm:$0xf]
      %v1819 = vld [vmem:[%s1816 + $0x8] sm:$0xf]
      %v1823 = vunpack.c.l.b16 %v1817
      %v1824 = vunpack.c.l.b16 %v1818
      %v1825 = vunpack.c.l.b16 %v1819
      %v1826 = vpack.c.b16 %v1824, %v1823
      %v1827 = vpack.c.b16 %v1825, %v1825
      %1832 = vrot.lane.b32.xlu0 %v1803, 91
      %v1833 = vpop.permute.xlu0 %1832
      %1834 = vrot.lane.b32.xlu0 %v1804, 91
      %v1835 = vpop.permute.xlu0 %1834
      %1836 = vrot.lane.b32.xlu0 %v1805, 91
      %v1837 = vpop.permute.xlu0 %1836
      %1838 = vrot.lane.b32.xlu0 %v1806, 91
      %v1839 = vpop.permute.xlu0 %1838
      %vm1840 = vcmask 744448
      %v1841 = vsel %vm1840, %v1833, %v1835
      %v1842 = vsel %vm1840, %v1835, %v1837
      %v1843 = vsel %vm1840, %v1837, %v1839
      %v1845 = vsel %vm575, %v1826, 0
      %v1848 = vsel %vm575, %v1827, 0
      %v1851 = vsel %vm582, %v1841, 0
      %v1854 = vsel %vm582, %v1842, 0
      %v1857 = vsel %vm582, %v1843, 0
      %1859 = vmatprep.subr.bf16.mxu0 %v1854
      %1860 = vmatpush1.bf16.msra.mxu0 %v1851
      %1861 = vmatprep.subr.bf16.mxu0 0
      %1862 = vmatpush1.bf16.msra.mxu0 0
      %1863 = vmatprep.subr.bf16.mxu0 0
      %1864 = vmatpush1.bf16.msra.mxu0 0
      %1865 = vmatprep.subr.bf16.mxu0 0
      %1866 = vmatpush1.bf16.msra.mxu0 0
      %1867 = vmatprep.subr.bf16.mxu0 0
      %1868 = vmatpush1.bf16.msra.mxu0 0
      %1869 = vmatprep.subr.bf16.mxu0 0
      %1870 = vmatpush1.bf16.msra.mxu0 0
      %1871 = vmatprep.subr.bf16.mxu0 0
      %1872 = vmatpush1.bf16.msra.mxu0 0
      %1873 = vmatprep.subr.bf16.mxu0 0
      %1874 = vmatpush1.bf16.msra.mxu0 0
      %1875 = vmatprep.subr.bf16.mxu0 0
      %1876 = vmatpush1.bf16.msra.mxu0 0
      %1877 = vmatprep.subr.bf16.mxu0 0
      %1878 = vmatpush1.bf16.msra.mxu0 0
      %1879 = vmatprep.subr.bf16.mxu0 0
      %1880 = vmatpush1.bf16.msra.mxu0 0
      %1881 = vmatprep.subr.bf16.mxu0 0
      %1882 = vmatpush1.bf16.msra.mxu0 0
      %1883 = vmatprep.subr.bf16.mxu0 0
      %1884 = vmatpush1.bf16.msra.mxu0 0
      %1885 = vmatprep.subr.bf16.mxu0 0
      %1886 = vmatpush1.bf16.msra.mxu0 0
      %1887 = vmatprep.subr.bf16.mxu0 0
      %1888 = vmatpush1.bf16.msra.mxu0 0
      %1889 = vmatprep.subr.bf16.mxu0 0
      %1890 = vmatpush1.bf16.msra.mxu0 0
      %1891 = vmatprep.mubr.bf16.mxu0 0
      %1892 = vmatmul.mubr.bf16.gmra.mrb[0].mxu0 %v1845
      %v1893 = vpop.f32.mrb[0].mxu0
      %v1894 = vadd.f32 0.0, %v1893
      %v1895 = vpop.f32.mrb[0].mxu0
      %v1896 = vadd.f32 0.0, %v1895
      %v1897 = vpop.f32.mrb[0].mxu0
      %v1898 = vadd.f32 0.0, %v1897
      %v1899 = vpop.f32.mrb[0].mxu0
      %v1900 = vadd.f32 0.0, %v1899
      %1901 = vmatprep.mubr.bf16.mxu0 0
      %1902 = vmatmul.mubr.bf16.gmra.mrb[0].mxu0 %v1848
      %v1903 = vpop.f32.mrb[0].mxu0
      %v1904 = vadd.f32 0.0, %v1903
      %v1905 = vpop.f32.mrb[0].mxu0
      %v1906 = vadd.f32 0.0, %v1905
      %v1907 = vpop.f32.mrb[0].mxu0
      %v1908 = vpop.f32.mrb[0].mxu0
      %1909 = vdwg.mxu0
      %1910 = vmatprep.subr.bf16.mxu0 0
      %1911 = vmatpush1.bf16.msra.mxu0 %v1857
      %1912 = vmatprep.subr.bf16.mxu0 0
      %1913 = vmatpush1.bf16.msra.mxu0 0
      %1914 = vmatprep.subr.bf16.mxu0 0
      %1915 = vmatpush1.bf16.msra.mxu0 0
      %1916 = vmatprep.subr.bf16.mxu0 0
      %1917 = vmatpush1.bf16.msra.mxu0 0
      %1918 = vmatprep.subr.bf16.mxu0 0
      %1919 = vmatpush1.bf16.msra.mxu0 0
      %1920 = vmatprep.subr.bf16.mxu0 0
      %1921 = vmatpush1.bf16.msra.mxu0 0
      %1922 = vmatprep.subr.bf16.mxu0 0
      %1923 = vmatpush1.bf16.msra.mxu0 0
      %1924 = vmatprep.subr.bf16.mxu0 0
      %1925 = vmatpush1.bf16.msra.mxu0 0
      %1926 = vmatprep.subr.bf16.mxu0 0
      %1927 = vmatpush1.bf16.msra.mxu0 0
      %1928 = vmatprep.subr.bf16.mxu0 0
      %1929 = vmatpush1.bf16.msra.mxu0 0
      %1930 = vmatprep.subr.bf16.mxu0 0
      %1931 = vmatpush1.bf16.msra.mxu0 0
      %1932 = vmatprep.subr.bf16.mxu0 0
      %1933 = vmatpush1.bf16.msra.mxu0 0
      %1934 = vmatprep.subr.bf16.mxu0 0
      %1935 = vmatpush1.bf16.msra.mxu0 0
      %1936 = vmatprep.subr.bf16.mxu0 0
      %1937 = vmatpush1.bf16.msra.mxu0 0
      %1938 = vmatprep.subr.bf16.mxu0 0
      %1939 = vmatpush1.bf16.msra.mxu0 0
      %1940 = vmatprep.subr.bf16.mxu0 0
      %1941 = vmatpush1.bf16.msra.mxu0 0
      %1942 = vmatprep.mubr.bf16.mxu0 0
      %1943 = vmatmul.mubr.bf16.gmra.mrb[0].mxu0 %v1845
      %v1944 = vpop.f32.mrb[0].mxu0
      %v1945 = vadd.f32 0.0, %v1944
      %v1946 = vpop.f32.mrb[0].mxu0
      %v1947 = vpop.f32.mrb[0].mxu0
      %v1948 = vadd.f32 0.0, %v1947
      %v1949 = vpop.f32.mrb[0].mxu0
      %1950 = vmatprep.mubr.bf16.mxu0 0
      %1951 = vmatmul.mubr.bf16.gmra.mrb[0].mxu0 %v1848
      %v1952 = vpop.f32.mrb[0].mxu0
      %v1953 = vadd.f32 0.0, %v1952
      %v1954 = vpop.f32.mrb[0].mxu0
      %v1955 = vpop.f32.mrb[0].mxu0
      %v1956 = vpop.f32.mrb[0].mxu0
      %1957 = vdwg.mxu0
      %v1958 = vadd.f32 %v1807, %v1894
      %v1959 = vadd.f32 %v1808, %v1896
      %v1960 = vadd.f32 %v1809, %v1945
      %v1961 = vadd.f32 %v1810, %v1898
      %v1962 = vadd.f32 %v1811, %v1900
      %v1963 = vadd.f32 %v1812, %v1948
      %v1964 = vadd.f32 %v1813, %v1904
      %v1965 = vadd.f32 %v1814, %v1906
      %v1966 = vadd.f32 %v1815, %v1953
      %1967 = vst [vmem:[#allocation4] sm:$0xff] %v1958
      %1968 = vst [vmem:[#allocation4 + $0x8] sm:$0xff] %v1959
      %1969 = vst [vmem:[#allocation4 + $0x10] sm:$0xff] %v1960
      %1970 = vst [vmem:[#allocation4 + $0x18] sm:$0xff] %v1961
      %1971 = vst [vmem:[#allocation4 + $0x20] sm:$0xff] %v1962
      %1972 = vst [vmem:[#allocation4 + $0x28] sm:$0xff] %v1963
      %1973 = vst [vmem:[#allocation4 + $0x30] sm:$0xff] %v1964
      %1974 = vst [vmem:[#allocation4 + $0x38] sm:$0xff] %v1965
      %1975 = vst [vmem:[#allocation4 + $0x40] sm:$0xff] %v1966
      %v1976 = vld [vmem:[#allocation2] sm:$0xff]
      %v1977 = vld [vmem:[#allocation2 + $0x8] sm:$0xff]
      %v1978 = vld [vmem:[#allocation2 + $0x10] sm:$0xff]
      %v1979 = vld [vmem:[#allocation2 + $0x18] sm:$0xff]
      %v1980 = vld [vmem:[#allocation2 + $0x20] sm:$0xf]
      %v1981 = vld [vmem:[#allocation2 + $0x28] sm:$0xf]
      %v1982 = vld [vmem:[#allocation2 + $0x30] sm:$0xf]
      %v1983 = vld [vmem:[#allocation2 + $0x38] sm:$0xf]
      %v1984 = vpack.c.bf16 %v1980, %v1976
      %v1985 = vpack.c.bf16 %v1981, %v1977
      %v1986 = vpack.c.bf16 %v1982, %v1978
      %v1987 = vpack.c.bf16 %v1983, %v1979
      %v1988 = vld [vmem:[#allocation4] sm:$0xff]
      %v1989 = vld [vmem:[#allocation4 + $0x8] sm:$0xff]
      %v1990 = vld [vmem:[#allocation4 + $0x10] sm:$0xff]
      %v1991 = vld [vmem:[#allocation4 + $0x18] sm:$0xff]
      %v1992 = vld [vmem:[#allocation4 + $0x20] sm:$0xff]
      %v1993 = vld [vmem:[#allocation4 + $0x28] sm:$0xff]
      %v1994 = vld [vmem:[#allocation4 + $0x30] sm:$0xff]
      %v1995 = vld [vmem:[#allocation4 + $0x38] sm:$0xff]
      %v1996 = vld [vmem:[#allocation4 + $0x40] sm:$0xff]
      %s1997 = scalar_lea.vmem %s2, 96
      %v1998 = vld [vmem:[%s1997] sm:$0xf]
      %v1999 = vld [vmem:[%s1997 + $0x4] sm:$0xf]
      %v2000 = vld [vmem:[%s1997 + $0x8] sm:$0xf]
      %v2004 = vunpack.c.l.b16 %v1998
      %v2005 = vunpack.c.l.b16 %v1999
      %v2006 = vunpack.c.l.b16 %v2000
      %v2007 = vpack.c.b16 %v2005, %v2004
      %v2008 = vpack.c.b16 %v2006, %v2006
      %2013 = vrot.lane.b32.xlu0 %v1984, 90
      %v2014 = vpop.permute.xlu0 %2013
      %2015 = vrot.lane.b32.xlu0 %v1985, 90
      %v2016 = vpop.permute.xlu0 %2015
      %2017 = vrot.lane.b32.xlu0 %v1986, 90
      %v2018 = vpop.permute.xlu0 %2017
      %2019 = vrot.lane.b32.xlu0 %v1987, 90
      %v2020 = vpop.permute.xlu0 %2019
      %vm2021 = vcmask 736256
      %v2022 = vsel %vm2021, %v2014, %v2016
      %v2023 = vsel %vm2021, %v2016, %v2018
      %v2024 = vsel %vm2021, %v2018, %v2020
      %v2026 = vsel %vm575, %v2007, 0
      %v2029 = vsel %vm575, %v2008, 0
      %v2032 = vsel %vm582, %v2022, 0
      %v2035 = vsel %vm582, %v2023, 0
      %v2038 = vsel %vm582, %v2024, 0
      %2040 = vmatprep.subr.bf16.mxu0 %v2035
      %2041 = vmatpush1.bf16.msra.mxu0 %v2032
      %2042 = vmatprep.subr.bf16.mxu0 0
      %2043 = vmatpush1.bf16.msra.mxu0 0
      %2044 = vmatprep.subr.bf16.mxu0 0
      %2045 = vmatpush1.bf16.msra.mxu0 0
      %2046 = vmatprep.subr.bf16.mxu0 0
      %2047 = vmatpush1.bf16.msra.mxu0 0
      %2048 = vmatprep.subr.bf16.mxu0 0
      %2049 = vmatpush1.bf16.msra.mxu0 0
      %2050 = vmatprep.subr.bf16.mxu0 0
      %2051 = vmatpush1.bf16.msra.mxu0 0
      %2052 = vmatprep.subr.bf16.mxu0 0
      %2053 = vmatpush1.bf16.msra.mxu0 0
      %2054 = vmatprep.subr.bf16.mxu0 0
      %2055 = vmatpush1.bf16.msra.mxu0 0
      %2056 = vmatprep.subr.bf16.mxu0 0
      %2057 = vmatpush1.bf16.msra.mxu0 0
      %2058 = vmatprep.subr.bf16.mxu0 0
      %2059 = vmatpush1.bf16.msra.mxu0 0
      %2060 = vmatprep.subr.bf16.mxu0 0
      %2061 = vmatpush1.bf16.msra.mxu0 0
      %2062 = vmatprep.subr.bf16.mxu0 0
      %2063 = vmatpush1.bf16.msra.mxu0 0
      %2064 = vmatprep.subr.bf16.mxu0 0
      %2065 = vmatpush1.bf16.msra.mxu0 0
      %2066 = vmatprep.subr.bf16.mxu0 0
      %2067 = vmatpush1.bf16.msra.mxu0 0
      %2068 = vmatprep.subr.bf16.mxu0 0
      %2069 = vmatpush1.bf16.msra.mxu0 0
      %2070 = vmatprep.subr.bf16.mxu0 0
      %2071 = vmatpush1.bf16.msra.mxu0 0
      %2072 = vmatprep.mubr.bf16.mxu0 0
      %2073 = vmatmul.mubr.bf16.gmra.mrb[0].mxu0 %v2026
      %v2074 = vpop.f32.mrb[0].mxu0
      %v2075 = vadd.f32 0.0, %v2074
      %v2076 = vpop.f32.mrb[0].mxu0
      %v2077 = vadd.f32 0.0, %v2076
      %v2078 = vpop.f32.mrb[0].mxu0
      %v2079 = vadd.f32 0.0, %v2078
      %v2080 = vpop.f32.mrb[0].mxu0
      %v2081 = vadd.f32 0.0, %v2080
      %2082 = vmatprep.mubr.bf16.mxu0 0
      %2083 = vmatmul.mubr.bf16.gmra.mrb[0].mxu0 %v2029
      %v2084 = vpop.f32.mrb[0].mxu0
      %v2085 = vadd.f32 0.0, %v2084
      %v2086 = vpop.f32.mrb[0].mxu0
      %v2087 = vadd.f32 0.0, %v2086
      %v2088 = vpop.f32.mrb[0].mxu0
      %v2089 = vpop.f32.mrb[0].mxu0
      %2090 = vdwg.mxu0
      %2091 = vmatprep.subr.bf16.mxu0 0
      %2092 = vmatpush1.bf16.msra.mxu0 %v2038
      %2093 = vmatprep.subr.bf16.mxu0 0
      %2094 = vmatpush1.bf16.msra.mxu0 0
      %2095 = vmatprep.subr.bf16.mxu0 0
      %2096 = vmatpush1.bf16.msra.mxu0 0
      %2097 = vmatprep.subr.bf16.mxu0 0
      %2098 = vmatpush1.bf16.msra.mxu0 0
      %2099 = vmatprep.subr.bf16.mxu0 0
      %2100 = vmatpush1.bf16.msra.mxu0 0
      %2101 = vmatprep.subr.bf16.mxu0 0
      %2102 = vmatpush1.bf16.msra.mxu0 0
      %2103 = vmatprep.subr.bf16.mxu0 0
      %2104 = vmatpush1.bf16.msra.mxu0 0
      %2105 = vmatprep.subr.bf16.mxu0 0
      %2106 = vmatpush1.bf16.msra.mxu0 0
      %2107 = vmatprep.subr.bf16.mxu0 0
      %2108 = vmatpush1.bf16.msra.mxu0 0
      %2109 = vmatprep.subr.bf16.mxu0 0
      %2110 = vmatpush1.bf16.msra.mxu0 0
      %2111 = vmatprep.subr.bf16.mxu0 0
      %2112 = vmatpush1.bf16.msra.mxu0 0
      %2113 = vmatprep.subr.bf16.mxu0 0
      %2114 = vmatpush1.bf16.msra.mxu0 0
      %2115 = vmatprep.subr.bf16.mxu0 0
      %2116 = vmatpush1.bf16.msra.mxu0 0
      %2117 = vmatprep.subr.bf16.mxu0 0
      %2118 = vmatpush1.bf16.msra.mxu0 0
      %2119 = vmatprep.subr.bf16.mxu0 0
      %2120 = vmatpush1.bf16.msra.mxu0 0
      %2121 = vmatprep.subr.bf16.mxu0 0
      %2122 = vmatpush1.bf16.msra.mxu0 0
      %2123 = vmatprep.mubr.bf16.mxu0 0
      %2124 = vmatmul.mubr.bf16.gmra.mrb[0].mxu0 %v2026
      %v2125 = vpop.f32.mrb[0].mxu0
      %v2126 = vadd.f32 0.0, %v2125
      %v2127 = vpop.f32.mrb[0].mxu0
      %v2128 = vpop.f32.mrb[0].mxu0
      %v2129 = vadd.f32 0.0, %v2128
      %v2130 = vpop.f32.mrb[0].mxu0
      %2131 = vmatprep.mubr.bf16.mxu0 0
      %2132 = vmatmul.mubr.bf16.gmra.mrb[0].mxu0 %v2029
      %v2133 = vpop.f32.mrb[0].mxu0
      %v2134 = vadd.f32 0.0, %v2133
      %v2135 = vpop.f32.mrb[0].mxu0
      %v2136 = vpop.f32.mrb[0].mxu0
      %v2137 = vpop.f32.mrb[0].mxu0
      %2138 = vdwg.mxu0
      %v2139 = vadd.f32 %v1988, %v2075
      %v2140 = vadd.f32 %v1989, %v2077
      %v2141 = vadd.f32 %v1990, %v2126
      %v2142 = vadd.f32 %v1991, %v2079
      %v2143 = vadd.f32 %v1992, %v2081
      %v2144 = vadd.f32 %v1993, %v2129
      %v2145 = vadd.f32 %v1994, %v2085
      %v2146 = vadd.f32 %v1995, %v2087
      %v2147 = vadd.f32 %v1996, %v2134
      %2148 = vst [vmem:[#allocation4] sm:$0xff] %v2139
      %2149 = vst [vmem:[#allocation4 + $0x8] sm:$0xff] %v2140
      %2150 = vst [vmem:[#allocation4 + $0x10] sm:$0xff] %v2141
      %2151 = vst [vmem:[#allocation4 + $0x18] sm:$0xff] %v2142
      %2152 = vst [vmem:[#allocation4 + $0x20] sm:$0xff] %v2143
      %2153 = vst [vmem:[#allocation4 + $0x28] sm:$0xff] %v2144
      %2154 = vst [vmem:[#allocation4 + $0x30] sm:$0xff] %v2145
      %2155 = vst [vmem:[#allocation4 + $0x38] sm:$0xff] %v2146
      %2156 = vst [vmem:[#allocation4 + $0x40] sm:$0xff] %v2147
      %v2157 = vld [vmem:[#allocation4] sm:$0xff]
      %v2158 = vld [vmem:[#allocation4 + $0x8] sm:$0xff]
      %v2159 = vld [vmem:[#allocation4 + $0x10] sm:$0xff]
      %v2160 = vxor.u32 %v2157, 2147483648
      %v2161 = vxor.u32 %v2158, 2147483648
      %v2162 = vxor.u32 %v2159, 2147483648
      %v2163 = vmul.f32 %v2160, 1.442695
      %v2164 = vpow.pop %v2163
      %v2165 = vmul.f32 %v2161, 1.442695
      %v2166 = vpow.pop %v2165
      %v2167 = vmul.f32 %v2162, 1.442695
      %v2168 = vpow.pop %v2167
      %v2169 = vadd.f32 %v2164, 1.0
      %v2170 = vadd.f32 %v2166, 1.0
      %v2171 = vadd.f32 %v2168, 1.0
      %v2172 = vrcp.pop %v2169
      %v2173 = vmul.f32 1.0, %v2172
      %v2174 = vrcp.pop %v2170
      %v2175 = vmul.f32 1.0, %v2174
      %v2176 = vrcp.pop %v2171
      %v2177 = vmul.f32 1.0, %v2176
      %v2178 = vld [vmem:[#allocation4 + $0x18] sm:$0xff]
      %v2179 = vld [vmem:[#allocation4 + $0x20] sm:$0xff]
      %v2180 = vld [vmem:[#allocation4 + $0x28] sm:$0xff]
      %v2181 = vxor.u32 %v2178, 2147483648
      %v2182 = vxor.u32 %v2179, 2147483648
      %v2183 = vxor.u32 %v2180, 2147483648
      %v2184 = vmul.f32 %v2181, 1.442695
      %v2185 = vpow.pop %v2184
      %v2186 = vmul.f32 %v2182, 1.442695
      %v2187 = vpow.pop %v2186
      %v2188 = vmul.f32 %v2183, 1.442695
      %v2189 = vpow.pop %v2188
      %v2190 = vadd.f32 %v2185, 1.0
      %v2191 = vadd.f32 %v2187, 1.0
      %v2192 = vadd.f32 %v2189, 1.0
      %v2193 = vrcp.pop %v2190
      %v2194 = vmul.f32 1.0, %v2193
      %v2195 = vrcp.pop %v2191
      %v2196 = vmul.f32 1.0, %v2195
      %v2197 = vrcp.pop %v2192
      %v2198 = vmul.f32 1.0, %v2197
      %v2199 = vld [vmem:[#allocation2] sm:$0xf0]
      %v2200 = vld [vmem:[#allocation2 + $0x8] sm:$0xf0]
      %v2201 = vld [vmem:[#allocation2 + $0x10] sm:$0xf0]
      %v2202 = vld [vmem:[#allocation2 + $0x18] sm:$0xf0]
      %v2203 = vld [vmem:[#allocation2 + $0x20] sm:$0xf]
      %v2204 = vld [vmem:[#allocation2 + $0x28] sm:$0xf]
      %v2205 = vld [vmem:[#allocation2 + $0x30] sm:$0xf]
      %v2206 = vld [vmem:[#allocation2 + $0x38] sm:$0xf]
      %v2210 = vrot.slane %v2194, 4
      %v2211 = vrot.slane %v2196, 4
      %v2212 = vrot.slane %v2198, 4
      %2213 = vrot.lane.b32.xlu0 %v2210, 19
      %v2214 = vpop.permute.xlu0 %2213
      %2215 = vrot.lane.b32.xlu0 %v2211, 19
      %v2216 = vpop.permute.xlu0 %2215
      %2217 = vrot.lane.b32.xlu0 %v2212, 19
      %v2218 = vpop.permute.xlu0 %2217
      %vm2219 = vcmask 154624
      %v2220 = vsel %vm2219, %v2214, %v2216
      %v2221 = vsel %vm2219, %v2216, %v2218
      %v2226 = vmul.f32 %v2199, %v2214
      %v2227 = vmul.f32 %v2200, %v2220
      %v2228 = vmul.f32 %v2201, %v2221
      %v2229 = vmul.f32 %v2202, %v2218
      %v2230 = vmul.f32 %v2203, %v2214
      %v2231 = vmul.f32 %v2204, %v2220
      %v2232 = vmul.f32 %v2205, %v2221
      %v2233 = vmul.f32 %v2206, %v2218
      %vm2242 = vcmask 1043456
      %v2243 = vrot.slane %v2226, 4
      %v2244 = vrot.slane %v2230, 4
      %v2245 = vsel %vm2242, %v2243, %v2244
      %v2246 = vrot.slane %v2227, 4
      %v2247 = vrot.slane %v2231, 4
      %v2248 = vsel %vm2242, %v2246, %v2247
      %v2249 = vrot.slane %v2228, 4
      %v2250 = vrot.slane %v2232, 4
      %v2251 = vsel %vm2242, %v2249, %v2250
      %v2252 = vrot.slane %v2229, 4
      %v2253 = vrot.slane %v2233, 4
      %v2254 = vsel %vm2242, %v2252, %v2253
      %vm2259 = vcmask 1047704
      %2260 = vst.msk [vmem:[#allocation3] sm:$0xff] %vm2259, %v2245
      %2261 = vst [vmem:[#allocation3 + $0x8] sm:$0xff] %v2248
      %2262 = vst [vmem:[#allocation3 + $0x10] sm:$0xff] %v2251
      %2263 = vst.msk [vmem:[#allocation3 + $0x18] sm:$0xff] %vm2219, %v2254
      %v2264 = vld [vmem:[#allocation3] sm:$0xff]
      %v2265 = vld [vmem:[#allocation3 + $0x8] sm:$0xff]
      %v2266 = vld [vmem:[#allocation3 + $0x10] sm:$0xff]
      %v2267 = vpack.c.bf16 %v2264, %v2264
      %v2268 = vpack.c.bf16 %v2265, %v2265
      %v2269 = vpack.c.bf16 %v2266, %v2266
      %v2270 = vld [vmem:[#allocation4 + $0x30] sm:$0xff]
      %v2271 = vld [vmem:[#allocation4 + $0x38] sm:$0xff]
      %v2272 = vld [vmem:[#allocation4 + $0x40] sm:$0xff]
      %v2273 = vld [vmem:[%s3] sm:$0xf]
      %vm2274 = vcmask 64512
      %v2276 = vsel %vm2274, %v2273, 0
      %v2279 = vsel %vm2242, %v2267, 0
      %v2282 = vsel %vm2242, %v2268, 0
      %v2285 = vsel %vm2242, %v2269, 0
      %2287 = vmatprep.subr.bf16.mxu0 %v2282
      %2288 = vmatpush1.bf16.msra.mxu0 %v2279
      %2289 = vmatprep.subr.bf16.mxu0 0
      %2290 = vmatpush1.bf16.msra.mxu0 0
      %2291 = vmatprep.subr.bf16.mxu0 0
      %2292 = vmatpush1.bf16.msra.mxu0 0
      %2293 = vmatprep.subr.bf16.mxu0 0
      %2294 = vmatpush1.bf16.msra.mxu0 0
      %2295 = vmatprep.subr.bf16.mxu0 0
      %2296 = vmatpush1.bf16.msra.mxu0 0
      %2297 = vmatprep.subr.bf16.mxu0 0
      %2298 = vmatpush1.bf16.msra.mxu0 0
      %2299 = vmatprep.subr.bf16.mxu0 0
      %2300 = vmatpush1.bf16.msra.mxu0 0
      %2301 = vmatprep.subr.bf16.mxu0 0
      %2302 = vmatpush1.bf16.msra.mxu0 0
      %2303 = vmatprep.subr.bf16.mxu0 0
      %2304 = vmatpush1.bf16.msra.mxu0 0
      %2305 = vmatprep.subr.bf16.mxu0 0
      %2306 = vmatpush1.bf16.msra.mxu0 0
      %2307 = vmatprep.subr.bf16.mxu0 0
      %2308 = vmatpush1.bf16.msra.mxu0 0
      %2309 = vmatprep.subr.bf16.mxu0 0
      %2310 = vmatpush1.bf16.msra.mxu0 0
      %2311 = vmatprep.subr.bf16.mxu0 0
      %2312 = vmatpush1.bf16.msra.mxu0 0
      %2313 = vmatprep.subr.bf16.mxu0 0
      %2314 = vmatpush1.bf16.msra.mxu0 0
      %2315 = vmatprep.subr.bf16.mxu0 0
      %2316 = vmatpush1.bf16.msra.mxu0 0
      %2317 = vmatprep.subr.bf16.mxu0 0
      %2318 = vmatpush1.bf16.msra.mxu0 0
      %2319 = vmatprep.mubr.bf16.mxu0 0
      %2320 = vmatmul.mubr.bf16.gmra.mrb[0].mxu0 %v2276
      %v2321 = vpop.f32.mrb[0].mxu0
      %v2322 = vadd.f32 0.0, %v2321
      %v2323 = vpop.f32.mrb[0].mxu0
      %v2324 = vadd.f32 0.0, %v2323
      %v2325 = vpop.f32.mrb[0].mxu0
      %v2326 = vpop.f32.mrb[0].mxu0
      %2327 = vdwg.mxu0
      %2328 = vmatprep.subr.bf16.mxu0 0
      %2329 = vmatpush1.bf16.msra.mxu0 %v2285
      %2330 = vmatprep.subr.bf16.mxu0 0
      %2331 = vmatpush1.bf16.msra.mxu0 0
      %2332 = vmatprep.subr.bf16.mxu0 0
      %2333 = vmatpush1.bf16.msra.mxu0 0
      %2334 = vmatprep.subr.bf16.mxu0 0
      %2335 = vmatpush1.bf16.msra.mxu0 0
      %2336 = vmatprep.subr.bf16.mxu0 0
      %2337 = vmatpush1.bf16.msra.mxu0 0
      %2338 = vmatprep.subr.bf16.mxu0 0
      %2339 = vmatpush1.bf16.msra.mxu0 0
      %2340 = vmatprep.subr.bf16.mxu0 0
      %2341 = vmatpush1.bf16.msra.mxu0 0
      %2342 = vmatprep.subr.bf16.mxu0 0
      %2343 = vmatpush1.bf16.msra.mxu0 0
      %2344 = vmatprep.subr.bf16.mxu0 0
      %2345 = vmatpush1.bf16.msra.mxu0 0
      %2346 = vmatprep.subr.bf16.mxu0 0
      %2347 = vmatpush1.bf16.msra.mxu0 0
      %2348 = vmatprep.subr.bf16.mxu0 0
      %2349 = vmatpush1.bf16.msra.mxu0 0
      %2350 = vmatprep.subr.bf16.mxu0 0
      %2351 = vmatpush1.bf16.msra.mxu0 0
      %2352 = vmatprep.subr.bf16.mxu0 0
      %2353 = vmatpush1.bf16.msra.mxu0 0
      %2354 = vmatprep.subr.bf16.mxu0 0
      %2355 = vmatpush1.bf16.msra.mxu0 0
      %2356 = vmatprep.subr.bf16.mxu0 0
      %2357 = vmatpush1.bf16.msra.mxu0 0
      %2358 = vmatprep.subr.bf16.mxu0 0
      %2359 = vmatpush1.bf16.msra.mxu0 0
      %2360 = vmatprep.mubr.bf16.mxu0 0
      %2361 = vmatmul.mubr.bf16.gmra.mrb[0].mxu0 %v2276
      %v2362 = vpop.f32.mrb[0].mxu0
      %v2363 = vadd.f32 0.0, %v2362
      %v2364 = vpop.f32.mrb[0].mxu0
      %v2365 = vpop.f32.mrb[0].mxu0
      %v2366 = vpop.f32.mrb[0].mxu0
      %2367 = vdwg.mxu0
      %v2368 = vadd.f32 %v2270, %v2322
      %v2369 = vadd.f32 %v2271, %v2324
      %v2370 = vadd.f32 %v2272, %v2363
      %2371 = vst [vmem:[#allocation4 + $0x30] sm:$0xff] %v2368
      %2372 = vst [vmem:[#allocation4 + $0x38] sm:$0xff] %v2369
      %2373 = vst [vmem:[#allocation4 + $0x40] sm:$0xff] %v2370
      %v2374 = vld [vmem:[#allocation3] sm:$0xff]
      %v2375 = vld [vmem:[#allocation3 + $0x8] sm:$0xff]
      %v2376 = vld [vmem:[#allocation3 + $0x10] sm:$0xff]
      %v2377 = vld [vmem:[#allocation3 + $0x18] sm:$0xff]
      %v2378 = vpack.c.bf16 %v2374, %v2374
      %v2379 = vpack.c.bf16 %v2375, %v2375
      %v2380 = vpack.c.bf16 %v2376, %v2376
      %v2381 = vpack.c.bf16 %v2377, %v2377
      %v2382 = vld [vmem:[#allocation4 + $0x30] sm:$0xff]
      %v2383 = vld [vmem:[#allocation4 + $0x38] sm:$0xff]
      %v2384 = vld [vmem:[#allocation4 + $0x40] sm:$0xff]
      %s2385 = scalar_lea.vmem %s3, 4
      %v2386 = vld [vmem:[%s2385] sm:$0xf]
      %2391 = vrot.lane.b32.xlu0 %v2378, 127
      %v2392 = vpop.permute.xlu0 %2391
      %2393 = vrot.lane.b32.xlu0 %v2379, 127
      %v2394 = vpop.permute.xlu0 %2393
      %2395 = vrot.lane.b32.xlu0 %v2380, 127
      %v2396 = vpop.permute.xlu0 %2395
      %2397 = vrot.lane.b32.xlu0 %v2381, 127
      %v2398 = vpop.permute.xlu0 %2397
      %v2399 = vsel %vm754, %v2392, %v2394
      %v2400 = vsel %vm754, %v2394, %v2396
      %v2401 = vsel %vm754, %v2396, %v2398
      %v2403 = vsel %vm2274, %v2386, 0
      %v2406 = vsel %vm2242, %v2399, 0
      %v2409 = vsel %vm2242, %v2400, 0
      %v2412 = vsel %vm2242, %v2401, 0
      %2414 = vmatprep.subr.bf16.mxu0 %v2409
      %2415 = vmatpush1.bf16.msra.mxu0 %v2406
      %2416 = vmatprep.subr.bf16.mxu0 0
      %2417 = vmatpush1.bf16.msra.mxu0 0
      %2418 = vmatprep.subr.bf16.mxu0 0
      %2419 = vmatpush1.bf16.msra.mxu0 0
      %2420 = vmatprep.subr.bf16.mxu0 0
      %2421 = vmatpush1.bf16.msra.mxu0 0
      %2422 = vmatprep.subr.bf16.mxu0 0
      %2423 = vmatpush1.bf16.msra.mxu0 0
      %2424 = vmatprep.subr.bf16.mxu0 0
      %2425 = vmatpush1.bf16.msra.mxu0 0
      %2426 = vmatprep.subr.bf16.mxu0 0
      %2427 = vmatpush1.bf16.msra.mxu0 0
      %2428 = vmatprep.subr.bf16.mxu0 0
      %2429 = vmatpush1.bf16.msra.mxu0 0
      %2430 = vmatprep.subr.bf16.mxu0 0
      %2431 = vmatpush1.bf16.msra.mxu0 0
      %2432 = vmatprep.subr.bf16.mxu0 0
      %2433 = vmatpush1.bf16.msra.mxu0 0
      %2434 = vmatprep.subr.bf16.mxu0 0
      %2435 = vmatpush1.bf16.msra.mxu0 0
      %2436 = vmatprep.subr.bf16.mxu0 0
      %2437 = vmatpush1.bf16.msra.mxu0 0
      %2438 = vmatprep.subr.bf16.mxu0 0
      %2439 = vmatpush1.bf16.msra.mxu0 0
      %2440 = vmatprep.subr.bf16.mxu0 0
      %2441 = vmatpush1.bf16.msra.mxu0 0
      %2442 = vmatprep.subr.bf16.mxu0 0
      %2443 = vmatpush1.bf16.msra.mxu0 0
      %2444 = vmatprep.subr.bf16.mxu0 0
      %2445 = vmatpush1.bf16.msra.mxu0 0
      %2446 = vmatprep.mubr.bf16.mxu0 0
      %2447 = vmatmul.mubr.bf16.gmra.mrb[0].mxu0 %v2403
      %v2448 = vpop.f32.mrb[0].mxu0
      %v2449 = vadd.f32 0.0, %v2448
      %v2450 = vpop.f32.mrb[0].mxu0
      %v2451 = vadd.f32 0.0, %v2450
      %v2452 = vpop.f32.mrb[0].mxu0
      %v2453 = vpop.f32.mrb[0].mxu0
      %2454 = vdwg.mxu0
      %2455 = vmatprep.subr.bf16.mxu0 0
      %2456 = vmatpush1.bf16.msra.mxu0 %v2412
      %2457 = vmatprep.subr.bf16.mxu0 0
      %2458 = vmatpush1.bf16.msra.mxu0 0
      %2459 = vmatprep.subr.bf16.mxu0 0
      %2460 = vmatpush1.bf16.msra.mxu0 0
      %2461 = vmatprep.subr.bf16.mxu0 0
      %2462 = vmatpush1.bf16.msra.mxu0 0
      %2463 = vmatprep.subr.bf16.mxu0 0
      %2464 = vmatpush1.bf16.msra.mxu0 0
      %2465 = vmatprep.subr.bf16.mxu0 0
      %2466 = vmatpush1.bf16.msra.mxu0 0
      %2467 = vmatprep.subr.bf16.mxu0 0
      %2468 = vmatpush1.bf16.msra.mxu0 0
      %2469 = vmatprep.subr.bf16.mxu0 0
      %2470 = vmatpush1.bf16.msra.mxu0 0
      %2471 = vmatprep.subr.bf16.mxu0 0
      %2472 = vmatpush1.bf16.msra.mxu0 0
      %2473 = vmatprep.subr.bf16.mxu0 0
      %2474 = vmatpush1.bf16.msra.mxu0 0
      %2475 = vmatprep.subr.bf16.mxu0 0
      %2476 = vmatpush1.bf16.msra.mxu0 0
      %2477 = vmatprep.subr.bf16.mxu0 0
      %2478 = vmatpush1.bf16.msra.mxu0 0
      %2479 = vmatprep.subr.bf16.mxu0 0
      %2480 = vmatpush1.bf16.msra.mxu0 0
      %2481 = vmatprep.subr.bf16.mxu0 0
      %2482 = vmatpush1.bf16.msra.mxu0 0
      %2483 = vmatprep.subr.bf16.mxu0 0
      %2484 = vmatpush1.bf16.msra.mxu0 0
      %2485 = vmatprep.subr.bf16.mxu0 0
      %2486 = vmatpush1.bf16.msra.mxu0 0
      %2487 = vmatprep.mubr.bf16.mxu0 0
      %2488 = vmatmul.mubr.bf16.gmra.mrb[0].mxu0 %v2403
      %v2489 = vpop.f32.mrb[0].mxu0
      %v2490 = vadd.f32 0.0, %v2489
      %v2491 = vpop.f32.mrb[0].mxu0
      %v2492 = vpop.f32.mrb[0].mxu0
      %v2493 = vpop.f32.mrb[0].mxu0
      %2494 = vdwg.mxu0
      %v2495 = vadd.f32 %v2382, %v2449
      %v2496 = vadd.f32 %v2383, %v2451
      %v2497 = vadd.f32 %v2384, %v2490
      %2498 = vst [vmem:[#allocation4 + $0x30] sm:$0xff] %v2495
      %2499 = vst [vmem:[#allocation4 + $0x38] sm:$0xff] %v2496
      %2500 = vst [vmem:[#allocation4 + $0x40] sm:$0xff] %v2497
      %v2501 = vld [vmem:[#allocation3] sm:$0xff]
      %v2502 = vld [vmem:[#allocation3 + $0x8] sm:$0xff]
      %v2503 = vld [vmem:[#allocation3 + $0x10] sm:$0xff]
      %v2504 = vld [vmem:[#allocation3 + $0x18] sm:$0xff]
      %v2505 = vpack.c.bf16 %v2501, %v2501
      %v2506 = vpack.c.bf16 %v2502, %v2502
      %v2507 = vpack.c.bf16 %v2503, %v2503
      %v2508 = vpack.c.bf16 %v2504, %v2504
      %v2509 = vld [vmem:[#allocation4 + $0x30] sm:$0xff]
      %v2510 = vld [vmem:[#allocation4 + $0x38] sm:$0xff]
      %v2511 = vld [vmem:[#allocation4 + $0x40] sm:$0xff]
      %s2512 = scalar_lea.vmem %s3, 8
      %v2513 = vld [vmem:[%s2512] sm:$0xf]
      %2518 = vrot.lane.b32.xlu0 %v2505, 126
      %v2519 = vpop.permute.xlu0 %2518
      %2520 = vrot.lane.b32.xlu0 %v2506, 126
      %v2521 = vpop.permute.xlu0 %2520
      %2522 = vrot.lane.b32.xlu0 %v2507, 126
      %v2523 = vpop.permute.xlu0 %2522
      %2524 = vrot.lane.b32.xlu0 %v2508, 126
      %v2525 = vpop.permute.xlu0 %2524
      %v2526 = vsel %vm935, %v2519, %v2521
      %v2527 = vsel %vm935, %v2521, %v2523
      %v2528 = vsel %vm935, %v2523, %v2525
      %v2530 = vsel %vm2274, %v2513, 0
      %v2533 = vsel %vm2242, %v2526, 0
      %v2536 = vsel %vm2242, %v2527, 0
      %v2539 = vsel %vm2242, %v2528, 0
      %2541 = vmatprep.subr.bf16.mxu0 %v2536
      %2542 = vmatpush1.bf16.msra.mxu0 %v2533
      %2543 = vmatprep.subr.bf16.mxu0 0
      %2544 = vmatpush1.bf16.msra.mxu0 0
      %2545 = vmatprep.subr.bf16.mxu0 0
      %2546 = vmatpush1.bf16.msra.mxu0 0
      %2547 = vmatprep.subr.bf16.mxu0 0
      %2548 = vmatpush1.bf16.msra.mxu0 0
      %2549 = vmatprep.subr.bf16.mxu0 0
      %2550 = vmatpush1.bf16.msra.mxu0 0
      %2551 = vmatprep.subr.bf16.mxu0 0
      %2552 = vmatpush1.bf16.msra.mxu0 0
      %2553 = vmatprep.subr.bf16.mxu0 0
      %2554 = vmatpush1.bf16.msra.mxu0 0
      %2555 = vmatprep.subr.bf16.mxu0 0
      %2556 = vmatpush1.bf16.msra.mxu0 0
      %2557 = vmatprep.subr.bf16.mxu0 0
      %2558 = vmatpush1.bf16.msra.mxu0 0
      %2559 = vmatprep.subr.bf16.mxu0 0
      %2560 = vmatpush1.bf16.msra.mxu0 0
      %2561 = vmatprep.subr.bf16.mxu0 0
      %2562 = vmatpush1.bf16.msra.mxu0 0
      %2563 = vmatprep.subr.bf16.mxu0 0
      %2564 = vmatpush1.bf16.msra.mxu0 0
      %2565 = vmatprep.subr.bf16.mxu0 0
      %2566 = vmatpush1.bf16.msra.mxu0 0
      %2567 = vmatprep.subr.bf16.mxu0 0
      %2568 = vmatpush1.bf16.msra.mxu0 0
      %2569 = vmatprep.subr.bf16.mxu0 0
      %2570 = vmatpush1.bf16.msra.mxu0 0
      %2571 = vmatprep.subr.bf16.mxu0 0
      %2572 = vmatpush1.bf16.msra.mxu0 0
      %2573 = vmatprep.mubr.bf16.mxu0 0
      %2574 = vmatmul.mubr.bf16.gmra.mrb[0].mxu0 %v2530
      %v2575 = vpop.f32.mrb[0].mxu0
      %v2576 = vadd.f32 0.0, %v2575
      %v2577 = vpop.f32.mrb[0].mxu0
      %v2578 = vadd.f32 0.0, %v2577
      %v2579 = vpop.f32.mrb[0].mxu0
      %v2580 = vpop.f32.mrb[0].mxu0
      %2581 = vdwg.mxu0
      %2582 = vmatprep.subr.bf16.mxu0 0
      %2583 = vmatpush1.bf16.msra.mxu0 %v2539
      %2584 = vmatprep.subr.bf16.mxu0 0
      %2585 = vmatpush1.bf16.msra.mxu0 0
      %2586 = vmatprep.subr.bf16.mxu0 0
      %2587 = vmatpush1.bf16.msra.mxu0 0
      %2588 = vmatprep.subr.bf16.mxu0 0
      %2589 = vmatpush1.bf16.msra.mxu0 0
      %2590 = vmatprep.subr.bf16.mxu0 0
      %2591 = vmatpush1.bf16.msra.mxu0 0
      %2592 = vmatprep.subr.bf16.mxu0 0
      %2593 = vmatpush1.bf16.msra.mxu0 0
      %2594 = vmatprep.subr.bf16.mxu0 0
      %2595 = vmatpush1.bf16.msra.mxu0 0
      %2596 = vmatprep.subr.bf16.mxu0 0
      %2597 = vmatpush1.bf16.msra.mxu0 0
      %2598 = vmatprep.subr.bf16.mxu0 0
      %2599 = vmatpush1.bf16.msra.mxu0 0
      %2600 = vmatprep.subr.bf16.mxu0 0
      %2601 = vmatpush1.bf16.msra.mxu0 0
      %2602 = vmatprep.subr.bf16.mxu0 0
      %2603 = vmatpush1.bf16.msra.mxu0 0
      %2604 = vmatprep.subr.bf16.mxu0 0
      %2605 = vmatpush1.bf16.msra.mxu0 0
      %2606 = vmatprep.subr.bf16.mxu0 0
      %2607 = vmatpush1.bf16.msra.mxu0 0
      %2608 = vmatprep.subr.bf16.mxu0 0
      %2609 = vmatpush1.bf16.msra.mxu0 0
      %2610 = vmatprep.subr.bf16.mxu0 0
      %2611 = vmatpush1.bf16.msra.mxu0 0
      %2612 = vmatprep.subr.bf16.mxu0 0
      %2613 = vmatpush1.bf16.msra.mxu0 0
      %2614 = vmatprep.mubr.bf16.mxu0 0
      %2615 = vmatmul.mubr.bf16.gmra.mrb[0].mxu0 %v2530
      %v2616 = vpop.f32.mrb[0].mxu0
      %v2617 = vadd.f32 0.0, %v2616
      %v2618 = vpop.f32.mrb[0].mxu0
      %v2619 = vpop.f32.mrb[0].mxu0
      %v2620 = vpop.f32.mrb[0].mxu0
      %2621 = vdwg.mxu0
      %v2622 = vadd.f32 %v2509, %v2576
      %v2623 = vadd.f32 %v2510, %v2578
      %v2624 = vadd.f32 %v2511, %v2617
      %2625 = vst [vmem:[#allocation4 + $0x30] sm:$0xff] %v2622
      %2626 = vst [vmem:[#allocation4 + $0x38] sm:$0xff] %v2623
      %2627 = vst [vmem:[#allocation4 + $0x40] sm:$0xff] %v2624
      %v2628 = vld [vmem:[#allocation3] sm:$0xff]
      %v2629 = vld [vmem:[#allocation3 + $0x8] sm:$0xff]
      %v2630 = vld [vmem:[#allocation3 + $0x10] sm:$0xff]
      %v2631 = vld [vmem:[#allocation3 + $0x18] sm:$0xff]
      %v2632 = vpack.c.bf16 %v2628, %v2628
      %v2633 = vpack.c.bf16 %v2629, %v2629
      %v2634 = vpack.c.bf16 %v2630, %v2630
      %v2635 = vpack.c.bf16 %v2631, %v2631
      %v2636 = vld [vmem:[#allocation4 + $0x30] sm:$0xff]
      %v2637 = vld [vmem:[#allocation4 + $0x38] sm:$0xff]
      %v2638 = vld [vmem:[#allocation4 + $0x40] sm:$0xff]
      %s2639 = scalar_lea.vmem %s3, 12
      %v2640 = vld [vmem:[%s2639] sm:$0xf]
      %2645 = vrot.lane.b32.xlu0 %v2632, 110
      %v2646 = vpop.permute.xlu0 %2645
      %2647 = vrot.lane.b32.xlu0 %v2633, 110
      %v2648 = vpop.permute.xlu0 %2647
      %2649 = vrot.lane.b32.xlu0 %v2634, 110
      %v2650 = vpop.permute.xlu0 %2649
      %2651 = vrot.lane.b32.xlu0 %v2635, 110
      %v2652 = vpop.permute.xlu0 %2651
      %v2653 = vsel %vm1116, %v2646, %v2648
      %v2654 = vsel %vm1116, %v2648, %v2650
      %v2655 = vsel %vm1116, %v2650, %v2652
      %v2657 = vsel %vm2274, %v2640, 0
      %v2660 = vsel %vm2242, %v2653, 0
      %v2663 = vsel %vm2242, %v2654, 0
      %v2666 = vsel %vm2242, %v2655, 0
      %2668 = vmatprep.subr.bf16.mxu0 %v2663
      %2669 = vmatpush1.bf16.msra.mxu0 %v2660
      %2670 = vmatprep.subr.bf16.mxu0 0
      %2671 = vmatpush1.bf16.msra.mxu0 0
      %2672 = vmatprep.subr.bf16.mxu0 0
      %2673 = vmatpush1.bf16.msra.mxu0 0
      %2674 = vmatprep.subr.bf16.mxu0 0
      %2675 = vmatpush1.bf16.msra.mxu0 0
      %2676 = vmatprep.subr.bf16.mxu0 0
      %2677 = vmatpush1.bf16.msra.mxu0 0
      %2678 = vmatprep.subr.bf16.mxu0 0
      %2679 = vmatpush1.bf16.msra.mxu0 0
      %2680 = vmatprep.subr.bf16.mxu0 0
      %2681 = vmatpush1.bf16.msra.mxu0 0
      %2682 = vmatprep.subr.bf16.mxu0 0
      %2683 = vmatpush1.bf16.msra.mxu0 0
      %2684 = vmatprep.subr.bf16.mxu0 0
      %2685 = vmatpush1.bf16.msra.mxu0 0
      %2686 = vmatprep.subr.bf16.mxu0 0
      %2687 = vmatpush1.bf16.msra.mxu0 0
      %2688 = vmatprep.subr.bf16.mxu0 0
      %2689 = vmatpush1.bf16.msra.mxu0 0
      %2690 = vmatprep.subr.bf16.mxu0 0
      %2691 = vmatpush1.bf16.msra.mxu0 0
      %2692 = vmatprep.subr.bf16.mxu0 0
      %2693 = vmatpush1.bf16.msra.mxu0 0
      %2694 = vmatprep.subr.bf16.mxu0 0
      %2695 = vmatpush1.bf16.msra.mxu0 0
      %2696 = vmatprep.subr.bf16.mxu0 0
      %2697 = vmatpush1.bf16.msra.mxu0 0
      %2698 = vmatprep.subr.bf16.mxu0 0
      %2699 = vmatpush1.bf16.msra.mxu0 0
      %2700 = vmatprep.mubr.bf16.mxu0 0
      %2701 = vmatmul.mubr.bf16.gmra.mrb[0].mxu0 %v2657
      %v2702 = vpop.f32.mrb[0].mxu0
      %v2703 = vadd.f32 0.0, %v2702
      %v2704 = vpop.f32.mrb[0].mxu0
      %v2705 = vadd.f32 0.0, %v2704
      %v2706 = vpop.f32.mrb[0].mxu0
      %v2707 = vpop.f32.mrb[0].mxu0
      %2708 = vdwg.mxu0
      %2709 = vmatprep.subr.bf16.mxu0 0
      %2710 = vmatpush1.bf16.msra.mxu0 %v2666
      %2711 = vmatprep.subr.bf16.mxu0 0
      %2712 = vmatpush1.bf16.msra.mxu0 0
      %2713 = vmatprep.subr.bf16.mxu0 0
      %2714 = vmatpush1.bf16.msra.mxu0 0
      %2715 = vmatprep.subr.bf16.mxu0 0
      %2716 = vmatpush1.bf16.msra.mxu0 0
      %2717 = vmatprep.subr.bf16.mxu0 0
      %2718 = vmatpush1.bf16.msra.mxu0 0
      %2719 = vmatprep.subr.bf16.mxu0 0
      %2720 = vmatpush1.bf16.msra.mxu0 0
      %2721 = vmatprep.subr.bf16.mxu0 0
      %2722 = vmatpush1.bf16.msra.mxu0 0
      %2723 = vmatprep.subr.bf16.mxu0 0
      %2724 = vmatpush1.bf16.msra.mxu0 0
      %2725 = vmatprep.subr.bf16.mxu0 0
      %2726 = vmatpush1.bf16.msra.mxu0 0
      %2727 = vmatprep.subr.bf16.mxu0 0
      %2728 = vmatpush1.bf16.msra.mxu0 0
      %2729 = vmatprep.subr.bf16.mxu0 0
      %2730 = vmatpush1.bf16.msra.mxu0 0
      %2731 = vmatprep.subr.bf16.mxu0 0
      %2732 = vmatpush1.bf16.msra.mxu0 0
      %2733 = vmatprep.subr.bf16.mxu0 0
      %2734 = vmatpush1.bf16.msra.mxu0 0
      %2735 = vmatprep.subr.bf16.mxu0 0
      %2736 = vmatpush1.bf16.msra.mxu0 0
      %2737 = vmatprep.subr.bf16.mxu0 0
      %2738 = vmatpush1.bf16.msra.mxu0 0
      %2739 = vmatprep.subr.bf16.mxu0 0
      %2740 = vmatpush1.bf16.msra.mxu0 0
      %2741 = vmatprep.mubr.bf16.mxu0 0
      %2742 = vmatmul.mubr.bf16.gmra.mrb[0].mxu0 %v2657
      %v2743 = vpop.f32.mrb[0].mxu0
      %v2744 = vadd.f32 0.0, %v2743
      %v2745 = vpop.f32.mrb[0].mxu0
      %v2746 = vpop.f32.mrb[0].mxu0
      %v2747 = vpop.f32.mrb[0].mxu0
      %2748 = vdwg.mxu0
      %v2749 = vadd.f32 %v2636, %v2703
      %v2750 = vadd.f32 %v2637, %v2705
      %v2751 = vadd.f32 %v2638, %v2744
      %2752 = vst [vmem:[#allocation4 + $0x30] sm:$0xff] %v2749
      %2753 = vst [vmem:[#allocation4 + $0x38] sm:$0xff] %v2750
      %2754 = vst [vmem:[#allocation4 + $0x40] sm:$0xff] %v2751
      %v2755 = vld [vmem:[#allocation3] sm:$0xff]
      %v2756 = vld [vmem:[#allocation3 + $0x8] sm:$0xff]
      %v2757 = vld [vmem:[#allocation3 + $0x10] sm:$0xff]
      %v2758 = vld [vmem:[#allocation3 + $0x18] sm:$0xff]
      %v2759 = vpack.c.bf16 %v2755, %v2755
      %v2760 = vpack.c.bf16 %v2756, %v2756
      %v2761 = vpack.c.bf16 %v2757, %v2757
      %v2762 = vpack.c.bf16 %v2758, %v2758
      %v2763 = vld [vmem:[#allocation4 + $0x30] sm:$0xff]
      %v2764 = vld [vmem:[#allocation4 + $0x38] sm:$0xff]
      %v2765 = vld [vmem:[#allocation4 + $0x40] sm:$0xff]
      %s2766 = scalar_lea.vmem %s3, 16
      %v2767 = vld [vmem:[%s2766] sm:$0xf]
      %2772 = vrot.lane.b32.xlu0 %v2759, 109
      %v2773 = vpop.permute.xlu0 %2772
      %2774 = vrot.lane.b32.xlu0 %v2760, 109
      %v2775 = vpop.permute.xlu0 %2774
      %2776 = vrot.lane.b32.xlu0 %v2761, 109
      %v2777 = vpop.permute.xlu0 %2776
      %2778 = vrot.lane.b32.xlu0 %v2762, 109
      %v2779 = vpop.permute.xlu0 %2778
      %v2780 = vsel %vm1297, %v2773, %v2775
      %v2781 = vsel %vm1297, %v2775, %v2777
      %v2782 = vsel %vm1297, %v2777, %v2779
      %v2784 = vsel %vm2274, %v2767, 0
      %v2787 = vsel %vm2242, %v2780, 0
      %v2790 = vsel %vm2242, %v2781, 0
      %v2793 = vsel %vm2242, %v2782, 0
      %2795 = vmatprep.subr.bf16.mxu0 %v2790
      %2796 = vmatpush1.bf16.msra.mxu0 %v2787
      %2797 = vmatprep.subr.bf16.mxu0 0
      %2798 = vmatpush1.bf16.msra.mxu0 0
      %2799 = vmatprep.subr.bf16.mxu0 0
      %2800 = vmatpush1.bf16.msra.mxu0 0
      %2801 = vmatprep.subr.bf16.mxu0 0
      %2802 = vmatpush1.bf16.msra.mxu0 0
      %2803 = vmatprep.subr.bf16.mxu0 0
      %2804 = vmatpush1.bf16.msra.mxu0 0
      %2805 = vmatprep.subr.bf16.mxu0 0
      %2806 = vmatpush1.bf16.msra.mxu0 0
      %2807 = vmatprep.subr.bf16.mxu0 0
      %2808 = vmatpush1.bf16.msra.mxu0 0
      %2809 = vmatprep.subr.bf16.mxu0 0
      %2810 = vmatpush1.bf16.msra.mxu0 0
      %2811 = vmatprep.subr.bf16.mxu0 0
      %2812 = vmatpush1.bf16.msra.mxu0 0
      %2813 = vmatprep.subr.bf16.mxu0 0
      %2814 = vmatpush1.bf16.msra.mxu0 0
      %2815 = vmatprep.subr.bf16.mxu0 0
      %2816 = vmatpush1.bf16.msra.mxu0 0
      %2817 = vmatprep.subr.bf16.mxu0 0
      %2818 = vmatpush1.bf16.msra.mxu0 0
      %2819 = vmatprep.subr.bf16.mxu0 0
      %2820 = vmatpush1.bf16.msra.mxu0 0
      %2821 = vmatprep.subr.bf16.mxu0 0
      %2822 = vmatpush1.bf16.msra.mxu0 0
      %2823 = vmatprep.subr.bf16.mxu0 0
      %2824 = vmatpush1.bf16.msra.mxu0 0
      %2825 = vmatprep.subr.bf16.mxu0 0
      %2826 = vmatpush1.bf16.msra.mxu0 0
      %2827 = vmatprep.mubr.bf16.mxu0 0
      %2828 = vmatmul.mubr.bf16.gmra.mrb[0].mxu0 %v2784
      %v2829 = vpop.f32.mrb[0].mxu0
      %v2830 = vadd.f32 0.0, %v2829
      %v2831 = vpop.f32.mrb[0].mxu0
      %v2832 = vadd.f32 0.0, %v2831
      %v2833 = vpop.f32.mrb[0].mxu0
      %v2834 = vpop.f32.mrb[0].mxu0
      %2835 = vdwg.mxu0
      %2836 = vmatprep.subr.bf16.mxu0 0
      %2837 = vmatpush1.bf16.msra.mxu0 %v2793
      %2838 = vmatprep.subr.bf16.mxu0 0
      %2839 = vmatpush1.bf16.msra.mxu0 0
      %2840 = vmatprep.subr.bf16.mxu0 0
      %2841 = vmatpush1.bf16.msra.mxu0 0
      %2842 = vmatprep.subr.bf16.mxu0 0
      %2843 = vmatpush1.bf16.msra.mxu0 0
      %2844 = vmatprep.subr.bf16.mxu0 0
      %2845 = vmatpush1.bf16.msra.mxu0 0
      %2846 = vmatprep.subr.bf16.mxu0 0
      %2847 = vmatpush1.bf16.msra.mxu0 0
      %2848 = vmatprep.subr.bf16.mxu0 0
      %2849 = vmatpush1.bf16.msra.mxu0 0
      %2850 = vmatprep.subr.bf16.mxu0 0
      %2851 = vmatpush1.bf16.msra.mxu0 0
      %2852 = vmatprep.subr.bf16.mxu0 0
      %2853 = vmatpush1.bf16.msra.mxu0 0
      %2854 = vmatprep.subr.bf16.mxu0 0
      %2855 = vmatpush1.bf16.msra.mxu0 0
      %2856 = vmatprep.subr.bf16.mxu0 0
      %2857 = vmatpush1.bf16.msra.mxu0 0
      %2858 = vmatprep.subr.bf16.mxu0 0
      %2859 = vmatpush1.bf16.msra.mxu0 0
      %2860 = vmatprep.subr.bf16.mxu0 0
      %2861 = vmatpush1.bf16.msra.mxu0 0
      %2862 = vmatprep.subr.bf16.mxu0 0
      %2863 = vmatpush1.bf16.msra.mxu0 0
      %2864 = vmatprep.subr.bf16.mxu0 0
      %2865 = vmatpush1.bf16.msra.mxu0 0
      %2866 = vmatprep.subr.bf16.mxu0 0
      %2867 = vmatpush1.bf16.msra.mxu0 0
      %2868 = vmatprep.mubr.bf16.mxu0 0
      %2869 = vmatmul.mubr.bf16.gmra.mrb[0].mxu0 %v2784
      %v2870 = vpop.f32.mrb[0].mxu0
      %v2871 = vadd.f32 0.0, %v2870
      %v2872 = vpop.f32.mrb[0].mxu0
      %v2873 = vpop.f32.mrb[0].mxu0
      %v2874 = vpop.f32.mrb[0].mxu0
      %2875 = vdwg.mxu0
      %v2876 = vadd.f32 %v2763, %v2830
      %v2877 = vadd.f32 %v2764, %v2832
      %v2878 = vadd.f32 %v2765, %v2871
      %2879 = vst [vmem:[#allocation4 + $0x30] sm:$0xff] %v2876
      %2880 = vst [vmem:[#allocation4 + $0x38] sm:$0xff] %v2877
      %2881 = vst [vmem:[#allocation4 + $0x40] sm:$0xff] %v2878
      %v2882 = vld [vmem:[#allocation3] sm:$0xff]
      %v2883 = vld [vmem:[#allocation3 + $0x8] sm:$0xff]
      %v2884 = vld [vmem:[#allocation3 + $0x10] sm:$0xff]
      %v2885 = vld [vmem:[#allocation3 + $0x18] sm:$0xff]
      %v2886 = vpack.c.bf16 %v2882, %v2882
      %v2887 = vpack.c.bf16 %v2883, %v2883
      %v2888 = vpack.c.bf16 %v2884, %v2884
      %v2889 = vpack.c.bf16 %v2885, %v2885
      %v2890 = vld [vmem:[#allocation4 + $0x30] sm:$0xff]
      %v2891 = vld [vmem:[#allocation4 + $0x38] sm:$0xff]
      %v2892 = vld [vmem:[#allocation4 + $0x40] sm:$0xff]
      %s2893 = scalar_lea.vmem %s3, 20
      %v2894 = vld [vmem:[%s2893] sm:$0xf]
      %2899 = vrot.lane.b32.xlu0 %v2886, 108
      %v2900 = vpop.permute.xlu0 %2899
      %2901 = vrot.lane.b32.xlu0 %v2887, 108
      %v2902 = vpop.permute.xlu0 %2901
      %2903 = vrot.lane.b32.xlu0 %v2888, 108
      %v2904 = vpop.permute.xlu0 %2903
      %2905 = vrot.lane.b32.xlu0 %v2889, 108
      %v2906 = vpop.permute.xlu0 %2905
      %v2907 = vsel %vm1478, %v2900, %v2902
      %v2908 = vsel %vm1478, %v2902, %v2904
      %v2909 = vsel %vm1478, %v2904, %v2906
      %v2911 = vsel %vm2274, %v2894, 0
      %v2914 = vsel %vm2242, %v2907, 0
      %v2917 = vsel %vm2242, %v2908, 0
      %v2920 = vsel %vm2242, %v2909, 0
      %2922 = vmatprep.subr.bf16.mxu0 %v2917
      %2923 = vmatpush1.bf16.msra.mxu0 %v2914
      %2924 = vmatprep.subr.bf16.mxu0 0
      %2925 = vmatpush1.bf16.msra.mxu0 0
      %2926 = vmatprep.subr.bf16.mxu0 0
      %2927 = vmatpush1.bf16.msra.mxu0 0
      %2928 = vmatprep.subr.bf16.mxu0 0
      %2929 = vmatpush1.bf16.msra.mxu0 0
      %2930 = vmatprep.subr.bf16.mxu0 0
      %2931 = vmatpush1.bf16.msra.mxu0 0
      %2932 = vmatprep.subr.bf16.mxu0 0
      %2933 = vmatpush1.bf16.msra.mxu0 0
      %2934 = vmatprep.subr.bf16.mxu0 0
      %2935 = vmatpush1.bf16.msra.mxu0 0
      %2936 = vmatprep.subr.bf16.mxu0 0
      %2937 = vmatpush1.bf16.msra.mxu0 0
      %2938 = vmatprep.subr.bf16.mxu0 0
      %2939 = vmatpush1.bf16.msra.mxu0 0
      %2940 = vmatprep.subr.bf16.mxu0 0
      %2941 = vmatpush1.bf16.msra.mxu0 0
      %2942 = vmatprep.subr.bf16.mxu0 0
      %2943 = vmatpush1.bf16.msra.mxu0 0
      %2944 = vmatprep.subr.bf16.mxu0 0
      %2945 = vmatpush1.bf16.msra.mxu0 0
      %2946 = vmatprep.subr.bf16.mxu0 0
      %2947 = vmatpush1.bf16.msra.mxu0 0
      %2948 = vmatprep.subr.bf16.mxu0 0
      %2949 = vmatpush1.bf16.msra.mxu0 0
      %2950 = vmatprep.subr.bf16.mxu0 0
      %2951 = vmatpush1.bf16.msra.mxu0 0
      %2952 = vmatprep.subr.bf16.mxu0 0
      %2953 = vmatpush1.bf16.msra.mxu0 0
      %2954 = vmatprep.mubr.bf16.mxu0 0
      %2955 = vmatmul.mubr.bf16.gmra.mrb[0].mxu0 %v2911
      %v2956 = vpop.f32.mrb[0].mxu0
      %v2957 = vadd.f32 0.0, %v2956
      %v2958 = vpop.f32.mrb[0].mxu0
      %v2959 = vadd.f32 0.0, %v2958
      %v2960 = vpop.f32.mrb[0].mxu0
      %v2961 = vpop.f32.mrb[0].mxu0
      %2962 = vdwg.mxu0
      %2963 = vmatprep.subr.bf16.mxu0 0
      %2964 = vmatpush1.bf16.msra.mxu0 %v2920
      %2965 = vmatprep.subr.bf16.mxu0 0
      %2966 = vmatpush1.bf16.msra.mxu0 0
      %2967 = vmatprep.subr.bf16.mxu0 0
      %2968 = vmatpush1.bf16.msra.mxu0 0
      %2969 = vmatprep.subr.bf16.mxu0 0
      %2970 = vmatpush1.bf16.msra.mxu0 0
      %2971 = vmatprep.subr.bf16.mxu0 0
      %2972 = vmatpush1.bf16.msra.mxu0 0
      %2973 = vmatprep.subr.bf16.mxu0 0
      %2974 = vmatpush1.bf16.msra.mxu0 0
      %2975 = vmatprep.subr.bf16.mxu0 0
      %2976 = vmatpush1.bf16.msra.mxu0 0
      %2977 = vmatprep.subr.bf16.mxu0 0
      %2978 = vmatpush1.bf16.msra.mxu0 0
      %2979 = vmatprep.subr.bf16.mxu0 0
      %2980 = vmatpush1.bf16.msra.mxu0 0
      %2981 = vmatprep.subr.bf16.mxu0 0
      %2982 = vmatpush1.bf16.msra.mxu0 0
      %2983 = vmatprep.subr.bf16.mxu0 0
      %2984 = vmatpush1.bf16.msra.mxu0 0
      %2985 = vmatprep.subr.bf16.mxu0 0
      %2986 = vmatpush1.bf16.msra.mxu0 0
      %2987 = vmatprep.subr.bf16.mxu0 0
      %2988 = vmatpush1.bf16.msra.mxu0 0
      %2989 = vmatprep.subr.bf16.mxu0 0
      %2990 = vmatpush1.bf16.msra.mxu0 0
      %2991 = vmatprep.subr.bf16.mxu0 0
      %2992 = vmatpush1.bf16.msra.mxu0 0
      %2993 = vmatprep.subr.bf16.mxu0 0
      %2994 = vmatpush1.bf16.msra.mxu0 0
      %2995 = vmatprep.mubr.bf16.mxu0 0
      %2996 = vmatmul.mubr.bf16.gmra.mrb[0].mxu0 %v2911
      %v2997 = vpop.f32.mrb[0].mxu0
      %v2998 = vadd.f32 0.0, %v2997
      %v2999 = vpop.f32.mrb[0].mxu0
      %v3000 = vpop.f32.mrb[0].mxu0
      %v3001 = vpop.f32.mrb[0].mxu0
      %3002 = vdwg.mxu0
      %v3003 = vadd.f32 %v2890, %v2957
      %v3004 = vadd.f32 %v2891, %v2959
      %v3005 = vadd.f32 %v2892, %v2998
      %3006 = vst [vmem:[#allocation4 + $0x30] sm:$0xff] %v3003
      %3007 = vst [vmem:[#allocation4 + $0x38] sm:$0xff] %v3004
      %3008 = vst [vmem:[#allocation4 + $0x40] sm:$0xff] %v3005
      %v3009 = vld [vmem:[#allocation3] sm:$0xff]
      %v3010 = vld [vmem:[#allocation3 + $0x8] sm:$0xff]
      %v3011 = vld [vmem:[#allocation3 + $0x10] sm:$0xff]
      %v3012 = vld [vmem:[#allocation3 + $0x18] sm:$0xff]
      %v3013 = vpack.c.bf16 %v3009, %v3009
      %v3014 = vpack.c.bf16 %v3010, %v3010
      %v3015 = vpack.c.bf16 %v3011, %v3011
      %v3016 = vpack.c.bf16 %v3012, %v3012
      %v3017 = vld [vmem:[#allocation4 + $0x30] sm:$0xff]
      %v3018 = vld [vmem:[#allocation4 + $0x38] sm:$0xff]
      %v3019 = vld [vmem:[#allocation4 + $0x40] sm:$0xff]
      %s3020 = scalar_lea.vmem %s3, 24
      %v3021 = vld [vmem:[%s3020] sm:$0xf]
      %3026 = vrot.lane.b32.xlu0 %v3013, 92
      %v3027 = vpop.permute.xlu0 %3026
      %3028 = vrot.lane.b32.xlu0 %v3014, 92
      %v3029 = vpop.permute.xlu0 %3028
      %3030 = vrot.lane.b32.xlu0 %v3015, 92
      %v3031 = vpop.permute.xlu0 %3030
      %3032 = vrot.lane.b32.xlu0 %v3016, 92
      %v3033 = vpop.permute.xlu0 %3032
      %v3034 = vsel %vm1659, %v3027, %v3029
      %v3035 = vsel %vm1659, %v3029, %v3031
      %v3036 = vsel %vm1659, %v3031, %v3033
      %v3038 = vsel %vm2274, %v3021, 0
      %v3041 = vsel %vm2242, %v3034, 0
      %v3044 = vsel %vm2242, %v3035, 0
      %v3047 = vsel %vm2242, %v3036, 0
      %3049 = vmatprep.subr.bf16.mxu0 %v3044
      %3050 = vmatpush1.bf16.msra.mxu0 %v3041
      %3051 = vmatprep.subr.bf16.mxu0 0
      %3052 = vmatpush1.bf16.msra.mxu0 0
      %3053 = vmatprep.subr.bf16.mxu0 0
      %3054 = vmatpush1.bf16.msra.mxu0 0
      %3055 = vmatprep.subr.bf16.mxu0 0
      %3056 = vmatpush1.bf16.msra.mxu0 0
      %3057 = vmatprep.subr.bf16.mxu0 0
      %3058 = vmatpush1.bf16.msra.mxu0 0
      %3059 = vmatprep.subr.bf16.mxu0 0
      %3060 = vmatpush1.bf16.msra.mxu0 0
      %3061 = vmatprep.subr.bf16.mxu0 0
      %3062 = vmatpush1.bf16.msra.mxu0 0
      %3063 = vmatprep.subr.bf16.mxu0 0
      %3064 = vmatpush1.bf16.msra.mxu0 0
      %3065 = vmatprep.subr.bf16.mxu0 0
      %3066 = vmatpush1.bf16.msra.mxu0 0
      %3067 = vmatprep.subr.bf16.mxu0 0
      %3068 = vmatpush1.bf16.msra.mxu0 0
      %3069 = vmatprep.subr.bf16.mxu0 0
      %3070 = vmatpush1.bf16.msra.mxu0 0
      %3071 = vmatprep.subr.bf16.mxu0 0
      %3072 = vmatpush1.bf16.msra.mxu0 0
      %3073 = vmatprep.subr.bf16.mxu0 0
      %3074 = vmatpush1.bf16.msra.mxu0 0
      %3075 = vmatprep.subr.bf16.mxu0 0
      %3076 = vmatpush1.bf16.msra.mxu0 0
      %3077 = vmatprep.subr.bf16.mxu0 0
      %3078 = vmatpush1.bf16.msra.mxu0 0
      %3079 = vmatprep.subr.bf16.mxu0 0
      %3080 = vmatpush1.bf16.msra.mxu0 0
      %3081 = vmatprep.mubr.bf16.mxu0 0
      %3082 = vmatmul.mubr.bf16.gmra.mrb[0].mxu0 %v3038
      %v3083 = vpop.f32.mrb[0].mxu0
      %v3084 = vadd.f32 0.0, %v3083
      %v3085 = vpop.f32.mrb[0].mxu0
      %v3086 = vadd.f32 0.0, %v3085
      %v3087 = vpop.f32.mrb[0].mxu0
      %v3088 = vpop.f32.mrb[0].mxu0
      %3089 = vdwg.mxu0
      %3090 = vmatprep.subr.bf16.mxu0 0
      %3091 = vmatpush1.bf16.msra.mxu0 %v3047
      %3092 = vmatprep.subr.bf16.mxu0 0
      %3093 = vmatpush1.bf16.msra.mxu0 0
      %3094 = vmatprep.subr.bf16.mxu0 0
      %3095 = vmatpush1.bf16.msra.mxu0 0
      %3096 = vmatprep.subr.bf16.mxu0 0
      %3097 = vmatpush1.bf16.msra.mxu0 0
      %3098 = vmatprep.subr.bf16.mxu0 0
      %3099 = vmatpush1.bf16.msra.mxu0 0
      %3100 = vmatprep.subr.bf16.mxu0 0
      %3101 = vmatpush1.bf16.msra.mxu0 0
      %3102 = vmatprep.subr.bf16.mxu0 0
      %3103 = vmatpush1.bf16.msra.mxu0 0
      %3104 = vmatprep.subr.bf16.mxu0 0
      %3105 = vmatpush1.bf16.msra.mxu0 0
      %3106 = vmatprep.subr.bf16.mxu0 0
      %3107 = vmatpush1.bf16.msra.mxu0 0
      %3108 = vmatprep.subr.bf16.mxu0 0
      %3109 = vmatpush1.bf16.msra.mxu0 0
      %3110 = vmatprep.subr.bf16.mxu0 0
      %3111 = vmatpush1.bf16.msra.mxu0 0
      %3112 = vmatprep.subr.bf16.mxu0 0
      %3113 = vmatpush1.bf16.msra.mxu0 0
      %3114 = vmatprep.subr.bf16.mxu0 0
      %3115 = vmatpush1.bf16.msra.mxu0 0
      %3116 = vmatprep.subr.bf16.mxu0 0
      %3117 = vmatpush1.bf16.msra.mxu0 0
      %3118 = vmatprep.subr.bf16.mxu0 0
      %3119 = vmatpush1.bf16.msra.mxu0 0
      %3120 = vmatprep.subr.bf16.mxu0 0
      %3121 = vmatpush1.bf16.msra.mxu0 0
      %3122 = vmatprep.mubr.bf16.mxu0 0
      %3123 = vmatmul.mubr.bf16.gmra.mrb[0].mxu0 %v3038
      %v3124 = vpop.f32.mrb[0].mxu0
      %v3125 = vadd.f32 0.0, %v3124
      %v3126 = vpop.f32.mrb[0].mxu0
      %v3127 = vpop.f32.mrb[0].mxu0
      %v3128 = vpop.f32.mrb[0].mxu0
      %3129 = vdwg.mxu0
      %v3130 = vadd.f32 %v3017, %v3084
      %v3131 = vadd.f32 %v3018, %v3086
      %v3132 = vadd.f32 %v3019, %v3125
      %3133 = vst [vmem:[#allocation4 + $0x30] sm:$0xff] %v3130
      %3134 = vst [vmem:[#allocation4 + $0x38] sm:$0xff] %v3131
      %3135 = vst [vmem:[#allocation4 + $0x40] sm:$0xff] %v3132
      %v3136 = vld [vmem:[#allocation3] sm:$0xff]
      %v3137 = vld [vmem:[#allocation3 + $0x8] sm:$0xff]
      %v3138 = vld [vmem:[#allocation3 + $0x10] sm:$0xff]
      %v3139 = vld [vmem:[#allocation3 + $0x18] sm:$0xff]
      %v3140 = vpack.c.bf16 %v3136, %v3136
      %v3141 = vpack.c.bf16 %v3137, %v3137
      %v3142 = vpack.c.bf16 %v3138, %v3138
      %v3143 = vpack.c.bf16 %v3139, %v3139
      %v3144 = vld [vmem:[#allocation4 + $0x30] sm:$0xff]
      %v3145 = vld [vmem:[#allocation4 + $0x38] sm:$0xff]
      %v3146 = vld [vmem:[#allocation4 + $0x40] sm:$0xff]
      %s3147 = scalar_lea.vmem %s3, 28
      %v3148 = vld [vmem:[%s3147] sm:$0xf]
      %3153 = vrot.lane.b32.xlu0 %v3140, 91
      %v3154 = vpop.permute.xlu0 %3153
      %3155 = vrot.lane.b32.xlu0 %v3141, 91
      %v3156 = vpop.permute.xlu0 %3155
      %3157 = vrot.lane.b32.xlu0 %v3142, 91
      %v3158 = vpop.permute.xlu0 %3157
      %3159 = vrot.lane.b32.xlu0 %v3143, 91
      %v3160 = vpop.permute.xlu0 %3159
      %v3161 = vsel %vm1840, %v3154, %v3156
      %v3162 = vsel %vm1840, %v3156, %v3158
      %v3163 = vsel %vm1840, %v3158, %v3160
      %v3165 = vsel %vm2274, %v3148, 0
      %v3168 = vsel %vm2242, %v3161, 0
      %v3171 = vsel %vm2242, %v3162, 0
      %v3174 = vsel %vm2242, %v3163, 0
      %3176 = vmatprep.subr.bf16.mxu0 %v3171
      %3177 = vmatpush1.bf16.msra.mxu0 %v3168
      %3178 = vmatprep.subr.bf16.mxu0 0
      %3179 = vmatpush1.bf16.msra.mxu0 0
      %3180 = vmatprep.subr.bf16.mxu0 0
      %3181 = vmatpush1.bf16.msra.mxu0 0
      %3182 = vmatprep.subr.bf16.mxu0 0
      %3183 = vmatpush1.bf16.msra.mxu0 0
      %3184 = vmatprep.subr.bf16.mxu0 0
      %3185 = vmatpush1.bf16.msra.mxu0 0
      %3186 = vmatprep.subr.bf16.mxu0 0
      %3187 = vmatpush1.bf16.msra.mxu0 0
      %3188 = vmatprep.subr.bf16.mxu0 0
      %3189 = vmatpush1.bf16.msra.mxu0 0
      %3190 = vmatprep.subr.bf16.mxu0 0
      %3191 = vmatpush1.bf16.msra.mxu0 0
      %3192 = vmatprep.subr.bf16.mxu0 0
      %3193 = vmatpush1.bf16.msra.mxu0 0
      %3194 = vmatprep.subr.bf16.mxu0 0
      %3195 = vmatpush1.bf16.msra.mxu0 0
      %3196 = vmatprep.subr.bf16.mxu0 0
      %3197 = vmatpush1.bf16.msra.mxu0 0
      %3198 = vmatprep.subr.bf16.mxu0 0
      %3199 = vmatpush1.bf16.msra.mxu0 0
      %3200 = vmatprep.subr.bf16.mxu0 0
      %3201 = vmatpush1.bf16.msra.mxu0 0
      %3202 = vmatprep.subr.bf16.mxu0 0
      %3203 = vmatpush1.bf16.msra.mxu0 0
      %3204 = vmatprep.subr.bf16.mxu0 0
      %3205 = vmatpush1.bf16.msra.mxu0 0
      %3206 = vmatprep.subr.bf16.mxu0 0
      %3207 = vmatpush1.bf16.msra.mxu0 0
      %3208 = vmatprep.mubr.bf16.mxu0 0
      %3209 = vmatmul.mubr.bf16.gmra.mrb[0].mxu0 %v3165
      %v3210 = vpop.f32.mrb[0].mxu0
      %v3211 = vadd.f32 0.0, %v3210
      %v3212 = vpop.f32.mrb[0].mxu0
      %v3213 = vadd.f32 0.0, %v3212
      %v3214 = vpop.f32.mrb[0].mxu0
      %v3215 = vpop.f32.mrb[0].mxu0
      %3216 = vdwg.mxu0
      %3217 = vmatprep.subr.bf16.mxu0 0
      %3218 = vmatpush1.bf16.msra.mxu0 %v3174
      %3219 = vmatprep.subr.bf16.mxu0 0
      %3220 = vmatpush1.bf16.msra.mxu0 0
      %3221 = vmatprep.subr.bf16.mxu0 0
      %3222 = vmatpush1.bf16.msra.mxu0 0
      %3223 = vmatprep.subr.bf16.mxu0 0
      %3224 = vmatpush1.bf16.msra.mxu0 0
      %3225 = vmatprep.subr.bf16.mxu0 0
      %3226 = vmatpush1.bf16.msra.mxu0 0
      %3227 = vmatprep.subr.bf16.mxu0 0
      %3228 = vmatpush1.bf16.msra.mxu0 0
      %3229 = vmatprep.subr.bf16.mxu0 0
      %3230 = vmatpush1.bf16.msra.mxu0 0
      %3231 = vmatprep.subr.bf16.mxu0 0
      %3232 = vmatpush1.bf16.msra.mxu0 0
      %3233 = vmatprep.subr.bf16.mxu0 0
      %3234 = vmatpush1.bf16.msra.mxu0 0
      %3235 = vmatprep.subr.bf16.mxu0 0
      %3236 = vmatpush1.bf16.msra.mxu0 0
      %3237 = vmatprep.subr.bf16.mxu0 0
      %3238 = vmatpush1.bf16.msra.mxu0 0
      %3239 = vmatprep.subr.bf16.mxu0 0
      %3240 = vmatpush1.bf16.msra.mxu0 0
      %3241 = vmatprep.subr.bf16.mxu0 0
      %3242 = vmatpush1.bf16.msra.mxu0 0
      %3243 = vmatprep.subr.bf16.mxu0 0
      %3244 = vmatpush1.bf16.msra.mxu0 0
      %3245 = vmatprep.subr.bf16.mxu0 0
      %3246 = vmatpush1.bf16.msra.mxu0 0
      %3247 = vmatprep.subr.bf16.mxu0 0
      %3248 = vmatpush1.bf16.msra.mxu0 0
      %3249 = vmatprep.mubr.bf16.mxu0 0
      %3250 = vmatmul.mubr.bf16.gmra.mrb[0].mxu0 %v3165
      %v3251 = vpop.f32.mrb[0].mxu0
      %v3252 = vadd.f32 0.0, %v3251
      %v3253 = vpop.f32.mrb[0].mxu0
      %v3254 = vpop.f32.mrb[0].mxu0
      %v3255 = vpop.f32.mrb[0].mxu0
      %3256 = vdwg.mxu0
      %v3257 = vadd.f32 %v3144, %v3211
      %v3258 = vadd.f32 %v3145, %v3213
      %v3259 = vadd.f32 %v3146, %v3252
      %3260 = vst [vmem:[#allocation4 + $0x30] sm:$0xff] %v3257
      %3261 = vst [vmem:[#allocation4 + $0x38] sm:$0xff] %v3258
      %3262 = vst [vmem:[#allocation4 + $0x40] sm:$0xff] %v3259
      %v3263 = vld [vmem:[#allocation3] sm:$0xff]
      %v3264 = vld [vmem:[#allocation3 + $0x8] sm:$0xff]
      %v3265 = vld [vmem:[#allocation3 + $0x10] sm:$0xff]
      %v3266 = vld [vmem:[#allocation3 + $0x18] sm:$0xff]
      %v3267 = vpack.c.bf16 %v3263, %v3263
      %v3268 = vpack.c.bf16 %v3264, %v3264
      %v3269 = vpack.c.bf16 %v3265, %v3265
      %v3270 = vpack.c.bf16 %v3266, %v3266
      %v3271 = vld [vmem:[#allocation4 + $0x30] sm:$0xff]
      %v3272 = vld [vmem:[#allocation4 + $0x38] sm:$0xff]
      %v3273 = vld [vmem:[#allocation4 + $0x40] sm:$0xff]
      %s3274 = scalar_lea.vmem %s3, 32
      %v3275 = vld [vmem:[%s3274] sm:$0xf]
      %3280 = vrot.lane.b32.xlu0 %v3267, 90
      %v3281 = vpop.permute.xlu0 %3280
      %3282 = vrot.lane.b32.xlu0 %v3268, 90
      %v3283 = vpop.permute.xlu0 %3282
      %3284 = vrot.lane.b32.xlu0 %v3269, 90
      %v3285 = vpop.permute.xlu0 %3284
      %3286 = vrot.lane.b32.xlu0 %v3270, 90
      %v3287 = vpop.permute.xlu0 %3286
      %v3288 = vsel %vm2021, %v3281, %v3283
      %v3289 = vsel %vm2021, %v3283, %v3285
      %v3290 = vsel %vm2021, %v3285, %v3287
      %v3292 = vsel %vm2274, %v3275, 0
      %v3295 = vsel %vm2242, %v3288, 0
      %v3298 = vsel %vm2242, %v3289, 0
      %v3301 = vsel %vm2242, %v3290, 0
      %3303 = vmatprep.subr.bf16.mxu0 %v3298
      %3304 = vmatpush1.bf16.msra.mxu0 %v3295
      %3305 = vmatprep.subr.bf16.mxu0 0
      %3306 = vmatpush1.bf16.msra.mxu0 0
      %3307 = vmatprep.subr.bf16.mxu0 0
      %3308 = vmatpush1.bf16.msra.mxu0 0
      %3309 = vmatprep.subr.bf16.mxu0 0
      %3310 = vmatpush1.bf16.msra.mxu0 0
      %3311 = vmatprep.subr.bf16.mxu0 0
      %3312 = vmatpush1.bf16.msra.mxu0 0
      %3313 = vmatprep.subr.bf16.mxu0 0
      %3314 = vmatpush1.bf16.msra.mxu0 0
      %3315 = vmatprep.subr.bf16.mxu0 0
      %3316 = vmatpush1.bf16.msra.mxu0 0
      %3317 = vmatprep.subr.bf16.mxu0 0
      %3318 = vmatpush1.bf16.msra.mxu0 0
      %3319 = vmatprep.subr.bf16.mxu0 0
      %3320 = vmatpush1.bf16.msra.mxu0 0
      %3321 = vmatprep.subr.bf16.mxu0 0
      %3322 = vmatpush1.bf16.msra.mxu0 0
      %3323 = vmatprep.subr.bf16.mxu0 0
      %3324 = vmatpush1.bf16.msra.mxu0 0
      %3325 = vmatprep.subr.bf16.mxu0 0
      %3326 = vmatpush1.bf16.msra.mxu0 0
      %3327 = vmatprep.subr.bf16.mxu0 0
      %3328 = vmatpush1.bf16.msra.mxu0 0
      %3329 = vmatprep.subr.bf16.mxu0 0
      %3330 = vmatpush1.bf16.msra.mxu0 0
      %3331 = vmatprep.subr.bf16.mxu0 0
      %3332 = vmatpush1.bf16.msra.mxu0 0
      %3333 = vmatprep.subr.bf16.mxu0 0
      %3334 = vmatpush1.bf16.msra.mxu0 0
      %3335 = vmatprep.mubr.bf16.mxu0 0
      %3336 = vmatmul.mubr.bf16.gmra.mrb[0].mxu0 %v3292
      %v3337 = vpop.f32.mrb[0].mxu0
      %v3338 = vadd.f32 0.0, %v3337
      %v3339 = vpop.f32.mrb[0].mxu0
      %v3340 = vadd.f32 0.0, %v3339
      %v3341 = vpop.f32.mrb[0].mxu0
      %v3342 = vpop.f32.mrb[0].mxu0
      %3343 = vdwg.mxu0
      %3344 = vmatprep.subr.bf16.mxu0 0
      %3345 = vmatpush1.bf16.msra.mxu0 %v3301
      %3346 = vmatprep.subr.bf16.mxu0 0
      %3347 = vmatpush1.bf16.msra.mxu0 0
      %3348 = vmatprep.subr.bf16.mxu0 0
      %3349 = vmatpush1.bf16.msra.mxu0 0
      %3350 = vmatprep.subr.bf16.mxu0 0
      %3351 = vmatpush1.bf16.msra.mxu0 0
      %3352 = vmatprep.subr.bf16.mxu0 0
      %3353 = vmatpush1.bf16.msra.mxu0 0
      %3354 = vmatprep.subr.bf16.mxu0 0
      %3355 = vmatpush1.bf16.msra.mxu0 0
      %3356 = vmatprep.subr.bf16.mxu0 0
      %3357 = vmatpush1.bf16.msra.mxu0 0
      %3358 = vmatprep.subr.bf16.mxu0 0
      %3359 = vmatpush1.bf16.msra.mxu0 0
      %3360 = vmatprep.subr.bf16.mxu0 0
      %3361 = vmatpush1.bf16.msra.mxu0 0
      %3362 = vmatprep.subr.bf16.mxu0 0
      %3363 = vmatpush1.bf16.msra.mxu0 0
      %3364 = vmatprep.subr.bf16.mxu0 0
      %3365 = vmatpush1.bf16.msra.mxu0 0
      %3366 = vmatprep.subr.bf16.mxu0 0
      %3367 = vmatpush1.bf16.msra.mxu0 0
      %3368 = vmatprep.subr.bf16.mxu0 0
      %3369 = vmatpush1.bf16.msra.mxu0 0
      %3370 = vmatprep.subr.bf16.mxu0 0
      %3371 = vmatpush1.bf16.msra.mxu0 0
      %3372 = vmatprep.subr.bf16.mxu0 0
      %3373 = vmatpush1.bf16.msra.mxu0 0
      %3374 = vmatprep.subr.bf16.mxu0 0
      %3375 = vmatpush1.bf16.msra.mxu0 0
      %3376 = vmatprep.mubr.bf16.mxu0 0
      %3377 = vmatmul.mubr.bf16.gmra.mrb[0].mxu0 %v3292
      %v3378 = vpop.f32.mrb[0].mxu0
      %v3379 = vadd.f32 0.0, %v3378
      %v3380 = vpop.f32.mrb[0].mxu0
      %v3381 = vpop.f32.mrb[0].mxu0
      %v3382 = vpop.f32.mrb[0].mxu0
      %3383 = vdwg.mxu0
      %v3384 = vadd.f32 %v3271, %v3338
      %v3385 = vadd.f32 %v3272, %v3340
      %v3386 = vadd.f32 %v3273, %v3379
      %3387 = vst [vmem:[#allocation4 + $0x30] sm:$0xff] %v3384
      %3388 = vst [vmem:[#allocation4 + $0x38] sm:$0xff] %v3385
      %3389 = vst [vmem:[#allocation4 + $0x40] sm:$0xff] %v3386
      %v3390 = vld [vmem:[#allocation4 + $0x30] sm:$0xff]
      %v3391 = vld [vmem:[#allocation4 + $0x38] sm:$0xff]
      %v3392 = vld [vmem:[#allocation4 + $0x40] sm:$0xff]
      %v3393 = vtanh.pop %v3390
      %v3394 = vtanh.pop %v3391
      %v3395 = vtanh.pop %v3392
      %v3396 = vsub.f32 1.0, %v2173
      %v3397 = vsub.f32 1.0, %v2175
      %v3398 = vsub.f32 1.0, %v2177
      %v3402 = vrot.slane %v3396, 4
      %v3403 = vrot.slane %v3397, 4
      %v3404 = vrot.slane %v3398, 4
      %3405 = vrot.lane.b32.xlu0 %v3402, 19
      %v3406 = vpop.permute.xlu0 %3405
      %3407 = vrot.lane.b32.xlu0 %v3403, 19
      %v3408 = vpop.permute.xlu0 %3407
      %3409 = vrot.lane.b32.xlu0 %v3404, 19
      %v3410 = vpop.permute.xlu0 %3409
      %v3411 = vsel %vm2219, %v3406, %v3408
      %v3412 = vsel %vm2219, %v3408, %v3410
      %v3417 = vmul.f32 %v2199, %v3406
      %v3418 = vmul.f32 %v2200, %v3411
      %v3419 = vmul.f32 %v2201, %v3412
      %v3420 = vmul.f32 %v2202, %v3410
      %v3421 = vmul.f32 %v2203, %v3406
      %v3422 = vmul.f32 %v2204, %v3411
      %v3423 = vmul.f32 %v2205, %v3412
      %v3424 = vmul.f32 %v2206, %v3410
      %v3425 = vmul.f32 %v3393, %v2173
      %v3426 = vmul.f32 %v3394, %v2175
      %v3427 = vmul.f32 %v3395, %v2177
      %v3431 = vrot.slane %v3425, 4
      %v3432 = vrot.slane %v3426, 4
      %v3433 = vrot.slane %v3427, 4
      %3434 = vrot.lane.b32.xlu0 %v3431, 19
      %v3435 = vpop.permute.xlu0 %3434
      %3436 = vrot.lane.b32.xlu0 %v3432, 19
      %v3437 = vpop.permute.xlu0 %3436
      %3438 = vrot.lane.b32.xlu0 %v3433, 19
      %v3439 = vpop.permute.xlu0 %3438
      %v3440 = vsel %vm2219, %v3435, %v3437
      %v3441 = vsel %vm2219, %v3437, %v3439
      %v3446 = vadd.f32 %v3417, %v3435
      %v3447 = vadd.f32 %v3418, %v3440
      %v3448 = vadd.f32 %v3419, %v3441
      %v3449 = vadd.f32 %v3420, %v3439
      %v3450 = vadd.f32 %v3421, %v3435
      %v3451 = vadd.f32 %v3422, %v3440
      %v3452 = vadd.f32 %v3423, %v3441
      %v3453 = vadd.f32 %v3424, %v3439
      %v3462 = vrot.slane %v3446, 4
      %v3463 = vrot.slane %v3450, 4
      %v3464 = vsel %vm2242, %v3462, %v3463
      %v3465 = vrot.slane %v3447, 4
      %v3466 = vrot.slane %v3451, 4
      %v3467 = vsel %vm2242, %v3465, %v3466
      %v3468 = vrot.slane %v3448, 4
      %v3469 = vrot.slane %v3452, 4
      %v3470 = vsel %vm2242, %v3468, %v3469
      %v3471 = vrot.slane %v3449, 4
      %v3472 = vrot.slane %v3453, 4
      %v3473 = vsel %vm2242, %v3471, %v3472
      %3474 = vrot.lane.b32.xlu0 %v3464, 109
      %v3475 = vpop.permute.xlu0 %3474
      %3476 = vrot.lane.b32.xlu0 %v3467, 109
      %v3477 = vpop.permute.xlu0 %3476
      %3478 = vrot.lane.b32.xlu0 %v3470, 109
      %v3479 = vpop.permute.xlu0 %3478
      %3480 = vrot.lane.b32.xlu0 %v3473, 109
      %v3481 = vpop.permute.xlu0 %3480
      %vm3482 = vcmask 891904
      %v3483 = vsel %vm3482, %v3475, %v3477
      %v3484 = vsel %vm3482, %v3477, %v3479
      %v3485 = vsel %vm3482, %v3479, %v3481
      %3489 = vst [vmem:[%s244] sm:$0xff] %v3483
      %3490 = vst [vmem:[%s244 + $0x8] sm:$0xff] %v3484
      %3491 = vst [vmem:[%s244 + $0x10] sm:$0xff] %v3485
      %p3492 = scmp.lt.s32.totalorder %s16, 1
      %s3493 = scalar_select %p3492, %s16, 1
      %s3494 = smul.addr %s3493, 3
      %s3495 = smul.addr %s3494, 8
      %s3496 = scalar_lea.vmem %s5, %s3495
      // Predicated region
      $region41: #{convgru_forward.1} parent=39 // pred_check
        %p3497 = pneg %p149
      $region42: #{convgru_forward.1} parent=39 // pred_check_branch
        %3499 = sbr.rel (%p3497) target = $region44
      $region43: #{convgru_forward.1} parent=39 // pred_region
        _
      $region44: #{convgru_forward.1} parent=39 // pred_fallthru
        _
    $region40: #{convgru_forward.1} parent=5 // pred_fallthru
      _
    %p3500 = scmp.le.s32.totalorder 2, %s11
    // Predicated region
    $region45: #{convgru_forward.1} parent=5 // pred_check
      %p3501 = pneg %p3500
    $region46: #{convgru_forward.1} parent=5 // pred_check_branch
      %3503 = sbr.rel (%p3501) target = $region48
    $region47: #{convgru_forward.1} parent=5 // pred_region
      %s3504 = ssub.s32 %s11, 2
      // Predicated region
      $region49: #{convgru_forward.1} parent=47 // pred_check
        %p3505 = pneg %p155
      $region50: #{convgru_forward.1} parent=47 // pred_check_branch
        %3507 = sbr.rel (%p3505) target = $region52
      $region51: #{convgru_forward.1} parent=47 // pred_region
        %p3508 = scmp.lt.s32.totalorder %s17, 1
        %s3509 = scalar_select %p3508, %s17, 1
        %s3510 = smul.addr %s3509, 3
        %s3511 = smul.addr %s3510, 8
        %s3512 = scalar_lea.vmem %s5, %s3511
      $region52: #{convgru_forward.1} parent=47 // pred_fallthru
        _
    $region48: #{convgru_forward.1} parent=5 // pred_fallthru
      _
  $region6: #{convgru_forward.1} parent=0 // loop_footer
    %s15 = sadd.s32 1, %s11
  $region7: #{convgru_forward.1} parent=0 // loop_footer_branch
    %10 = sbr.rel target = $region3
  $region8: #{convgru_forward.1} parent=0 // loop_exit
    _

</llo_original>
